<compile_context>
chip_gen: v7x
topology: tpu7x:2x2x1
jax: 0.10.0
libtpu: 0.0.40
codegen_flags: <defaults>
</compile_context>

<pallas_src>
import jax
import jax.numpy as jnp
from jax import lax
from jax.experimental import pallas as pl
from jax.experimental.pallas import tpu as pltpu


# ----------------------------------------------------------------------------
# Pallas kernel: fused bidirectional GRU recurrence, whole sequence in one call.
# ----------------------------------------------------------------------------
def _bigru_recurrence_kernel(gx_ref, whh_ref, bhh_ref, out_ref):
    # gx_ref : [T, B, 3*G]  precomputed input-gate activations, G = 2*Hp
    #                       (gate-grouped layout: [r_f r_b | z_f z_b | n_f n_b])
    # whh_ref: [G, 3*G]     per-direction block-diagonal recurrent weights
    # bhh_ref: [1, 3*G]     recurrent bias (b_hh; sits inside the reset product)
    # out_ref: [T, B, G]    hidden states: fwd half [0:Hp], bwd half [Hp:2Hp]
    T, B, _ = gx_ref.shape
    G = out_ref.shape[2]

    def step(t, h_prev):
        gx = gx_ref[t]                                                  # [B, 3G]
        gh = jnp.dot(h_prev, whh_ref[...],
                     preferred_element_type=jnp.float32) + bhh_ref[...]  # [B, 3G]
        r = jax.nn.sigmoid(gx[:, 0:G] + gh[:, 0:G])
        z = jax.nn.sigmoid(gx[:, G:2 * G] + gh[:, G:2 * G])
        n = jnp.tanh(gx[:, 2 * G:3 * G] + r * gh[:, 2 * G:3 * G])
        h_new = (1.0 - z) * n + z * h_prev
        out_ref[t] = h_new
        return h_new

    lax.fori_loop(0, T, step,
                  jnp.zeros((B, G), jnp.float32), unroll=True)


# ----------------------------------------------------------------------------
# Parameter packing: lane-pad H -> Hp (multiple of 128), fuse both directions,
# group gate columns by gate type so kernel slices fall on 128-lane boundaries.
# ----------------------------------------------------------------------------
def _round_up(n, m):
    return ((n + m - 1) // m) * m


def pack_bigru_params(params):
    H = params["w_hh_f"].shape[1]
    D = params["w_ih_f"].shape[1]
    Hp = _round_up(H, 128)
    G = 2 * Hp

    w_in = jnp.zeros((2 * D, 3 * G), jnp.float32)   # rows: [x | x_rev]
    w_hh = jnp.zeros((G, 3 * G), jnp.float32)       # rows: [h_fwd | h_bwd]
    b_in = jnp.zeros((3 * G,), jnp.float32)
    b_hh = jnp.zeros((1, 3 * G), jnp.float32)

    for gate in range(3):                            # torch order: r, z, n
        rows = slice(gate * H, (gate + 1) * H)
        col_f = slice(gate * G, gate * G + H)
        col_b = slice(gate * G + Hp, gate * G + Hp + H)
        w_in = w_in.at[0:D, col_f].set(params["w_ih_f"][rows].T)
        w_in = w_in.at[D:2 * D, col_b].set(params["w_ih_b"][rows].T)
        w_hh = w_hh.at[0:H, col_f].set(params["w_hh_f"][rows].T)
        w_hh = w_hh.at[Hp:Hp + H, col_b].set(params["w_hh_b"][rows].T)
        b_in = b_in.at[col_f].set(params["b_ih_f"][rows])
        b_in = b_in.at[col_b].set(params["b_ih_b"][rows])
        b_hh = b_hh.at[0, col_f].set(params["b_hh_f"][rows])
        b_hh = b_hh.at[0, col_b].set(params["b_hh_b"][rows])
    return w_in, w_hh, b_in, b_hh, H, Hp


# ----------------------------------------------------------------------------
# JAX glue (matches torch reverse_padded_sequence + BiGRUEncoder_2 indexing).
# ----------------------------------------------------------------------------
def reverse_padded_sequence(x, lengths):
    """x: [T, B, ...]; reverse the first lengths[b] steps of column b."""
    T = x.shape[0]
    t_idx = jnp.arange(T)[:, None]                       # [T, 1]
    lens = lengths[None, :]                              # [1, B]
    rev_idx = jnp.where(t_idx < lens, lens - 1 - t_idx, t_idx)   # [T, B]
    return jnp.take_along_axis(x, rev_idx[:, :, None], axis=0)


def _assemble_outputs(fwd, bwd, lens, e_s, e_e):
    batch_size, max_len = e_e.shape
    ar = jnp.arange(batch_size)
    arb = ar[None, :]

    outputs = jnp.concatenate([fwd, bwd], axis=2)                       # [T, B, 2H]

    # hidden[i] = cat(forward_outputs[len_i - 1, i], backward_outputs[0, i])
    hidden = jnp.concatenate([fwd[lens - 1, ar], bwd[0, ar]], axis=1)   # [B, 2H]

    # Vectorized e_s / e_e gathers (replaces the per-k Python loop).
    ee_t = e_e.T                                                        # [max_len, B]
    es_t = e_s.T                                                        # [max_len, B]
    ent = jnp.concatenate([fwd[ee_t[:-1], arb], bwd[es_t[:-1] - 1, arb]], axis=-1)
    hidden_entiy = jnp.concatenate([ent, hidden[None]], axis=0)         # [max_len, B, 2H]
    hidden_trans = jnp.concatenate([fwd[ee_t[1:], arb], bwd[es_t[:-1], arb]], axis=-1)

    return outputs, hidden, hidden_entiy, hidden_trans


def bigru_encoder_2(params, input_embedded, input_seq_lens, e_s, e_e):
    """Forward pass of BiGRUEncoder_2.

    input_embedded: [T, B, dim_word] (seq-first), input_seq_lens: [B] int32,
    e_s, e_e: [B, max_len] int32.
    """
    x = jnp.asarray(input_embedded, jnp.float32)
    T, B, D = x.shape
    lens = jnp.asarray(input_seq_lens, jnp.int32)

    w_in, w_hh, b_in, b_hh, H, Hp = pack_bigru_params(params)
    G = 2 * Hp

    # Backward direction consumes the per-sample reversed sequence.
    x_rev = reverse_padded_sequence(x, lens)
    x2 = jnp.concatenate([x, x_rev], axis=-1)                            # [T, B, 2D]

    # Hoisted input projection: ONE big time-parallel matmul for all timesteps
    # and both directions (fills the MXU instead of [B,D]x[D,3H] per step).
    gx = (jnp.dot(x2.reshape(T * B, 2 * D), w_in,
                  preferred_element_type=jnp.float32)
          .reshape(T, B, 3 * G) + b_in)

    out = pl.pallas_call(
        _bigru_recurrence_kernel,
        out_shape=jax.ShapeDtypeStruct((T, B, G), jnp.float32),
        in_specs=[
            pl.BlockSpec(memory_space=pltpu.MemorySpace.VMEM),   # gx slab
            pl.BlockSpec(memory_space=pltpu.MemorySpace.VMEM),   # w_hh
            pl.BlockSpec(memory_space=pltpu.MemorySpace.VMEM),   # b_hh
        ],
        out_specs=pl.BlockSpec(memory_space=pltpu.MemorySpace.VMEM),
    )(gx, w_hh, b_hh)
    # TODO(synk): for long sequences, chunk the time axis with a grid (keeping
    # the carried hidden state in VMEM scratch) so the resident gx/out slabs
    # stay within ~64 MiB VMEM on v7x; not needed at these shapes.

    fwd = out[:, :, 0:H]                                                 # [T, B, H]
    bwd = reverse_padded_sequence(out[:, :, Hp:Hp + H], lens)            # [T, B, H]

    return _assemble_outputs(fwd, bwd, lens, e_s, e_e)


# ----------------------------------------------------------------------------
# Pure-JAX reference (lax.scan GRU) for correctness checking.
# ----------------------------------------------------------------------------
def _gru_ref(x, w_ih, w_hh, b_ih, b_hh):
    H = w_hh.shape[1]

    def cell(h, x_t):
        gx = x_t @ w_ih.T + b_ih
        gh = h @ w_hh.T + b_hh
        r = jax.nn.sigmoid(gx[:, 0:H] + gh[:, 0:H])
        z = jax.nn.sigmoid(gx[:, H:2 * H] + gh[:, H:2 * H])
        n = jnp.tanh(gx[:, 2 * H:] + r * gh[:, 2 * H:])
        h_new = (1.0 - z) * n + z * h
        return h_new, h_new

    h0 = jnp.zeros((x.shape[1], H), jnp.float32)
    return lax.scan(cell, h0, x)[1]


def bigru_encoder_2_ref(params, input_embedded, input_seq_lens, e_s, e_e):
    x = jnp.asarray(input_embedded, jnp.float32)
    lens = jnp.asarray(input_seq_lens, jnp.int32)
    fwd = _gru_ref(x, params["w_ih_f"], params["w_hh_f"],
                   params["b_ih_f"], params["b_hh_f"])
    bwd_raw = _gru_ref(reverse_padded_sequence(x, lens),
                       params["w_ih_b"], params["w_hh_b"],
                       params["b_ih_b"], params["b_hh_b"])
    bwd = reverse_padded_sequence(bwd_raw, lens)
    return _assemble_outputs(fwd, bwd, lens, e_s, e_e)


# ----------------------------------------------------------------------------
# Deterministic parameter init (xavier_uniform weights, zero biases, as in the
# PyTorch module's __init__).
# ----------------------------------------------------------------------------
def xavier_uniform(key, shape):
    fan_out, fan_in = shape
    bound = (6.0 / (fan_in + fan_out)) ** 0.5
    return jax.random.uniform(key, shape, jnp.float32, -bound, bound)


def init_params(key, dim_word, dim_hidden):
    H = dim_hidden // 2
    k1, k2, k3, k4 = jax.random.split(key, 4)
    zeros = jnp.zeros((3 * H,), jnp.float32)
    return {
        "w_ih_f": xavier_uniform(k1, (3 * H, dim_word)),
        "w_hh_f": xavier_uniform(k2, (3 * H, H)),
        "w_ih_b": xavier_uniform(k3, (3 * H, dim_word)),
        "w_hh_b": xavier_uniform(k4, (3 * H, H)),
        "b_ih_f": zeros, "b_hh_f": zeros,
        "b_ih_b": zeros, "b_hh_b": zeros,
    }


if __name__ == "__main__":
    dim_word = 32
    dim_hidden = 32   # -> per-direction hidden H = 16
    T, B = 8, 2
    max_len = 3

    key = jax.random.PRNGKey(0)
    k_param, k_emb = jax.random.split(key)

    params = init_params(k_param, dim_word, dim_hidden)

    input_embedded = jax.random.normal(k_emb, (T, B, dim_word), jnp.float32)
    input_seq_lens = jnp.array([8, 5], jnp.int32)
    # entity span indices (valid time indices; e_s >= 1 so e_s - 1 is in range)
    e_s = jnp.array([[1, 3, 5],
                     [1, 2, 4]], jnp.int32)
    e_e = jnp.array([[2, 4, 7],
                     [1, 3, 4]], jnp.int32)

    fn = jax.jit(bigru_encoder_2)
    outputs, hidden, hidden_entiy, hidden_trans = fn(
        params, input_embedded, input_seq_lens, e_s, e_e)
    jax.block_until_ready((outputs, hidden, hidden_entiy, hidden_trans))

    assert outputs.shape == (T, B, dim_hidden)
    assert hidden.shape == (B, dim_hidden)
    assert hidden_entiy.shape == (max_len, B, dim_hidden)
    assert hidden_trans.shape == (max_len - 1, B, dim_hidden)

    # Correctness check against a pure-JAX scan reference.
    ref = bigru_encoder_2_ref(params, input_embedded, input_seq_lens, e_s, e_e)
    for got, want in zip((outputs, hidden, hidden_entiy, hidden_trans), ref):
        assert got.shape == want.shape
        max_err = float(jnp.max(jnp.abs(got - want)))
        assert max_err < 2e-2, f"mismatch vs reference: max abs err {max_err}"

    print("KERNEL_OK")
</pallas_src>

<mosaic_0001>
module attributes {stable_mosaic.version = 11 : i64} {
  func.func @_bigru_recurrence_kernel(%arg0: memref<8x2x768xf32, #tpu.memory_space<vmem>>, %arg1: memref<256x768xf32, #tpu.memory_space<vmem>>, %arg2: memref<1x768xf32, #tpu.memory_space<vmem>>, %arg3: memref<8x2x256xf32, #tpu.memory_space<vmem>>) attributes {dimension_semantics = [], scalar_prefetch = 0 : i64, scratch_operands = 0 : i64, tpu.core_type = #tpu.core_type<tc>} {
    %cst = arith.constant 0.000000e+00 : f32
    %0 = vector.broadcast %cst : f32 to vector<2x256xf32>
    %c0_i32 = arith.constant 0 : i32
    %1 = arith.index_cast %c0_i32 : i32 to index
    %c0 = arith.constant 0 : index
    %c0_0 = arith.constant 0 : index
    %2 = vector.load %arg0[%1, %c0, %c0_0] : memref<8x2x768xf32, #tpu.memory_space<vmem>>, vector<1x2x768xf32>
    %3 = vector.shape_cast %2 : vector<1x2x768xf32> to vector<2x768xf32>
    %c0_1 = arith.constant 0 : index
    %c0_2 = arith.constant 0 : index
    %4 = vector.load %arg1[%c0_1, %c0_2] : memref<256x768xf32, #tpu.memory_space<vmem>>, vector<256x768xf32>
    %cst_3 = arith.constant dense<0.000000e+00> : vector<2x768xf32>
    %5 = tpu.matmul %0, %4, %cst_3 {dimension_numbers = #tpu.dot_dimension_numbers<[1], [0], [0], [1], [0, 0, 1, 1], [], []>} : vector<2x256xf32>, vector<256x768xf32>, vector<2x768xf32> -> vector<2x768xf32>
    %c0_4 = arith.constant 0 : index
    %c0_5 = arith.constant 0 : index
    %6 = vector.load %arg2[%c0_4, %c0_5] : memref<1x768xf32, #tpu.memory_space<vmem>>, vector<1x768xf32>
    %7 = vector.broadcast %6 : vector<1x768xf32> to vector<2x768xf32>
    %8 = arith.addf %5, %7 : vector<2x768xf32>
    %9 = vector.extract_strided_slice %3 {offsets = [0, 0], sizes = [2, 256], strides = [1, 1]} : vector<2x768xf32> to vector<2x256xf32>
    %10 = vector.extract_strided_slice %8 {offsets = [0, 0], sizes = [2, 256], strides = [1, 1]} : vector<2x768xf32> to vector<2x256xf32>
    %11 = arith.addf %9, %10 : vector<2x256xf32>
    %12 = arith.negf %11 : vector<2x256xf32>
    %13 = math.exp %12 : vector<2x256xf32>
    %cst_6 = arith.constant 1.000000e+00 : f32
    %14 = vector.broadcast %cst_6 : f32 to vector<2x256xf32>
    %15 = arith.addf %14, %13 : vector<2x256xf32>
    %16 = arith.divf %14, %15 : vector<2x256xf32>
    %17 = vector.extract_strided_slice %3 {offsets = [0, 256], sizes = [2, 256], strides = [1, 1]} : vector<2x768xf32> to vector<2x256xf32>
    %18 = vector.extract_strided_slice %8 {offsets = [0, 256], sizes = [2, 256], strides = [1, 1]} : vector<2x768xf32> to vector<2x256xf32>
    %19 = arith.addf %17, %18 : vector<2x256xf32>
    %20 = arith.negf %19 : vector<2x256xf32>
    %21 = math.exp %20 : vector<2x256xf32>
    %cst_7 = arith.constant 1.000000e+00 : f32
    %22 = vector.broadcast %cst_7 : f32 to vector<2x256xf32>
    %23 = arith.addf %22, %21 : vector<2x256xf32>
    %24 = arith.divf %22, %23 : vector<2x256xf32>
    %25 = vector.extract_strided_slice %3 {offsets = [0, 512], sizes = [2, 256], strides = [1, 1]} : vector<2x768xf32> to vector<2x256xf32>
    %26 = vector.extract_strided_slice %8 {offsets = [0, 512], sizes = [2, 256], strides = [1, 1]} : vector<2x768xf32> to vector<2x256xf32>
    %27 = arith.mulf %16, %26 : vector<2x256xf32>
    %28 = arith.addf %25, %27 : vector<2x256xf32>
    %29 = math.tanh %28 : vector<2x256xf32>
    %cst_8 = arith.constant 1.000000e+00 : f32
    %30 = vector.broadcast %cst_8 : f32 to vector<2x256xf32>
    %31 = arith.subf %30, %24 : vector<2x256xf32>
    %32 = arith.mulf %31, %29 : vector<2x256xf32>
    %33 = arith.mulf %24, %0 : vector<2x256xf32>
    %34 = arith.addf %32, %33 : vector<2x256xf32>
    %35 = arith.index_cast %c0_i32 : i32 to index
    %c0_9 = arith.constant 0 : index
    %c0_10 = arith.constant 0 : index
    %36 = vector.load %arg3[%35, %c0_9, %c0_10] : memref<8x2x256xf32, #tpu.memory_space<vmem>>, vector<1x2x256xf32>
    %37 = vector.shape_cast %36 : vector<1x2x256xf32> to vector<2x256xf32>
    %38 = vector.shape_cast %34 : vector<2x256xf32> to vector<1x2x256xf32>
    tpu.vector_store %arg3[%35, %c0_9, %c0_10], %38 {strides = array<i32>} : memref<8x2x256xf32, #tpu.memory_space<vmem>>, vector<1x2x256xf32>,
    %c1_i32 = arith.constant 1 : i32
    %39 = arith.index_cast %c1_i32 : i32 to index
    %c0_11 = arith.constant 0 : index
    %c0_12 = arith.constant 0 : index
    %40 = vector.load %arg0[%39, %c0_11, %c0_12] : memref<8x2x768xf32, #tpu.memory_space<vmem>>, vector<1x2x768xf32>
    %41 = vector.shape_cast %40 : vector<1x2x768xf32> to vector<2x768xf32>
    %c0_13 = arith.constant 0 : index
    %c0_14 = arith.constant 0 : index
    %42 = vector.load %arg1[%c0_13, %c0_14] : memref<256x768xf32, #tpu.memory_space<vmem>>, vector<256x768xf32>
    %cst_15 = arith.constant dense<0.000000e+00> : vector<2x768xf32>
    %43 = tpu.matmul %34, %42, %cst_15 {dimension_numbers = #tpu.dot_dimension_numbers<[1], [0], [0], [1], [0, 0, 1, 1], [], []>} : vector<2x256xf32>, vector<256x768xf32>, vector<2x768xf32> -> vector<2x768xf32>
    %c0_16 = arith.constant 0 : index
    %c0_17 = arith.constant 0 : index
    %44 = vector.load %arg2[%c0_16, %c0_17] : memref<1x768xf32, #tpu.memory_space<vmem>>, vector<1x768xf32>
    %45 = vector.broadcast %44 : vector<1x768xf32> to vector<2x768xf32>
    %46 = arith.addf %43, %45 : vector<2x768xf32>
    %47 = vector.extract_strided_slice %41 {offsets = [0, 0], sizes = [2, 256], strides = [1, 1]} : vector<2x768xf32> to vector<2x256xf32>
    %48 = vector.extract_strided_slice %46 {offsets = [0, 0], sizes = [2, 256], strides = [1, 1]} : vector<2x768xf32> to vector<2x256xf32>
    %49 = arith.addf %47, %48 : vector<2x256xf32>
    %50 = arith.negf %49 : vector<2x256xf32>
    %51 = math.exp %50 : vector<2x256xf32>
    %cst_18 = arith.constant 1.000000e+00 : f32
    %52 = vector.broadcast %cst_18 : f32 to vector<2x256xf32>
    %53 = arith.addf %52, %51 : vector<2x256xf32>
    %54 = arith.divf %52, %53 : vector<2x256xf32>
    %55 = vector.extract_strided_slice %41 {offsets = [0, 256], sizes = [2, 256], strides = [1, 1]} : vector<2x768xf32> to vector<2x256xf32>
    %56 = vector.extract_strided_slice %46 {offsets = [0, 256], sizes = [2, 256], strides = [1, 1]} : vector<2x768xf32> to vector<2x256xf32>
    %57 = arith.addf %55, %56 : vector<2x256xf32>
    %58 = arith.negf %57 : vector<2x256xf32>
    %59 = math.exp %58 : vector<2x256xf32>
    %cst_19 = arith.constant 1.000000e+00 : f32
    %60 = vector.broadcast %cst_19 : f32 to vector<2x256xf32>
    %61 = arith.addf %60, %59 : vector<2x256xf32>
    %62 = arith.divf %60, %61 : vector<2x256xf32>
    %63 = vector.extract_strided_slice %41 {offsets = [0, 512], sizes = [2, 256], strides = [1, 1]} : vector<2x768xf32> to vector<2x256xf32>
    %64 = vector.extract_strided_slice %46 {offsets = [0, 512], sizes = [2, 256], strides = [1, 1]} : vector<2x768xf32> to vector<2x256xf32>
    %65 = arith.mulf %54, %64 : vector<2x256xf32>
    %66 = arith.addf %63, %65 : vector<2x256xf32>
    %67 = math.tanh %66 : vector<2x256xf32>
    %cst_20 = arith.constant 1.000000e+00 : f32
    %68 = vector.broadcast %cst_20 : f32 to vector<2x256xf32>
    %69 = arith.subf %68, %62 : vector<2x256xf32>
    %70 = arith.mulf %69, %67 : vector<2x256xf32>
    %71 = arith.mulf %62, %34 : vector<2x256xf32>
    %72 = arith.addf %70, %71 : vector<2x256xf32>
    %73 = arith.index_cast %c1_i32 : i32 to index
    %c0_21 = arith.constant 0 : index
    %c0_22 = arith.constant 0 : index
    %74 = vector.load %arg3[%73, %c0_21, %c0_22] : memref<8x2x256xf32, #tpu.memory_space<vmem>>, vector<1x2x256xf32>
    %75 = vector.shape_cast %74 : vector<1x2x256xf32> to vector<2x256xf32>
    %76 = vector.shape_cast %72 : vector<2x256xf32> to vector<1x2x256xf32>
    tpu.vector_store %arg3[%73, %c0_21, %c0_22], %76 {strides = array<i32>} : memref<8x2x256xf32, #tpu.memory_space<vmem>>, vector<1x2x256xf32>,
    %c2_i32 = arith.constant 2 : i32
    %77 = arith.index_cast %c2_i32 : i32 to index
    %c0_23 = arith.constant 0 : index
    %c0_24 = arith.constant 0 : index
    %78 = vector.load %arg0[%77, %c0_23, %c0_24] : memref<8x2x768xf32, #tpu.memory_space<vmem>>, vector<1x2x768xf32>
    %79 = vector.shape_cast %78 : vector<1x2x768xf32> to vector<2x768xf32>
    %c0_25 = arith.constant 0 : index
    %c0_26 = arith.constant 0 : index
    %80 = vector.load %arg1[%c0_25, %c0_26] : memref<256x768xf32, #tpu.memory_space<vmem>>, vector<256x768xf32>
    %cst_27 = arith.constant dense<0.000000e+00> : vector<2x768xf32>
    %81 = tpu.matmul %72, %80, %cst_27 {dimension_numbers = #tpu.dot_dimension_numbers<[1], [0], [0], [1], [0, 0, 1, 1], [], []>} : vector<2x256xf32>, vector<256x768xf32>, vector<2x768xf32> -> vector<2x768xf32>
    %c0_28 = arith.constant 0 : index
    %c0_29 = arith.constant 0 : index
    %82 = vector.load %arg2[%c0_28, %c0_29] : memref<1x768xf32, #tpu.memory_space<vmem>>, vector<1x768xf32>
    %83 = vector.broadcast %82 : vector<1x768xf32> to vector<2x768xf32>
    %84 = arith.addf %81, %83 : vector<2x768xf32>
    %85 = vector.extract_strided_slice %79 {offsets = [0, 0], sizes = [2, 256], strides = [1, 1]} : vector<2x768xf32> to vector<2x256xf32>
    %86 = vector.extract_strided_slice %84 {offsets = [0, 0], sizes = [2, 256], strides = [1, 1]} : vector<2x768xf32> to vector<2x256xf32>
    %87 = arith.addf %85, %86 : vector<2x256xf32>
    %88 = arith.negf %87 : vector<2x256xf32>
    %89 = math.exp %88 : vector<2x256xf32>
    %cst_30 = arith.constant 1.000000e+00 : f32
    %90 = vector.broadcast %cst_30 : f32 to vector<2x256xf32>
    %91 = arith.addf %90, %89 : vector<2x256xf32>
    %92 = arith.divf %90, %91 : vector<2x256xf32>
    %93 = vector.extract_strided_slice %79 {offsets = [0, 256], sizes = [2, 256], strides = [1, 1]} : vector<2x768xf32> to vector<2x256xf32>
    %94 = vector.extract_strided_slice %84 {offsets = [0, 256], sizes = [2, 256], strides = [1, 1]} : vector<2x768xf32> to vector<2x256xf32>
    %95 = arith.addf %93, %94 : vector<2x256xf32>
    %96 = arith.negf %95 : vector<2x256xf32>
    %97 = math.exp %96 : vector<2x256xf32>
    %cst_31 = arith.constant 1.000000e+00 : f32
    %98 = vector.broadcast %cst_31 : f32 to vector<2x256xf32>
    %99 = arith.addf %98, %97 : vector<2x256xf32>
    %100 = arith.divf %98, %99 : vector<2x256xf32>
    %101 = vector.extract_strided_slice %79 {offsets = [0, 512], sizes = [2, 256], strides = [1, 1]} : vector<2x768xf32> to vector<2x256xf32>
    %102 = vector.extract_strided_slice %84 {offsets = [0, 512], sizes = [2, 256], strides = [1, 1]} : vector<2x768xf32> to vector<2x256xf32>
    %103 = arith.mulf %92, %102 : vector<2x256xf32>
    %104 = arith.addf %101, %103 : vector<2x256xf32>
    %105 = math.tanh %104 : vector<2x256xf32>
    %cst_32 = arith.constant 1.000000e+00 : f32
    %106 = vector.broadcast %cst_32 : f32 to vector<2x256xf32>
    %107 = arith.subf %106, %100 : vector<2x256xf32>
    %108 = arith.mulf %107, %105 : vector<2x256xf32>
    %109 = arith.mulf %100, %72 : vector<2x256xf32>
    %110 = arith.addf %108, %109 : vector<2x256xf32>
    %111 = arith.index_cast %c2_i32 : i32 to index
    %c0_33 = arith.constant 0 : index
    %c0_34 = arith.constant 0 : index
    %112 = vector.load %arg3[%111, %c0_33, %c0_34] : memref<8x2x256xf32, #tpu.memory_space<vmem>>, vector<1x2x256xf32>
    %113 = vector.shape_cast %112 : vector<1x2x256xf32> to vector<2x256xf32>
    %114 = vector.shape_cast %110 : vector<2x256xf32> to vector<1x2x256xf32>
    tpu.vector_store %arg3[%111, %c0_33, %c0_34], %114 {strides = array<i32>} : memref<8x2x256xf32, #tpu.memory_space<vmem>>, vector<1x2x256xf32>,
    %c3_i32 = arith.constant 3 : i32
    %115 = arith.index_cast %c3_i32 : i32 to index
    %c0_35 = arith.constant 0 : index
    %c0_36 = arith.constant 0 : index
    %116 = vector.load %arg0[%115, %c0_35, %c0_36] : memref<8x2x768xf32, #tpu.memory_space<vmem>>, vector<1x2x768xf32>
    %117 = vector.shape_cast %116 : vector<1x2x768xf32> to vector<2x768xf32>
    %c0_37 = arith.constant 0 : index
    %c0_38 = arith.constant 0 : index
    %118 = vector.load %arg1[%c0_37, %c0_38] : memref<256x768xf32, #tpu.memory_space<vmem>>, vector<256x768xf32>
    %cst_39 = arith.constant dense<0.000000e+00> : vector<2x768xf32>
    %119 = tpu.matmul %110, %118, %cst_39 {dimension_numbers = #tpu.dot_dimension_numbers<[1], [0], [0], [1], [0, 0, 1, 1], [], []>} : vector<2x256xf32>, vector<256x768xf32>, vector<2x768xf32> -> vector<2x768xf32>
    %c0_40 = arith.constant 0 : index
    %c0_41 = arith.constant 0 : index
    %120 = vector.load %arg2[%c0_40, %c0_41] : memref<1x768xf32, #tpu.memory_space<vmem>>, vector<1x768xf32>
    %121 = vector.broadcast %120 : vector<1x768xf32> to vector<2x768xf32>
    %122 = arith.addf %119, %121 : vector<2x768xf32>
    %123 = vector.extract_strided_slice %117 {offsets = [0, 0], sizes = [2, 256], strides = [1, 1]} : vector<2x768xf32> to vector<2x256xf32>
    %124 = vector.extract_strided_slice %122 {offsets = [0, 0], sizes = [2, 256], strides = [1, 1]} : vector<2x768xf32> to vector<2x256xf32>
    %125 = arith.addf %123, %124 : vector<2x256xf32>
    %126 = arith.negf %125 : vector<2x256xf32>
    %127 = math.exp %126 : vector<2x256xf32>
    %cst_42 = arith.constant 1.000000e+00 : f32
    %128 = vector.broadcast %cst_42 : f32 to vector<2x256xf32>
    %129 = arith.addf %128, %127 : vector<2x256xf32>
    %130 = arith.divf %128, %129 : vector<2x256xf32>
    %131 = vector.extract_strided_slice %117 {offsets = [0, 256], sizes = [2, 256], strides = [1, 1]} : vector<2x768xf32> to vector<2x256xf32>
    %132 = vector.extract_strided_slice %122 {offsets = [0, 256], sizes = [2, 256], strides = [1, 1]} : vector<2x768xf32> to vector<2x256xf32>
    %133 = arith.addf %131, %132 : vector<2x256xf32>
    %134 = arith.negf %133 : vector<2x256xf32>
    %135 = math.exp %134 : vector<2x256xf32>
    %cst_43 = arith.constant 1.000000e+00 : f32
    %136 = vector.broadcast %cst_43 : f32 to vector<2x256xf32>
    %137 = arith.addf %136, %135 : vector<2x256xf32>
    %138 = arith.divf %136, %137 : vector<2x256xf32>
    %139 = vector.extract_strided_slice %117 {offsets = [0, 512], sizes = [2, 256], strides = [1, 1]} : vector<2x768xf32> to vector<2x256xf32>
    %140 = vector.extract_strided_slice %122 {offsets = [0, 512], sizes = [2, 256], strides = [1, 1]} : vector<2x768xf32> to vector<2x256xf32>
    %141 = arith.mulf %130, %140 : vector<2x256xf32>
    %142 = arith.addf %139, %141 : vector<2x256xf32>
    %143 = math.tanh %142 : vector<2x256xf32>
    %cst_44 = arith.constant 1.000000e+00 : f32
    %144 = vector.broadcast %cst_44 : f32 to vector<2x256xf32>
    %145 = arith.subf %144, %138 : vector<2x256xf32>
    %146 = arith.mulf %145, %143 : vector<2x256xf32>
    %147 = arith.mulf %138, %110 : vector<2x256xf32>
    %148 = arith.addf %146, %147 : vector<2x256xf32>
    %149 = arith.index_cast %c3_i32 : i32 to index
    %c0_45 = arith.constant 0 : index
    %c0_46 = arith.constant 0 : index
    %150 = vector.load %arg3[%149, %c0_45, %c0_46] : memref<8x2x256xf32, #tpu.memory_space<vmem>>, vector<1x2x256xf32>
    %151 = vector.shape_cast %150 : vector<1x2x256xf32> to vector<2x256xf32>
    %152 = vector.shape_cast %148 : vector<2x256xf32> to vector<1x2x256xf32>
    tpu.vector_store %arg3[%149, %c0_45, %c0_46], %152 {strides = array<i32>} : memref<8x2x256xf32, #tpu.memory_space<vmem>>, vector<1x2x256xf32>,
    %c4_i32 = arith.constant 4 : i32
    %153 = arith.index_cast %c4_i32 : i32 to index
    %c0_47 = arith.constant 0 : index
    %c0_48 = arith.constant 0 : index
    %154 = vector.load %arg0[%153, %c0_47, %c0_48] : memref<8x2x768xf32, #tpu.memory_space<vmem>>, vector<1x2x768xf32>
    %155 = vector.shape_cast %154 : vector<1x2x768xf32> to vector<2x768xf32>
    %c0_49 = arith.constant 0 : index
    %c0_50 = arith.constant 0 : index
    %156 = vector.load %arg1[%c0_49, %c0_50] : memref<256x768xf32, #tpu.memory_space<vmem>>, vector<256x768xf32>
    %cst_51 = arith.constant dense<0.000000e+00> : vector<2x768xf32>
    %157 = tpu.matmul %148, %156, %cst_51 {dimension_numbers = #tpu.dot_dimension_numbers<[1], [0], [0], [1], [0, 0, 1, 1], [], []>} : vector<2x256xf32>, vector<256x768xf32>, vector<2x768xf32> -> vector<2x768xf32>
    %c0_52 = arith.constant 0 : index
    %c0_53 = arith.constant 0 : index
    %158 = vector.load %arg2[%c0_52, %c0_53] : memref<1x768xf32, #tpu.memory_space<vmem>>, vector<1x768xf32>
    %159 = vector.broadcast %158 : vector<1x768xf32> to vector<2x768xf32>
    %160 = arith.addf %157, %159 : vector<2x768xf32>
    %161 = vector.extract_strided_slice %155 {offsets = [0, 0], sizes = [2, 256], strides = [1, 1]} : vector<2x768xf32> to vector<2x256xf32>
    %162 = vector.extract_strided_slice %160 {offsets = [0, 0], sizes = [2, 256], strides = [1, 1]} : vector<2x768xf32> to vector<2x256xf32>
    %163 = arith.addf %161, %162 : vector<2x256xf32>
    %164 = arith.negf %163 : vector<2x256xf32>
    %165 = math.exp %164 : vector<2x256xf32>
    %cst_54 = arith.constant 1.000000e+00 : f32
    %166 = vector.broadcast %cst_54 : f32 to vector<2x256xf32>
    %167 = arith.addf %166, %165 : vector<2x256xf32>
    %168 = arith.divf %166, %167 : vector<2x256xf32>
    %169 = vector.extract_strided_slice %155 {offsets = [0, 256], sizes = [2, 256], strides = [1, 1]} : vector<2x768xf32> to vector<2x256xf32>
    %170 = vector.extract_strided_slice %160 {offsets = [0, 256], sizes = [2, 256], strides = [1, 1]} : vector<2x768xf32> to vector<2x256xf32>
    %171 = arith.addf %169, %170 : vector<2x256xf32>
    %172 = arith.negf %171 : vector<2x256xf32>
    %173 = math.exp %172 : vector<2x256xf32>
    %cst_55 = arith.constant 1.000000e+00 : f32
    %174 = vector.broadcast %cst_55 : f32 to vector<2x256xf32>
    %175 = arith.addf %174, %173 : vector<2x256xf32>
    %176 = arith.divf %174, %175 : vector<2x256xf32>
    %177 = vector.extract_strided_slice %155 {offsets = [0, 512], sizes = [2, 256], strides = [1, 1]} : vector<2x768xf32> to vector<2x256xf32>
    %178 = vector.extract_strided_slice %160 {offsets = [0, 512], sizes = [2, 256], strides = [1, 1]} : vector<2x768xf32> to vector<2x256xf32>
    %179 = arith.mulf %168, %178 : vector<2x256xf32>
    %180 = arith.addf %177, %179 : vector<2x256xf32>
    %181 = math.tanh %180 : vector<2x256xf32>
    %cst_56 = arith.constant 1.000000e+00 : f32
    %182 = vector.broadcast %cst_56 : f32 to vector<2x256xf32>
    %183 = arith.subf %182, %176 : vector<2x256xf32>
    %184 = arith.mulf %183, %181 : vector<2x256xf32>
    %185 = arith.mulf %176, %148 : vector<2x256xf32>
    %186 = arith.addf %184, %185 : vector<2x256xf32>
    %187 = arith.index_cast %c4_i32 : i32 to index
    %c0_57 = arith.constant 0 : index
    %c0_58 = arith.constant 0 : index
    %188 = vector.load %arg3[%187, %c0_57, %c0_58] : memref<8x2x256xf32, #tpu.memory_space<vmem>>, vector<1x2x256xf32>
    %189 = vector.shape_cast %188 : vector<1x2x256xf32> to vector<2x256xf32>
    %190 = vector.shape_cast %186 : vector<2x256xf32> to vector<1x2x256xf32>
    tpu.vector_store %arg3[%187, %c0_57, %c0_58], %190 {strides = array<i32>} : memref<8x2x256xf32, #tpu.memory_space<vmem>>, vector<1x2x256xf32>,
    %c5_i32 = arith.constant 5 : i32
    %191 = arith.index_cast %c5_i32 : i32 to index
    %c0_59 = arith.constant 0 : index
    %c0_60 = arith.constant 0 : index
    %192 = vector.load %arg0[%191, %c0_59, %c0_60] : memref<8x2x768xf32, #tpu.memory_space<vmem>>, vector<1x2x768xf32>
    %193 = vector.shape_cast %192 : vector<1x2x768xf32> to vector<2x768xf32>
    %c0_61 = arith.constant 0 : index
    %c0_62 = arith.constant 0 : index
    %194 = vector.load %arg1[%c0_61, %c0_62] : memref<256x768xf32, #tpu.memory_space<vmem>>, vector<256x768xf32>
    %cst_63 = arith.constant dense<0.000000e+00> : vector<2x768xf32>
    %195 = tpu.matmul %186, %194, %cst_63 {dimension_numbers = #tpu.dot_dimension_numbers<[1], [0], [0], [1], [0, 0, 1, 1], [], []>} : vector<2x256xf32>, vector<256x768xf32>, vector<2x768xf32> -> vector<2x768xf32>
    %c0_64 = arith.constant 0 : index
    %c0_65 = arith.constant 0 : index
    %196 = vector.load %arg2[%c0_64, %c0_65] : memref<1x768xf32, #tpu.memory_space<vmem>>, vector<1x768xf32>
    %197 = vector.broadcast %196 : vector<1x768xf32> to vector<2x768xf32>
    %198 = arith.addf %195, %197 : vector<2x768xf32>
    %199 = vector.extract_strided_slice %193 {offsets = [0, 0], sizes = [2, 256], strides = [1, 1]} : vector<2x768xf32> to vector<2x256xf32>
    %200 = vector.extract_strided_slice %198 {offsets = [0, 0], sizes = [2, 256], strides = [1, 1]} : vector<2x768xf32> to vector<2x256xf32>
    %201 = arith.addf %199, %200 : vector<2x256xf32>
    %202 = arith.negf %201 : vector<2x256xf32>
    %203 = math.exp %202 : vector<2x256xf32>
    %cst_66 = arith.constant 1.000000e+00 : f32
    %204 = vector.broadcast %cst_66 : f32 to vector<2x256xf32>
    %205 = arith.addf %204, %203 : vector<2x256xf32>
    %206 = arith.divf %204, %205 : vector<2x256xf32>
    %207 = vector.extract_strided_slice %193 {offsets = [0, 256], sizes = [2, 256], strides = [1, 1]} : vector<2x768xf32> to vector<2x256xf32>
    %208 = vector.extract_strided_slice %198 {offsets = [0, 256], sizes = [2, 256], strides = [1, 1]} : vector<2x768xf32> to vector<2x256xf32>
    %209 = arith.addf %207, %208 : vector<2x256xf32>
    %210 = arith.negf %209 : vector<2x256xf32>
    %211 = math.exp %210 : vector<2x256xf32>
    %cst_67 = arith.constant 1.000000e+00 : f32
    %212 = vector.broadcast %cst_67 : f32 to vector<2x256xf32>
    %213 = arith.addf %212, %211 : vector<2x256xf32>
    %214 = arith.divf %212, %213 : vector<2x256xf32>
    %215 = vector.extract_strided_slice %193 {offsets = [0, 512], sizes = [2, 256], strides = [1, 1]} : vector<2x768xf32> to vector<2x256xf32>
    %216 = vector.extract_strided_slice %198 {offsets = [0, 512], sizes = [2, 256], strides = [1, 1]} : vector<2x768xf32> to vector<2x256xf32>
    %217 = arith.mulf %206, %216 : vector<2x256xf32>
    %218 = arith.addf %215, %217 : vector<2x256xf32>
    %219 = math.tanh %218 : vector<2x256xf32>
    %cst_68 = arith.constant 1.000000e+00 : f32
    %220 = vector.broadcast %cst_68 : f32 to vector<2x256xf32>
    %221 = arith.subf %220, %214 : vector<2x256xf32>
    %222 = arith.mulf %221, %219 : vector<2x256xf32>
    %223 = arith.mulf %214, %186 : vector<2x256xf32>
    %224 = arith.addf %222, %223 : vector<2x256xf32>
    %225 = arith.index_cast %c5_i32 : i32 to index
    %c0_69 = arith.constant 0 : index
    %c0_70 = arith.constant 0 : index
    %226 = vector.load %arg3[%225, %c0_69, %c0_70] : memref<8x2x256xf32, #tpu.memory_space<vmem>>, vector<1x2x256xf32>
    %227 = vector.shape_cast %226 : vector<1x2x256xf32> to vector<2x256xf32>
    %228 = vector.shape_cast %224 : vector<2x256xf32> to vector<1x2x256xf32>
    tpu.vector_store %arg3[%225, %c0_69, %c0_70], %228 {strides = array<i32>} : memref<8x2x256xf32, #tpu.memory_space<vmem>>, vector<1x2x256xf32>,
    %c6_i32 = arith.constant 6 : i32
    %229 = arith.index_cast %c6_i32 : i32 to index
    %c0_71 = arith.constant 0 : index
    %c0_72 = arith.constant 0 : index
    %230 = vector.load %arg0[%229, %c0_71, %c0_72] : memref<8x2x768xf32, #tpu.memory_space<vmem>>, vector<1x2x768xf32>
    %231 = vector.shape_cast %230 : vector<1x2x768xf32> to vector<2x768xf32>
    %c0_73 = arith.constant 0 : index
    %c0_74 = arith.constant 0 : index
    %232 = vector.load %arg1[%c0_73, %c0_74] : memref<256x768xf32, #tpu.memory_space<vmem>>, vector<256x768xf32>
    %cst_75 = arith.constant dense<0.000000e+00> : vector<2x768xf32>
    %233 = tpu.matmul %224, %232, %cst_75 {dimension_numbers = #tpu.dot_dimension_numbers<[1], [0], [0], [1], [0, 0, 1, 1], [], []>} : vector<2x256xf32>, vector<256x768xf32>, vector<2x768xf32> -> vector<2x768xf32>
    %c0_76 = arith.constant 0 : index
    %c0_77 = arith.constant 0 : index
    %234 = vector.load %arg2[%c0_76, %c0_77] : memref<1x768xf32, #tpu.memory_space<vmem>>, vector<1x768xf32>
    %235 = vector.broadcast %234 : vector<1x768xf32> to vector<2x768xf32>
    %236 = arith.addf %233, %235 : vector<2x768xf32>
    %237 = vector.extract_strided_slice %231 {offsets = [0, 0], sizes = [2, 256], strides = [1, 1]} : vector<2x768xf32> to vector<2x256xf32>
    %238 = vector.extract_strided_slice %236 {offsets = [0, 0], sizes = [2, 256], strides = [1, 1]} : vector<2x768xf32> to vector<2x256xf32>
    %239 = arith.addf %237, %238 : vector<2x256xf32>
    %240 = arith.negf %239 : vector<2x256xf32>
    %241 = math.exp %240 : vector<2x256xf32>
    %cst_78 = arith.constant 1.000000e+00 : f32
    %242 = vector.broadcast %cst_78 : f32 to vector<2x256xf32>
    %243 = arith.addf %242, %241 : vector<2x256xf32>
    %244 = arith.divf %242, %243 : vector<2x256xf32>
    %245 = vector.extract_strided_slice %231 {offsets = [0, 256], sizes = [2, 256], strides = [1, 1]} : vector<2x768xf32> to vector<2x256xf32>
    %246 = vector.extract_strided_slice %236 {offsets = [0, 256], sizes = [2, 256], strides = [1, 1]} : vector<2x768xf32> to vector<2x256xf32>
    %247 = arith.addf %245, %246 : vector<2x256xf32>
    %248 = arith.negf %247 : vector<2x256xf32>
    %249 = math.exp %248 : vector<2x256xf32>
    %cst_79 = arith.constant 1.000000e+00 : f32
    %250 = vector.broadcast %cst_79 : f32 to vector<2x256xf32>
    %251 = arith.addf %250, %249 : vector<2x256xf32>
    %252 = arith.divf %250, %251 : vector<2x256xf32>
    %253 = vector.extract_strided_slice %231 {offsets = [0, 512], sizes = [2, 256], strides = [1, 1]} : vector<2x768xf32> to vector<2x256xf32>
    %254 = vector.extract_strided_slice %236 {offsets = [0, 512], sizes = [2, 256], strides = [1, 1]} : vector<2x768xf32> to vector<2x256xf32>
    %255 = arith.mulf %244, %254 : vector<2x256xf32>
    %256 = arith.addf %253, %255 : vector<2x256xf32>
    %257 = math.tanh %256 : vector<2x256xf32>
    %cst_80 = arith.constant 1.000000e+00 : f32
    %258 = vector.broadcast %cst_80 : f32 to vector<2x256xf32>
    %259 = arith.subf %258, %252 : vector<2x256xf32>
    %260 = arith.mulf %259, %257 : vector<2x256xf32>
    %261 = arith.mulf %252, %224 : vector<2x256xf32>
    %262 = arith.addf %260, %261 : vector<2x256xf32>
    %263 = arith.index_cast %c6_i32 : i32 to index
    %c0_81 = arith.constant 0 : index
    %c0_82 = arith.constant 0 : index
    %264 = vector.load %arg3[%263, %c0_81, %c0_82] : memref<8x2x256xf32, #tpu.memory_space<vmem>>, vector<1x2x256xf32>
    %265 = vector.shape_cast %264 : vector<1x2x256xf32> to vector<2x256xf32>
    %266 = vector.shape_cast %262 : vector<2x256xf32> to vector<1x2x256xf32>
    tpu.vector_store %arg3[%263, %c0_81, %c0_82], %266 {strides = array<i32>} : memref<8x2x256xf32, #tpu.memory_space<vmem>>, vector<1x2x256xf32>,
    %c7_i32 = arith.constant 7 : i32
    %267 = arith.index_cast %c7_i32 : i32 to index
    %c0_83 = arith.constant 0 : index
    %c0_84 = arith.constant 0 : index
    %268 = vector.load %arg0[%267, %c0_83, %c0_84] : memref<8x2x768xf32, #tpu.memory_space<vmem>>, vector<1x2x768xf32>
    %269 = vector.shape_cast %268 : vector<1x2x768xf32> to vector<2x768xf32>
    %c0_85 = arith.constant 0 : index
    %c0_86 = arith.constant 0 : index
    %270 = vector.load %arg1[%c0_85, %c0_86] : memref<256x768xf32, #tpu.memory_space<vmem>>, vector<256x768xf32>
    %cst_87 = arith.constant dense<0.000000e+00> : vector<2x768xf32>
    %271 = tpu.matmul %262, %270, %cst_87 {dimension_numbers = #tpu.dot_dimension_numbers<[1], [0], [0], [1], [0, 0, 1, 1], [], []>} : vector<2x256xf32>, vector<256x768xf32>, vector<2x768xf32> -> vector<2x768xf32>
    %c0_88 = arith.constant 0 : index
    %c0_89 = arith.constant 0 : index
    %272 = vector.load %arg2[%c0_88, %c0_89] : memref<1x768xf32, #tpu.memory_space<vmem>>, vector<1x768xf32>
    %273 = vector.broadcast %272 : vector<1x768xf32> to vector<2x768xf32>
    %274 = arith.addf %271, %273 : vector<2x768xf32>
    %275 = vector.extract_strided_slice %269 {offsets = [0, 0], sizes = [2, 256], strides = [1, 1]} : vector<2x768xf32> to vector<2x256xf32>
    %276 = vector.extract_strided_slice %274 {offsets = [0, 0], sizes = [2, 256], strides = [1, 1]} : vector<2x768xf32> to vector<2x256xf32>
    %277 = arith.addf %275, %276 : vector<2x256xf32>
    %278 = arith.negf %277 : vector<2x256xf32>
    %279 = math.exp %278 : vector<2x256xf32>
    %cst_90 = arith.constant 1.000000e+00 : f32
    %280 = vector.broadcast %cst_90 : f32 to vector<2x256xf32>
    %281 = arith.addf %280, %279 : vector<2x256xf32>
    %282 = arith.divf %280, %281 : vector<2x256xf32>
    %283 = vector.extract_strided_slice %269 {offsets = [0, 256], sizes = [2, 256], strides = [1, 1]} : vector<2x768xf32> to vector<2x256xf32>
    %284 = vector.extract_strided_slice %274 {offsets = [0, 256], sizes = [2, 256], strides = [1, 1]} : vector<2x768xf32> to vector<2x256xf32>
    %285 = arith.addf %283, %284 : vector<2x256xf32>
    %286 = arith.negf %285 : vector<2x256xf32>
    %287 = math.exp %286 : vector<2x256xf32>
    %cst_91 = arith.constant 1.000000e+00 : f32
    %288 = vector.broadcast %cst_91 : f32 to vector<2x256xf32>
    %289 = arith.addf %288, %287 : vector<2x256xf32>
    %290 = arith.divf %288, %289 : vector<2x256xf32>
    %291 = vector.extract_strided_slice %269 {offsets = [0, 512], sizes = [2, 256], strides = [1, 1]} : vector<2x768xf32> to vector<2x256xf32>
    %292 = vector.extract_strided_slice %274 {offsets = [0, 512], sizes = [2, 256], strides = [1, 1]} : vector<2x768xf32> to vector<2x256xf32>
    %293 = arith.mulf %282, %292 : vector<2x256xf32>
    %294 = arith.addf %291, %293 : vector<2x256xf32>
    %295 = math.tanh %294 : vector<2x256xf32>
    %cst_92 = arith.constant 1.000000e+00 : f32
    %296 = vector.broadcast %cst_92 : f32 to vector<2x256xf32>
    %297 = arith.subf %296, %290 : vector<2x256xf32>
    %298 = arith.mulf %297, %295 : vector<2x256xf32>
    %299 = arith.mulf %290, %262 : vector<2x256xf32>
    %300 = arith.addf %298, %299 : vector<2x256xf32>
    %301 = arith.index_cast %c7_i32 : i32 to index
    %c0_93 = arith.constant 0 : index
    %c0_94 = arith.constant 0 : index
    %302 = vector.load %arg3[%301, %c0_93, %c0_94] : memref<8x2x256xf32, #tpu.memory_space<vmem>>, vector<1x2x256xf32>
    %303 = vector.shape_cast %302 : vector<1x2x256xf32> to vector<2x256xf32>
    %304 = vector.shape_cast %300 : vector<2x256xf32> to vector<1x2x256xf32>
    tpu.vector_store %arg3[%301, %c0_93, %c0_94], %304 {strides = array<i32>} : memref<8x2x256xf32, #tpu.memory_space<vmem>>, vector<1x2x256xf32>,
    %c8_i32 = arith.constant 8 : i32
    return
  }
}

</mosaic_0001>

<llo_original>
// kernel: bigru_encoder_2.1
$region0: #{bigru_encoder_2.1}
  #allocation0 [shape = 'u32[]', space=smem, size = 0x4, offset = 0x4, fixed_abs, tag = 'smem constant byte address 0x4 - core index']
  #allocation1 [shape = 'u32[144,128]{1,0:T(1,128)}', space=vmem, size = 0x12000, scoped, tag = 'internal scratch']
  %s0 = inlined_call_operand.vmem [shape: f32[8,2,768], index: 0, kind: input, shape index: {}]
  %s1 = inlined_call_operand.vmem [shape: f32[256,768], index: 1, kind: input, shape index: {}]
  %s2 = inlined_call_operand.vmem [shape: f32[1,768], index: 2, kind: input, shape index: {}]
  %s3 = inlined_call_operand.vmem [shape: f32[8,2,256], index: 3, kind: output, shape index: {}]
  %s4 = sld [smem:[#allocation0]]
  $region22: #{bigru_encoder_2.1} parent=0
    _
  %s6 = ssub.s32 1, %s4
  %s7 = scalar_select 0, %s6, %s4
  // Predicated region
  $region2: #{bigru_encoder_2.1} parent=0 // pred_check
    _
  $region3: #{bigru_encoder_2.1} parent=0 // pred_check_branch
    %9 = sbr.rel (0) target = $region5
  $region4: #{bigru_encoder_2.1} parent=0 // pred_region
    _
  $region5: #{bigru_encoder_2.1} parent=0 // pred_fallthru
    _
  // Predicated region
  $region6: #{bigru_encoder_2.1} parent=0 // pred_check
    _
  $region7: #{bigru_encoder_2.1} parent=0 // pred_check_branch
    %11 = sbr.rel (0) target = $region9
  $region8: #{bigru_encoder_2.1} parent=0 // pred_region
    _
  $region9: #{bigru_encoder_2.1} parent=0 // pred_fallthru
    _
  // Predicated region
  $region10: #{bigru_encoder_2.1} parent=0 // pred_check
    _
  $region11: #{bigru_encoder_2.1} parent=0 // pred_check_branch
    %13 = sbr.rel (0) target = $region13
  $region12: #{bigru_encoder_2.1} parent=0 // pred_region
    _
  $region13: #{bigru_encoder_2.1} parent=0 // pred_fallthru
    _
  %v14 = vld [vmem:[%s0] sm:$0xff]
  %v15 = vld [vmem:[%s0 + $0x8] sm:$0xf]
  %v16 = vld [vmem:[%s1] sm:$0xff]
  %v17 = vld [vmem:[%s1 + $0x8] sm:$0xff]
  %v18 = vld [vmem:[%s1 + $0x10] sm:$0xff]
  %v19 = vld [vmem:[%s1 + $0x18] sm:$0xff]
  %v20 = vld [vmem:[%s1 + $0x20] sm:$0xff]
  %v21 = vld [vmem:[%s1 + $0x28] sm:$0xff]
  %v22 = vld [vmem:[%s1 + $0x30] sm:$0xff]
  %v23 = vld [vmem:[%s1 + $0x38] sm:$0xff]
  %v24 = vld [vmem:[%s1 + $0x40] sm:$0xff]
  %v25 = vld [vmem:[%s1 + $0x48] sm:$0xff]
  %v26 = vld [vmem:[%s1 + $0x50] sm:$0xff]
  %v27 = vld [vmem:[%s1 + $0x58] sm:$0xff]
  %v28 = vld [vmem:[%s1 + $0x60] sm:$0xff]
  %v29 = vld [vmem:[%s1 + $0x68] sm:$0xff]
  %v30 = vld [vmem:[%s1 + $0x70] sm:$0xff]
  %v31 = vld [vmem:[%s1 + $0x78] sm:$0xff]
  %v32 = vld [vmem:[%s1 + $0x80] sm:$0xff]
  %v33 = vld [vmem:[%s1 + $0x88] sm:$0xff]
  %v34 = vld [vmem:[%s1 + $0x90] sm:$0xff]
  %v35 = vld [vmem:[%s1 + $0x98] sm:$0xff]
  %v36 = vld [vmem:[%s1 + $0xa0] sm:$0xff]
  %v37 = vld [vmem:[%s1 + $0xa8] sm:$0xff]
  %v38 = vld [vmem:[%s1 + $0xb0] sm:$0xff]
  %v39 = vld [vmem:[%s1 + $0xb8] sm:$0xff]
  %v40 = vld [vmem:[%s1 + $0xc0] sm:$0xff]
  %v41 = vld [vmem:[%s1 + $0xc8] sm:$0xff]
  %v42 = vld [vmem:[%s1 + $0xd0] sm:$0xff]
  %v43 = vld [vmem:[%s1 + $0xd8] sm:$0xff]
  %v44 = vld [vmem:[%s1 + $0xe0] sm:$0xff]
  %v45 = vld [vmem:[%s1 + $0xe8] sm:$0xff]
  %v46 = vld [vmem:[%s1 + $0xf0] sm:$0xff]
  %v47 = vld [vmem:[%s1 + $0xf8] sm:$0xff]
  %v48 = vld [vmem:[%s1 + $0x100] sm:$0xff]
  %v49 = vld [vmem:[%s1 + $0x108] sm:$0xff]
  %v50 = vld [vmem:[%s1 + $0x110] sm:$0xff]
  %v51 = vld [vmem:[%s1 + $0x118] sm:$0xff]
  %v52 = vld [vmem:[%s1 + $0x120] sm:$0xff]
  %v53 = vld [vmem:[%s1 + $0x128] sm:$0xff]
  %v54 = vld [vmem:[%s1 + $0x130] sm:$0xff]
  %v55 = vld [vmem:[%s1 + $0x138] sm:$0xff]
  %v56 = vld [vmem:[%s1 + $0x140] sm:$0xff]
  %v57 = vld [vmem:[%s1 + $0x148] sm:$0xff]
  %v58 = vld [vmem:[%s1 + $0x150] sm:$0xff]
  %v59 = vld [vmem:[%s1 + $0x158] sm:$0xff]
  %v60 = vld [vmem:[%s1 + $0x160] sm:$0xff]
  %v61 = vld [vmem:[%s1 + $0x168] sm:$0xff]
  %v62 = vld [vmem:[%s1 + $0x170] sm:$0xff]
  %v63 = vld [vmem:[%s1 + $0x178] sm:$0xff]
  %v64 = vld [vmem:[%s1 + $0x180] sm:$0xff]
  %v65 = vld [vmem:[%s1 + $0x188] sm:$0xff]
  %v66 = vld [vmem:[%s1 + $0x190] sm:$0xff]
  %v67 = vld [vmem:[%s1 + $0x198] sm:$0xff]
  %v68 = vld [vmem:[%s1 + $0x1a0] sm:$0xff]
  %v69 = vld [vmem:[%s1 + $0x1a8] sm:$0xff]
  %v70 = vld [vmem:[%s1 + $0x1b0] sm:$0xff]
  %v71 = vld [vmem:[%s1 + $0x1b8] sm:$0xff]
  %v72 = vld [vmem:[%s1 + $0x1c0] sm:$0xff]
  %v73 = vld [vmem:[%s1 + $0x1c8] sm:$0xff]
  %v74 = vld [vmem:[%s1 + $0x1d0] sm:$0xff]
  %v75 = vld [vmem:[%s1 + $0x1d8] sm:$0xff]
  %v76 = vld [vmem:[%s1 + $0x1e0] sm:$0xff]
  %v77 = vld [vmem:[%s1 + $0x1e8] sm:$0xff]
  %v78 = vld [vmem:[%s1 + $0x1f0] sm:$0xff]
  %v79 = vld [vmem:[%s1 + $0x1f8] sm:$0xff]
  %v80 = vld [vmem:[%s1 + $0x200] sm:$0xff]
  %v81 = vld [vmem:[%s1 + $0x208] sm:$0xff]
  %v82 = vld [vmem:[%s1 + $0x210] sm:$0xff]
  %v83 = vld [vmem:[%s1 + $0x218] sm:$0xff]
  %v84 = vld [vmem:[%s1 + $0x220] sm:$0xff]
  %v85 = vld [vmem:[%s1 + $0x228] sm:$0xff]
  %v86 = vld [vmem:[%s1 + $0x230] sm:$0xff]
  %v87 = vld [vmem:[%s1 + $0x238] sm:$0xff]
  %v88 = vld [vmem:[%s1 + $0x240] sm:$0xff]
  %v89 = vld [vmem:[%s1 + $0x248] sm:$0xff]
  %v90 = vld [vmem:[%s1 + $0x250] sm:$0xff]
  %v91 = vld [vmem:[%s1 + $0x258] sm:$0xff]
  %v92 = vld [vmem:[%s1 + $0x260] sm:$0xff]
  %v93 = vld [vmem:[%s1 + $0x268] sm:$0xff]
  %v94 = vld [vmem:[%s1 + $0x270] sm:$0xff]
  %v95 = vld [vmem:[%s1 + $0x278] sm:$0xff]
  %v96 = vld [vmem:[%s1 + $0x280] sm:$0xff]
  %v97 = vld [vmem:[%s1 + $0x288] sm:$0xff]
  %v98 = vld [vmem:[%s1 + $0x290] sm:$0xff]
  %v99 = vld [vmem:[%s1 + $0x298] sm:$0xff]
  %v100 = vld [vmem:[%s1 + $0x2a0] sm:$0xff]
  %v101 = vld [vmem:[%s1 + $0x2a8] sm:$0xff]
  %v102 = vld [vmem:[%s1 + $0x2b0] sm:$0xff]
  %v103 = vld [vmem:[%s1 + $0x2b8] sm:$0xff]
  %v104 = vld [vmem:[%s1 + $0x2c0] sm:$0xff]
  %v105 = vld [vmem:[%s1 + $0x2c8] sm:$0xff]
  %v106 = vld [vmem:[%s1 + $0x2d0] sm:$0xff]
  %v107 = vld [vmem:[%s1 + $0x2d8] sm:$0xff]
  %v108 = vld [vmem:[%s1 + $0x2e0] sm:$0xff]
  %v109 = vld [vmem:[%s1 + $0x2e8] sm:$0xff]
  %v110 = vld [vmem:[%s1 + $0x2f0] sm:$0xff]
  %v111 = vld [vmem:[%s1 + $0x2f8] sm:$0xff]
  %v112 = vld [vmem:[%s1 + $0x300] sm:$0xff]
  %v113 = vld [vmem:[%s1 + $0x308] sm:$0xff]
  %v114 = vld [vmem:[%s1 + $0x310] sm:$0xff]
  %v115 = vld [vmem:[%s1 + $0x318] sm:$0xff]
  %v116 = vld [vmem:[%s1 + $0x320] sm:$0xff]
  %v117 = vld [vmem:[%s1 + $0x328] sm:$0xff]
  %v118 = vld [vmem:[%s1 + $0x330] sm:$0xff]
  %v119 = vld [vmem:[%s1 + $0x338] sm:$0xff]
  %v120 = vld [vmem:[%s1 + $0x340] sm:$0xff]
  %v121 = vld [vmem:[%s1 + $0x348] sm:$0xff]
  %v122 = vld [vmem:[%s1 + $0x350] sm:$0xff]
  %v123 = vld [vmem:[%s1 + $0x358] sm:$0xff]
  %v124 = vld [vmem:[%s1 + $0x360] sm:$0xff]
  %v125 = vld [vmem:[%s1 + $0x368] sm:$0xff]
  %v126 = vld [vmem:[%s1 + $0x370] sm:$0xff]
  %v127 = vld [vmem:[%s1 + $0x378] sm:$0xff]
  %v128 = vld [vmem:[%s1 + $0x380] sm:$0xff]
  %v129 = vld [vmem:[%s1 + $0x388] sm:$0xff]
  %v130 = vld [vmem:[%s1 + $0x390] sm:$0xff]
  %v131 = vld [vmem:[%s1 + $0x398] sm:$0xff]
  %v132 = vld [vmem:[%s1 + $0x3a0] sm:$0xff]
  %v133 = vld [vmem:[%s1 + $0x3a8] sm:$0xff]
  %v134 = vld [vmem:[%s1 + $0x3b0] sm:$0xff]
  %v135 = vld [vmem:[%s1 + $0x3b8] sm:$0xff]
  %v136 = vld [vmem:[%s1 + $0x3c0] sm:$0xff]
  %v137 = vld [vmem:[%s1 + $0x3c8] sm:$0xff]
  %v138 = vld [vmem:[%s1 + $0x3d0] sm:$0xff]
  %v139 = vld [vmem:[%s1 + $0x3d8] sm:$0xff]
  %v140 = vld [vmem:[%s1 + $0x3e0] sm:$0xff]
  %v141 = vld [vmem:[%s1 + $0x3e8] sm:$0xff]
  %v142 = vld [vmem:[%s1 + $0x3f0] sm:$0xff]
  %v143 = vld [vmem:[%s1 + $0x3f8] sm:$0xff]
  %v144 = vld [vmem:[%s1 + $0x400] sm:$0xff]
  %v145 = vld [vmem:[%s1 + $0x408] sm:$0xff]
  %v146 = vld [vmem:[%s1 + $0x410] sm:$0xff]
  %v147 = vld [vmem:[%s1 + $0x418] sm:$0xff]
  %v148 = vld [vmem:[%s1 + $0x420] sm:$0xff]
  %v149 = vld [vmem:[%s1 + $0x428] sm:$0xff]
  %v150 = vld [vmem:[%s1 + $0x430] sm:$0xff]
  %v151 = vld [vmem:[%s1 + $0x438] sm:$0xff]
  %v152 = vld [vmem:[%s1 + $0x440] sm:$0xff]
  %v153 = vld [vmem:[%s1 + $0x448] sm:$0xff]
  %v154 = vld [vmem:[%s1 + $0x450] sm:$0xff]
  %v155 = vld [vmem:[%s1 + $0x458] sm:$0xff]
  %v156 = vld [vmem:[%s1 + $0x460] sm:$0xff]
  %v157 = vld [vmem:[%s1 + $0x468] sm:$0xff]
  %v158 = vld [vmem:[%s1 + $0x470] sm:$0xff]
  %v159 = vld [vmem:[%s1 + $0x478] sm:$0xff]
  %v160 = vld [vmem:[%s1 + $0x480] sm:$0xff]
  %v161 = vld [vmem:[%s1 + $0x488] sm:$0xff]
  %v162 = vld [vmem:[%s1 + $0x490] sm:$0xff]
  %v163 = vld [vmem:[%s1 + $0x498] sm:$0xff]
  %v164 = vld [vmem:[%s1 + $0x4a0] sm:$0xff]
  %v165 = vld [vmem:[%s1 + $0x4a8] sm:$0xff]
  %v166 = vld [vmem:[%s1 + $0x4b0] sm:$0xff]
  %v167 = vld [vmem:[%s1 + $0x4b8] sm:$0xff]
  %v168 = vld [vmem:[%s1 + $0x4c0] sm:$0xff]
  %v169 = vld [vmem:[%s1 + $0x4c8] sm:$0xff]
  %v170 = vld [vmem:[%s1 + $0x4d0] sm:$0xff]
  %v171 = vld [vmem:[%s1 + $0x4d8] sm:$0xff]
  %v172 = vld [vmem:[%s1 + $0x4e0] sm:$0xff]
  %v173 = vld [vmem:[%s1 + $0x4e8] sm:$0xff]
  %v174 = vld [vmem:[%s1 + $0x4f0] sm:$0xff]
  %v175 = vld [vmem:[%s1 + $0x4f8] sm:$0xff]
  %v176 = vld [vmem:[%s1 + $0x500] sm:$0xff]
  %v177 = vld [vmem:[%s1 + $0x508] sm:$0xff]
  %v178 = vld [vmem:[%s1 + $0x510] sm:$0xff]
  %v179 = vld [vmem:[%s1 + $0x518] sm:$0xff]
  %v180 = vld [vmem:[%s1 + $0x520] sm:$0xff]
  %v181 = vld [vmem:[%s1 + $0x528] sm:$0xff]
  %v182 = vld [vmem:[%s1 + $0x530] sm:$0xff]
  %v183 = vld [vmem:[%s1 + $0x538] sm:$0xff]
  %v184 = vld [vmem:[%s1 + $0x540] sm:$0xff]
  %v185 = vld [vmem:[%s1 + $0x548] sm:$0xff]
  %v186 = vld [vmem:[%s1 + $0x550] sm:$0xff]
  %v187 = vld [vmem:[%s1 + $0x558] sm:$0xff]
  %v188 = vld [vmem:[%s1 + $0x560] sm:$0xff]
  %v189 = vld [vmem:[%s1 + $0x568] sm:$0xff]
  %v190 = vld [vmem:[%s1 + $0x570] sm:$0xff]
  %v191 = vld [vmem:[%s1 + $0x578] sm:$0xff]
  %v192 = vld [vmem:[%s1 + $0x580] sm:$0xff]
  %v193 = vld [vmem:[%s1 + $0x588] sm:$0xff]
  %v194 = vld [vmem:[%s1 + $0x590] sm:$0xff]
  %v195 = vld [vmem:[%s1 + $0x598] sm:$0xff]
  %v196 = vld [vmem:[%s1 + $0x5a0] sm:$0xff]
  %v197 = vld [vmem:[%s1 + $0x5a8] sm:$0xff]
  %v198 = vld [vmem:[%s1 + $0x5b0] sm:$0xff]
  %v199 = vld [vmem:[%s1 + $0x5b8] sm:$0xff]
  %v200 = vld [vmem:[%s1 + $0x5c0] sm:$0xff]
  %v201 = vld [vmem:[%s1 + $0x5c8] sm:$0xff]
  %v202 = vld [vmem:[%s1 + $0x5d0] sm:$0xff]
  %v203 = vld [vmem:[%s1 + $0x5d8] sm:$0xff]
  %v204 = vld [vmem:[%s1 + $0x5e0] sm:$0xff]
  %v205 = vld [vmem:[%s1 + $0x5e8] sm:$0xff]
  %v206 = vld [vmem:[%s1 + $0x5f0] sm:$0xff]
  %v207 = vld [vmem:[%s1 + $0x5f8] sm:$0xff]
  %v208 = vld [vmem:[%s2] sm:$0x3f]
  %v210 = vlaneseq
  %v211 = vshrl.u32 %v210, 7
  %v212 = vsub.s32 0, %v211
  %v213 = vrot.slane %v208, %v212
  %v214 = vlaneseq
  %v215 = vshrl.u32 %v214, 7
  %v216 = vsub.s32 1, %v215
  %v217 = vrot.slane %v208, %v216
  %v218 = vlaneseq
  %v219 = vshrl.u32 %v218, 7
  %v220 = vsub.s32 2, %v219
  %v221 = vrot.slane %v208, %v220
  %v222 = vlaneseq
  %v223 = vshrl.u32 %v222, 7
  %v224 = vsub.s32 3, %v223
  %v225 = vrot.slane %v208, %v224
  %v226 = vlaneseq
  %v227 = vshrl.u32 %v226, 7
  %v228 = vsub.s32 4, %v227
  %v229 = vrot.slane %v208, %v228
  %v230 = vlaneseq
  %v231 = vshrl.u32 %v230, 7
  %v232 = vsub.s32 5, %v231
  %v233 = vrot.slane %v208, %v232
  %240 = vmatprep.subr.mxu0 %v17
  %241 = vmatpush1.msra.mxu0 %v16
  %242 = vmatprep.subr.mxu0 %v23
  %243 = vmatpush1.msra.mxu0 %v22
  %244 = vmatprep.subr.mxu0 %v29
  %245 = vmatpush1.msra.mxu0 %v28
  %246 = vmatprep.subr.mxu0 %v35
  %247 = vmatpush1.msra.mxu0 %v34
  %248 = vmatprep.subr.mxu0 %v41
  %249 = vmatpush1.msra.mxu0 %v40
  %250 = vmatprep.subr.mxu0 %v47
  %251 = vmatpush1.msra.mxu0 %v46
  %252 = vmatprep.subr.mxu0 %v53
  %253 = vmatpush1.msra.mxu0 %v52
  %254 = vmatprep.subr.mxu0 %v59
  %255 = vmatpush1.msra.mxu0 %v58
  %256 = vmatprep.subr.mxu0 %v65
  %257 = vmatpush1.msra.mxu0 %v64
  %258 = vmatprep.subr.mxu0 %v71
  %259 = vmatpush1.msra.mxu0 %v70
  %260 = vmatprep.subr.mxu0 %v77
  %261 = vmatpush1.msra.mxu0 %v76
  %262 = vmatprep.subr.mxu0 %v83
  %263 = vmatpush1.msra.mxu0 %v82
  %264 = vmatprep.subr.mxu0 %v89
  %265 = vmatpush1.msra.mxu0 %v88
  %266 = vmatprep.subr.mxu0 %v95
  %267 = vmatpush1.msra.mxu0 %v94
  %268 = vmatprep.subr.mxu0 %v101
  %269 = vmatpush1.msra.mxu0 %v100
  %270 = vmatprep.subr.mxu0 %v107
  %271 = vmatpush1.msra.mxu0 %v106
  %272 = vmatprep.subr.mxu0 %v113
  %273 = vmatpush1.msra.mxu0 %v112
  %274 = vmatprep.subr.mxu0 %v119
  %275 = vmatpush1.msra.mxu0 %v118
  %276 = vmatprep.subr.mxu0 %v125
  %277 = vmatpush1.msra.mxu0 %v124
  %278 = vmatprep.subr.mxu0 %v131
  %279 = vmatpush1.msra.mxu0 %v130
  %280 = vmatprep.subr.mxu0 %v137
  %281 = vmatpush1.msra.mxu0 %v136
  %282 = vmatprep.subr.mxu0 %v143
  %283 = vmatpush1.msra.mxu0 %v142
  %284 = vmatprep.subr.mxu0 %v149
  %285 = vmatpush1.msra.mxu0 %v148
  %286 = vmatprep.subr.mxu0 %v155
  %287 = vmatpush1.msra.mxu0 %v154
  %288 = vmatprep.subr.mxu0 %v161
  %289 = vmatpush1.msra.mxu0 %v160
  %290 = vmatprep.subr.mxu0 %v167
  %291 = vmatpush1.msra.mxu0 %v166
  %292 = vmatprep.subr.mxu0 %v173
  %293 = vmatpush1.msra.mxu0 %v172
  %294 = vmatprep.subr.mxu0 %v179
  %295 = vmatpush1.msra.mxu0 %v178
  %296 = vmatprep.subr.mxu0 %v185
  %297 = vmatpush1.msra.mxu0 %v184
  %298 = vmatprep.subr.mxu0 %v191
  %299 = vmatpush1.msra.mxu0 %v190
  %300 = vmatprep.subr.mxu0 %v197
  %301 = vmatpush1.msra.mxu0 %v196
  %302 = vmatprep.subr.mxu0 %v203
  %303 = vmatpush1.msra.mxu0 %v202
  %304 = vmatprep.mubr.f32.mxu0 0.0
  %305 = vmatmul.mubr.f32.gmra.mrb[0].mxu0 0.0
  %v306 = vpop.f32.mrb[0].mxu0
  %v307 = vadd.f32 %v213, %v306
  %v308 = vpop.f32.mrb[0].mxu0
  %v309 = vadd.f32 %v217, %v308
  %310 = vdwg.mxu0
  %311 = vmatprep.subr.mxu0 %v19
  %312 = vmatpush1.msra.mxu0 %v18
  %313 = vmatprep.subr.mxu0 %v25
  %314 = vmatpush1.msra.mxu0 %v24
  %315 = vmatprep.subr.mxu0 %v31
  %316 = vmatpush1.msra.mxu0 %v30
  %317 = vmatprep.subr.mxu0 %v37
  %318 = vmatpush1.msra.mxu0 %v36
  %319 = vmatprep.subr.mxu0 %v43
  %320 = vmatpush1.msra.mxu0 %v42
  %321 = vmatprep.subr.mxu0 %v49
  %322 = vmatpush1.msra.mxu0 %v48
  %323 = vmatprep.subr.mxu0 %v55
  %324 = vmatpush1.msra.mxu0 %v54
  %325 = vmatprep.subr.mxu0 %v61
  %326 = vmatpush1.msra.mxu0 %v60
  %327 = vmatprep.subr.mxu0 %v67
  %328 = vmatpush1.msra.mxu0 %v66
  %329 = vmatprep.subr.mxu0 %v73
  %330 = vmatpush1.msra.mxu0 %v72
  %331 = vmatprep.subr.mxu0 %v79
  %332 = vmatpush1.msra.mxu0 %v78
  %333 = vmatprep.subr.mxu0 %v85
  %334 = vmatpush1.msra.mxu0 %v84
  %335 = vmatprep.subr.mxu0 %v91
  %336 = vmatpush1.msra.mxu0 %v90
  %337 = vmatprep.subr.mxu0 %v97
  %338 = vmatpush1.msra.mxu0 %v96
  %339 = vmatprep.subr.mxu0 %v103
  %340 = vmatpush1.msra.mxu0 %v102
  %341 = vmatprep.subr.mxu0 %v109
  %342 = vmatpush1.msra.mxu0 %v108
  %343 = vmatprep.subr.mxu0 %v115
  %344 = vmatpush1.msra.mxu0 %v114
  %345 = vmatprep.subr.mxu0 %v121
  %346 = vmatpush1.msra.mxu0 %v120
  %347 = vmatprep.subr.mxu0 %v127
  %348 = vmatpush1.msra.mxu0 %v126
  %349 = vmatprep.subr.mxu0 %v133
  %350 = vmatpush1.msra.mxu0 %v132
  %351 = vmatprep.subr.mxu0 %v139
  %352 = vmatpush1.msra.mxu0 %v138
  %353 = vmatprep.subr.mxu0 %v145
  %354 = vmatpush1.msra.mxu0 %v144
  %355 = vmatprep.subr.mxu0 %v151
  %356 = vmatpush1.msra.mxu0 %v150
  %357 = vmatprep.subr.mxu0 %v157
  %358 = vmatpush1.msra.mxu0 %v156
  %359 = vmatprep.subr.mxu0 %v163
  %360 = vmatpush1.msra.mxu0 %v162
  %361 = vmatprep.subr.mxu0 %v169
  %362 = vmatpush1.msra.mxu0 %v168
  %363 = vmatprep.subr.mxu0 %v175
  %364 = vmatpush1.msra.mxu0 %v174
  %365 = vmatprep.subr.mxu0 %v181
  %366 = vmatpush1.msra.mxu0 %v180
  %367 = vmatprep.subr.mxu0 %v187
  %368 = vmatpush1.msra.mxu0 %v186
  %369 = vmatprep.subr.mxu0 %v193
  %370 = vmatpush1.msra.mxu0 %v192
  %371 = vmatprep.subr.mxu0 %v199
  %372 = vmatpush1.msra.mxu0 %v198
  %373 = vmatprep.subr.mxu0 %v205
  %374 = vmatpush1.msra.mxu0 %v204
  %375 = vmatprep.mubr.f32.mxu0 0.0
  %376 = vmatmul.mubr.f32.gmra.mrb[0].mxu0 0.0
  %v377 = vpop.f32.mrb[0].mxu0
  %v378 = vadd.f32 %v221, %v377
  %v379 = vpop.f32.mrb[0].mxu0
  %v380 = vadd.f32 %v225, %v379
  %381 = vdwg.mxu0
  %382 = vmatprep.subr.mxu0 %v21
  %383 = vmatpush1.msra.mxu0 %v20
  %384 = vmatprep.subr.mxu0 %v27
  %385 = vmatpush1.msra.mxu0 %v26
  %386 = vmatprep.subr.mxu0 %v33
  %387 = vmatpush1.msra.mxu0 %v32
  %388 = vmatprep.subr.mxu0 %v39
  %389 = vmatpush1.msra.mxu0 %v38
  %390 = vmatprep.subr.mxu0 %v45
  %391 = vmatpush1.msra.mxu0 %v44
  %392 = vmatprep.subr.mxu0 %v51
  %393 = vmatpush1.msra.mxu0 %v50
  %394 = vmatprep.subr.mxu0 %v57
  %395 = vmatpush1.msra.mxu0 %v56
  %396 = vmatprep.subr.mxu0 %v63
  %397 = vmatpush1.msra.mxu0 %v62
  %398 = vmatprep.subr.mxu0 %v69
  %399 = vmatpush1.msra.mxu0 %v68
  %400 = vmatprep.subr.mxu0 %v75
  %401 = vmatpush1.msra.mxu0 %v74
  %402 = vmatprep.subr.mxu0 %v81
  %403 = vmatpush1.msra.mxu0 %v80
  %404 = vmatprep.subr.mxu0 %v87
  %405 = vmatpush1.msra.mxu0 %v86
  %406 = vmatprep.subr.mxu0 %v93
  %407 = vmatpush1.msra.mxu0 %v92
  %408 = vmatprep.subr.mxu0 %v99
  %409 = vmatpush1.msra.mxu0 %v98
  %410 = vmatprep.subr.mxu0 %v105
  %411 = vmatpush1.msra.mxu0 %v104
  %412 = vmatprep.subr.mxu0 %v111
  %413 = vmatpush1.msra.mxu0 %v110
  %414 = vmatprep.subr.mxu0 %v117
  %415 = vmatpush1.msra.mxu0 %v116
  %416 = vmatprep.subr.mxu0 %v123
  %417 = vmatpush1.msra.mxu0 %v122
  %418 = vmatprep.subr.mxu0 %v129
  %419 = vmatpush1.msra.mxu0 %v128
  %420 = vmatprep.subr.mxu0 %v135
  %421 = vmatpush1.msra.mxu0 %v134
  %422 = vmatprep.subr.mxu0 %v141
  %423 = vmatpush1.msra.mxu0 %v140
  %424 = vmatprep.subr.mxu0 %v147
  %425 = vmatpush1.msra.mxu0 %v146
  %426 = vmatprep.subr.mxu0 %v153
  %427 = vmatpush1.msra.mxu0 %v152
  %428 = vmatprep.subr.mxu0 %v159
  %429 = vmatpush1.msra.mxu0 %v158
  %430 = vmatprep.subr.mxu0 %v165
  %431 = vmatpush1.msra.mxu0 %v164
  %432 = vmatprep.subr.mxu0 %v171
  %433 = vmatpush1.msra.mxu0 %v170
  %434 = vmatprep.subr.mxu0 %v177
  %435 = vmatpush1.msra.mxu0 %v176
  %436 = vmatprep.subr.mxu0 %v183
  %437 = vmatpush1.msra.mxu0 %v182
  %438 = vmatprep.subr.mxu0 %v189
  %439 = vmatpush1.msra.mxu0 %v188
  %440 = vmatprep.subr.mxu0 %v195
  %441 = vmatpush1.msra.mxu0 %v194
  %442 = vmatprep.subr.mxu0 %v201
  %443 = vmatpush1.msra.mxu0 %v200
  %444 = vmatprep.subr.mxu0 %v207
  %445 = vmatpush1.msra.mxu0 %v206
  %446 = vmatprep.mubr.f32.mxu0 0.0
  %447 = vmatmul.mubr.f32.gmra.mrb[0].mxu0 0.0
  %v448 = vpop.f32.mrb[0].mxu0
  %v449 = vadd.f32 %v229, %v448
  %v450 = vpop.f32.mrb[0].mxu0
  %v451 = vadd.f32 %v233, %v450
  %452 = vdwg.mxu0
  %v455 = vcombine.low %v307, %v309
  %v457 = vunpack.c.l.s4 1983009808
  %v458 = vunpack.c.0.s8 %v457
  %v459 = vlaneseq
  %v460 = vshrl.u32 %v459, 7
  %v461 = vsub.s32 %v458, %v460
  %v462 = vrot.slane %v455, %v461
  %v464 = vadd.f32 %v14, %v462
  %v465 = vxor.u32 %v464, 2147483648
  %v466 = vmul.f32 %v465, 1.442695
  %v467 = vpow.pop %v466
  %v468 = vadd.f32 %v467, 1.0
  %v469 = vrcp.pop %v468
  %v470 = vmul.f32 1.0, %v469
  %v472 = vrot.slane %v14, 4
  %v476 = vcombine.low %v378, %v380
  %v478 = vunpack.c.l.s4 1983009808
  %v479 = vunpack.c.0.s8 %v478
  %v480 = vlaneseq
  %v481 = vshrl.u32 %v480, 7
  %v482 = vsub.s32 %v479, %v481
  %v483 = vrot.slane %v476, %v482
  %v485 = vadd.f32 %v472, %v483
  %v486 = vxor.u32 %v485, 2147483648
  %v487 = vmul.f32 %v486, 1.442695
  %v488 = vpow.pop %v487
  %v489 = vadd.f32 %v488, 1.0
  %v490 = vrcp.pop %v489
  %v491 = vmul.f32 1.0, %v490
  %v494 = vcombine.low %v449, %v451
  %v496 = vunpack.c.l.s4 1983009808
  %v497 = vunpack.c.0.s8 %v496
  %v498 = vlaneseq
  %v499 = vshrl.u32 %v498, 7
  %v500 = vsub.s32 %v497, %v499
  %v501 = vrot.slane %v494, %v500
  %v503 = vmul.f32 %v470, %v501
  %v504 = vadd.f32 %v15, %v503
  %v505 = vtanh.pop %v504
  %v506 = vsub.f32 1.0, %v491
  %v507 = vmul.f32 %v506, %v505
  %v508 = vmul.f32 %v491, 0.0
  %v509 = vadd.f32 %v507, %v508
  %510 = vst [vmem:[%s3] sm:$0xf] %v509
  %s511 = scalar_lea.vmem %s0, 12
  %v512 = vld [vmem:[%s511] sm:$0xff]
  %v513 = vld [vmem:[%s511 + $0x8] sm:$0xf]
  %v514 = vld [vmem:[%s1] sm:$0xff]
  %v515 = vld [vmem:[%s1 + $0x8] sm:$0xff]
  %v516 = vld [vmem:[%s1 + $0x10] sm:$0xff]
  %v517 = vld [vmem:[%s1 + $0x18] sm:$0xff]
  %v518 = vld [vmem:[%s1 + $0x20] sm:$0xff]
  %v519 = vld [vmem:[%s1 + $0x28] sm:$0xff]
  %v520 = vld [vmem:[%s1 + $0x30] sm:$0xff]
  %v521 = vld [vmem:[%s1 + $0x38] sm:$0xff]
  %v522 = vld [vmem:[%s1 + $0x40] sm:$0xff]
  %v523 = vld [vmem:[%s1 + $0x48] sm:$0xff]
  %v524 = vld [vmem:[%s1 + $0x50] sm:$0xff]
  %v525 = vld [vmem:[%s1 + $0x58] sm:$0xff]
  %v526 = vld [vmem:[%s1 + $0x60] sm:$0xff]
  %v527 = vld [vmem:[%s1 + $0x68] sm:$0xff]
  %v528 = vld [vmem:[%s1 + $0x70] sm:$0xff]
  %v529 = vld [vmem:[%s1 + $0x78] sm:$0xff]
  %v530 = vld [vmem:[%s1 + $0x80] sm:$0xff]
  %v531 = vld [vmem:[%s1 + $0x88] sm:$0xff]
  %v532 = vld [vmem:[%s1 + $0x90] sm:$0xff]
  %v533 = vld [vmem:[%s1 + $0x98] sm:$0xff]
  %v534 = vld [vmem:[%s1 + $0xa0] sm:$0xff]
  %v535 = vld [vmem:[%s1 + $0xa8] sm:$0xff]
  %v536 = vld [vmem:[%s1 + $0xb0] sm:$0xff]
  %v537 = vld [vmem:[%s1 + $0xb8] sm:$0xff]
  %v538 = vld [vmem:[%s1 + $0xc0] sm:$0xff]
  %v539 = vld [vmem:[%s1 + $0xc8] sm:$0xff]
  %v540 = vld [vmem:[%s1 + $0xd0] sm:$0xff]
  %v541 = vld [vmem:[%s1 + $0xd8] sm:$0xff]
  %v542 = vld [vmem:[%s1 + $0xe0] sm:$0xff]
  %v543 = vld [vmem:[%s1 + $0xe8] sm:$0xff]
  %v544 = vld [vmem:[%s1 + $0xf0] sm:$0xff]
  %v545 = vld [vmem:[%s1 + $0xf8] sm:$0xff]
  %v546 = vld [vmem:[%s1 + $0x100] sm:$0xff]
  %v547 = vld [vmem:[%s1 + $0x108] sm:$0xff]
  %v548 = vld [vmem:[%s1 + $0x110] sm:$0xff]
  %v549 = vld [vmem:[%s1 + $0x118] sm:$0xff]
  %v550 = vld [vmem:[%s1 + $0x120] sm:$0xff]
  %v551 = vld [vmem:[%s1 + $0x128] sm:$0xff]
  %v552 = vld [vmem:[%s1 + $0x130] sm:$0xff]
  %v553 = vld [vmem:[%s1 + $0x138] sm:$0xff]
  %v554 = vld [vmem:[%s1 + $0x140] sm:$0xff]
  %v555 = vld [vmem:[%s1 + $0x148] sm:$0xff]
  %v556 = vld [vmem:[%s1 + $0x150] sm:$0xff]
  %v557 = vld [vmem:[%s1 + $0x158] sm:$0xff]
  %v558 = vld [vmem:[%s1 + $0x160] sm:$0xff]
  %v559 = vld [vmem:[%s1 + $0x168] sm:$0xff]
  %v560 = vld [vmem:[%s1 + $0x170] sm:$0xff]
  %v561 = vld [vmem:[%s1 + $0x178] sm:$0xff]
  %v562 = vld [vmem:[%s1 + $0x180] sm:$0xff]
  %v563 = vld [vmem:[%s1 + $0x188] sm:$0xff]
  %v564 = vld [vmem:[%s1 + $0x190] sm:$0xff]
  %v565 = vld [vmem:[%s1 + $0x198] sm:$0xff]
  %v566 = vld [vmem:[%s1 + $0x1a0] sm:$0xff]
  %v567 = vld [vmem:[%s1 + $0x1a8] sm:$0xff]
  %v568 = vld [vmem:[%s1 + $0x1b0] sm:$0xff]
  %v569 = vld [vmem:[%s1 + $0x1b8] sm:$0xff]
  %v570 = vld [vmem:[%s1 + $0x1c0] sm:$0xff]
  %v571 = vld [vmem:[%s1 + $0x1c8] sm:$0xff]
  %v572 = vld [vmem:[%s1 + $0x1d0] sm:$0xff]
  %v573 = vld [vmem:[%s1 + $0x1d8] sm:$0xff]
  %v574 = vld [vmem:[%s1 + $0x1e0] sm:$0xff]
  %v575 = vld [vmem:[%s1 + $0x1e8] sm:$0xff]
  %v576 = vld [vmem:[%s1 + $0x1f0] sm:$0xff]
  %v577 = vld [vmem:[%s1 + $0x1f8] sm:$0xff]
  %v578 = vld [vmem:[%s1 + $0x200] sm:$0xff]
  %v579 = vld [vmem:[%s1 + $0x208] sm:$0xff]
  %v580 = vld [vmem:[%s1 + $0x210] sm:$0xff]
  %v581 = vld [vmem:[%s1 + $0x218] sm:$0xff]
  %v582 = vld [vmem:[%s1 + $0x220] sm:$0xff]
  %v583 = vld [vmem:[%s1 + $0x228] sm:$0xff]
  %v584 = vld [vmem:[%s1 + $0x230] sm:$0xff]
  %v585 = vld [vmem:[%s1 + $0x238] sm:$0xff]
  %v586 = vld [vmem:[%s1 + $0x240] sm:$0xff]
  %v587 = vld [vmem:[%s1 + $0x248] sm:$0xff]
  %v588 = vld [vmem:[%s1 + $0x250] sm:$0xff]
  %v589 = vld [vmem:[%s1 + $0x258] sm:$0xff]
  %v590 = vld [vmem:[%s1 + $0x260] sm:$0xff]
  %v591 = vld [vmem:[%s1 + $0x268] sm:$0xff]
  %v592 = vld [vmem:[%s1 + $0x270] sm:$0xff]
  %v593 = vld [vmem:[%s1 + $0x278] sm:$0xff]
  %v594 = vld [vmem:[%s1 + $0x280] sm:$0xff]
  %v595 = vld [vmem:[%s1 + $0x288] sm:$0xff]
  %v596 = vld [vmem:[%s1 + $0x290] sm:$0xff]
  %v597 = vld [vmem:[%s1 + $0x298] sm:$0xff]
  %v598 = vld [vmem:[%s1 + $0x2a0] sm:$0xff]
  %v599 = vld [vmem:[%s1 + $0x2a8] sm:$0xff]
  %v600 = vld [vmem:[%s1 + $0x2b0] sm:$0xff]
  %v601 = vld [vmem:[%s1 + $0x2b8] sm:$0xff]
  %v602 = vld [vmem:[%s1 + $0x2c0] sm:$0xff]
  %v603 = vld [vmem:[%s1 + $0x2c8] sm:$0xff]
  %v604 = vld [vmem:[%s1 + $0x2d0] sm:$0xff]
  %v605 = vld [vmem:[%s1 + $0x2d8] sm:$0xff]
  %v606 = vld [vmem:[%s1 + $0x2e0] sm:$0xff]
  %v607 = vld [vmem:[%s1 + $0x2e8] sm:$0xff]
  %v608 = vld [vmem:[%s1 + $0x2f0] sm:$0xff]
  %v609 = vld [vmem:[%s1 + $0x2f8] sm:$0xff]
  %v610 = vld [vmem:[%s1 + $0x300] sm:$0xff]
  %v611 = vld [vmem:[%s1 + $0x308] sm:$0xff]
  %v612 = vld [vmem:[%s1 + $0x310] sm:$0xff]
  %v613 = vld [vmem:[%s1 + $0x318] sm:$0xff]
  %v614 = vld [vmem:[%s1 + $0x320] sm:$0xff]
  %v615 = vld [vmem:[%s1 + $0x328] sm:$0xff]
  %v616 = vld [vmem:[%s1 + $0x330] sm:$0xff]
  %v617 = vld [vmem:[%s1 + $0x338] sm:$0xff]
  %v618 = vld [vmem:[%s1 + $0x340] sm:$0xff]
  %v619 = vld [vmem:[%s1 + $0x348] sm:$0xff]
  %v620 = vld [vmem:[%s1 + $0x350] sm:$0xff]
  %v621 = vld [vmem:[%s1 + $0x358] sm:$0xff]
  %v622 = vld [vmem:[%s1 + $0x360] sm:$0xff]
  %v623 = vld [vmem:[%s1 + $0x368] sm:$0xff]
  %v624 = vld [vmem:[%s1 + $0x370] sm:$0xff]
  %v625 = vld [vmem:[%s1 + $0x378] sm:$0xff]
  %v626 = vld [vmem:[%s1 + $0x380] sm:$0xff]
  %v627 = vld [vmem:[%s1 + $0x388] sm:$0xff]
  %v628 = vld [vmem:[%s1 + $0x390] sm:$0xff]
  %v629 = vld [vmem:[%s1 + $0x398] sm:$0xff]
  %v630 = vld [vmem:[%s1 + $0x3a0] sm:$0xff]
  %v631 = vld [vmem:[%s1 + $0x3a8] sm:$0xff]
  %v632 = vld [vmem:[%s1 + $0x3b0] sm:$0xff]
  %v633 = vld [vmem:[%s1 + $0x3b8] sm:$0xff]
  %v634 = vld [vmem:[%s1 + $0x3c0] sm:$0xff]
  %v635 = vld [vmem:[%s1 + $0x3c8] sm:$0xff]
  %v636 = vld [vmem:[%s1 + $0x3d0] sm:$0xff]
  %v637 = vld [vmem:[%s1 + $0x3d8] sm:$0xff]
  %v638 = vld [vmem:[%s1 + $0x3e0] sm:$0xff]
  %v639 = vld [vmem:[%s1 + $0x3e8] sm:$0xff]
  %v640 = vld [vmem:[%s1 + $0x3f0] sm:$0xff]
  %v641 = vld [vmem:[%s1 + $0x3f8] sm:$0xff]
  %v642 = vld [vmem:[%s1 + $0x400] sm:$0xff]
  %v643 = vld [vmem:[%s1 + $0x408] sm:$0xff]
  %v644 = vld [vmem:[%s1 + $0x410] sm:$0xff]
  %v645 = vld [vmem:[%s1 + $0x418] sm:$0xff]
  %v646 = vld [vmem:[%s1 + $0x420] sm:$0xff]
  %v647 = vld [vmem:[%s1 + $0x428] sm:$0xff]
  %v648 = vld [vmem:[%s1 + $0x430] sm:$0xff]
  %v649 = vld [vmem:[%s1 + $0x438] sm:$0xff]
  %v650 = vld [vmem:[%s1 + $0x440] sm:$0xff]
  %v651 = vld [vmem:[%s1 + $0x448] sm:$0xff]
  %v652 = vld [vmem:[%s1 + $0x450] sm:$0xff]
  %v653 = vld [vmem:[%s1 + $0x458] sm:$0xff]
  %v654 = vld [vmem:[%s1 + $0x460] sm:$0xff]
  %v655 = vld [vmem:[%s1 + $0x468] sm:$0xff]
  %v656 = vld [vmem:[%s1 + $0x470] sm:$0xff]
  %v657 = vld [vmem:[%s1 + $0x478] sm:$0xff]
  %v658 = vld [vmem:[%s1 + $0x480] sm:$0xff]
  %v659 = vld [vmem:[%s1 + $0x488] sm:$0xff]
  %v660 = vld [vmem:[%s1 + $0x490] sm:$0xff]
  %v661 = vld [vmem:[%s1 + $0x498] sm:$0xff]
  %v662 = vld [vmem:[%s1 + $0x4a0] sm:$0xff]
  %v663 = vld [vmem:[%s1 + $0x4a8] sm:$0xff]
  %v664 = vld [vmem:[%s1 + $0x4b0] sm:$0xff]
  %v665 = vld [vmem:[%s1 + $0x4b8] sm:$0xff]
  %v666 = vld [vmem:[%s1 + $0x4c0] sm:$0xff]
  %v667 = vld [vmem:[%s1 + $0x4c8] sm:$0xff]
  %v668 = vld [vmem:[%s1 + $0x4d0] sm:$0xff]
  %v669 = vld [vmem:[%s1 + $0x4d8] sm:$0xff]
  %v670 = vld [vmem:[%s1 + $0x4e0] sm:$0xff]
  %v671 = vld [vmem:[%s1 + $0x4e8] sm:$0xff]
  %v672 = vld [vmem:[%s1 + $0x4f0] sm:$0xff]
  %v673 = vld [vmem:[%s1 + $0x4f8] sm:$0xff]
  %v674 = vld [vmem:[%s1 + $0x500] sm:$0xff]
  %v675 = vld [vmem:[%s1 + $0x508] sm:$0xff]
  %v676 = vld [vmem:[%s1 + $0x510] sm:$0xff]
  %v677 = vld [vmem:[%s1 + $0x518] sm:$0xff]
  %v678 = vld [vmem:[%s1 + $0x520] sm:$0xff]
  %v679 = vld [vmem:[%s1 + $0x528] sm:$0xff]
  %v680 = vld [vmem:[%s1 + $0x530] sm:$0xff]
  %v681 = vld [vmem:[%s1 + $0x538] sm:$0xff]
  %v682 = vld [vmem:[%s1 + $0x540] sm:$0xff]
  %v683 = vld [vmem:[%s1 + $0x548] sm:$0xff]
  %v684 = vld [vmem:[%s1 + $0x550] sm:$0xff]
  %v685 = vld [vmem:[%s1 + $0x558] sm:$0xff]
  %v686 = vld [vmem:[%s1 + $0x560] sm:$0xff]
  %v687 = vld [vmem:[%s1 + $0x568] sm:$0xff]
  %v688 = vld [vmem:[%s1 + $0x570] sm:$0xff]
  %v689 = vld [vmem:[%s1 + $0x578] sm:$0xff]
  %v690 = vld [vmem:[%s1 + $0x580] sm:$0xff]
  %v691 = vld [vmem:[%s1 + $0x588] sm:$0xff]
  %v692 = vld [vmem:[%s1 + $0x590] sm:$0xff]
  %v693 = vld [vmem:[%s1 + $0x598] sm:$0xff]
  %v694 = vld [vmem:[%s1 + $0x5a0] sm:$0xff]
  %v695 = vld [vmem:[%s1 + $0x5a8] sm:$0xff]
  %v696 = vld [vmem:[%s1 + $0x5b0] sm:$0xff]
  %v697 = vld [vmem:[%s1 + $0x5b8] sm:$0xff]
  %v698 = vld [vmem:[%s1 + $0x5c0] sm:$0xff]
  %v699 = vld [vmem:[%s1 + $0x5c8] sm:$0xff]
  %v700 = vld [vmem:[%s1 + $0x5d0] sm:$0xff]
  %v701 = vld [vmem:[%s1 + $0x5d8] sm:$0xff]
  %v702 = vld [vmem:[%s1 + $0x5e0] sm:$0xff]
  %v703 = vld [vmem:[%s1 + $0x5e8] sm:$0xff]
  %v704 = vld [vmem:[%s1 + $0x5f0] sm:$0xff]
  %v705 = vld [vmem:[%s1 + $0x5f8] sm:$0xff]
  %v706 = vld [vmem:[%s2] sm:$0x3f]
  %v708 = vlaneseq
  %v709 = vshrl.u32 %v708, 7
  %v710 = vsub.s32 0, %v709
  %v711 = vrot.slane %v706, %v710
  %v712 = vlaneseq
  %v713 = vshrl.u32 %v712, 7
  %v714 = vsub.s32 1, %v713
  %v715 = vrot.slane %v706, %v714
  %v716 = vlaneseq
  %v717 = vshrl.u32 %v716, 7
  %v718 = vsub.s32 2, %v717
  %v719 = vrot.slane %v706, %v718
  %v720 = vlaneseq
  %v721 = vshrl.u32 %v720, 7
  %v722 = vsub.s32 3, %v721
  %v723 = vrot.slane %v706, %v722
  %v724 = vlaneseq
  %v725 = vshrl.u32 %v724, 7
  %v726 = vsub.s32 4, %v725
  %v727 = vrot.slane %v706, %v726
  %v728 = vlaneseq
  %v729 = vshrl.u32 %v728, 7
  %v730 = vsub.s32 5, %v729
  %v731 = vrot.slane %v706, %v730
  %v740 = vunpack.c.l.s4 1983009808
  %v741 = vunpack.c.0.s8 %v740
  %v742 = vlaneseq
  %v743 = vshrl.u32 %v742, 7
  %v744 = vsub.s32 %v741, %v743
  %v745 = vrot.slane %v509, %v744
  %v746 = vcombine.high %v745, %v745
  %749 = vmatprep.subr.mxu0 %v515
  %750 = vmatpush1.msra.mxu0 %v514
  %751 = vmatprep.subr.mxu0 %v521
  %752 = vmatpush1.msra.mxu0 %v520
  %753 = vmatprep.subr.mxu0 %v527
  %754 = vmatpush1.msra.mxu0 %v526
  %755 = vmatprep.subr.mxu0 %v533
  %756 = vmatpush1.msra.mxu0 %v532
  %757 = vmatprep.subr.mxu0 %v539
  %758 = vmatpush1.msra.mxu0 %v538
  %759 = vmatprep.subr.mxu0 %v545
  %760 = vmatpush1.msra.mxu0 %v544
  %761 = vmatprep.subr.mxu0 %v551
  %762 = vmatpush1.msra.mxu0 %v550
  %763 = vmatprep.subr.mxu0 %v557
  %764 = vmatpush1.msra.mxu0 %v556
  %765 = vmatprep.subr.mxu0 %v563
  %766 = vmatpush1.msra.mxu0 %v562
  %767 = vmatprep.subr.mxu0 %v569
  %768 = vmatpush1.msra.mxu0 %v568
  %769 = vmatprep.subr.mxu0 %v575
  %770 = vmatpush1.msra.mxu0 %v574
  %771 = vmatprep.subr.mxu0 %v581
  %772 = vmatpush1.msra.mxu0 %v580
  %773 = vmatprep.subr.mxu0 %v587
  %774 = vmatpush1.msra.mxu0 %v586
  %775 = vmatprep.subr.mxu0 %v593
  %776 = vmatpush1.msra.mxu0 %v592
  %777 = vmatprep.subr.mxu0 %v599
  %778 = vmatpush1.msra.mxu0 %v598
  %779 = vmatprep.subr.mxu0 %v605
  %780 = vmatpush1.msra.mxu0 %v604
  %781 = vmatprep.subr.mxu0 %v611
  %782 = vmatpush1.msra.mxu0 %v610
  %783 = vmatprep.subr.mxu0 %v617
  %784 = vmatpush1.msra.mxu0 %v616
  %785 = vmatprep.subr.mxu0 %v623
  %786 = vmatpush1.msra.mxu0 %v622
  %787 = vmatprep.subr.mxu0 %v629
  %788 = vmatpush1.msra.mxu0 %v628
  %789 = vmatprep.subr.mxu0 %v635
  %790 = vmatpush1.msra.mxu0 %v634
  %791 = vmatprep.subr.mxu0 %v641
  %792 = vmatpush1.msra.mxu0 %v640
  %793 = vmatprep.subr.mxu0 %v647
  %794 = vmatpush1.msra.mxu0 %v646
  %795 = vmatprep.subr.mxu0 %v653
  %796 = vmatpush1.msra.mxu0 %v652
  %797 = vmatprep.subr.mxu0 %v659
  %798 = vmatpush1.msra.mxu0 %v658
  %799 = vmatprep.subr.mxu0 %v665
  %800 = vmatpush1.msra.mxu0 %v664
  %801 = vmatprep.subr.mxu0 %v671
  %802 = vmatpush1.msra.mxu0 %v670
  %803 = vmatprep.subr.mxu0 %v677
  %804 = vmatpush1.msra.mxu0 %v676
  %805 = vmatprep.subr.mxu0 %v683
  %806 = vmatpush1.msra.mxu0 %v682
  %807 = vmatprep.subr.mxu0 %v689
  %808 = vmatpush1.msra.mxu0 %v688
  %809 = vmatprep.subr.mxu0 %v695
  %810 = vmatpush1.msra.mxu0 %v694
  %811 = vmatprep.subr.mxu0 %v701
  %812 = vmatpush1.msra.mxu0 %v700
  %813 = vmatprep.mubr.f32.mxu0 %v746
  %814 = vmatmul.mubr.f32.gmra.mrb[0].mxu0 %v745
  %v815 = vpop.f32.mrb[0].mxu0
  %v816 = vadd.f32 %v711, %v815
  %v817 = vpop.f32.mrb[0].mxu0
  %v818 = vadd.f32 %v715, %v817
  %819 = vdwg.mxu0
  %820 = vmatprep.subr.mxu0 %v517
  %821 = vmatpush1.msra.mxu0 %v516
  %822 = vmatprep.subr.mxu0 %v523
  %823 = vmatpush1.msra.mxu0 %v522
  %824 = vmatprep.subr.mxu0 %v529
  %825 = vmatpush1.msra.mxu0 %v528
  %826 = vmatprep.subr.mxu0 %v535
  %827 = vmatpush1.msra.mxu0 %v534
  %828 = vmatprep.subr.mxu0 %v541
  %829 = vmatpush1.msra.mxu0 %v540
  %830 = vmatprep.subr.mxu0 %v547
  %831 = vmatpush1.msra.mxu0 %v546
  %832 = vmatprep.subr.mxu0 %v553
  %833 = vmatpush1.msra.mxu0 %v552
  %834 = vmatprep.subr.mxu0 %v559
  %835 = vmatpush1.msra.mxu0 %v558
  %836 = vmatprep.subr.mxu0 %v565
  %837 = vmatpush1.msra.mxu0 %v564
  %838 = vmatprep.subr.mxu0 %v571
  %839 = vmatpush1.msra.mxu0 %v570
  %840 = vmatprep.subr.mxu0 %v577
  %841 = vmatpush1.msra.mxu0 %v576
  %842 = vmatprep.subr.mxu0 %v583
  %843 = vmatpush1.msra.mxu0 %v582
  %844 = vmatprep.subr.mxu0 %v589
  %845 = vmatpush1.msra.mxu0 %v588
  %846 = vmatprep.subr.mxu0 %v595
  %847 = vmatpush1.msra.mxu0 %v594
  %848 = vmatprep.subr.mxu0 %v601
  %849 = vmatpush1.msra.mxu0 %v600
  %850 = vmatprep.subr.mxu0 %v607
  %851 = vmatpush1.msra.mxu0 %v606
  %852 = vmatprep.subr.mxu0 %v613
  %853 = vmatpush1.msra.mxu0 %v612
  %854 = vmatprep.subr.mxu0 %v619
  %855 = vmatpush1.msra.mxu0 %v618
  %856 = vmatprep.subr.mxu0 %v625
  %857 = vmatpush1.msra.mxu0 %v624
  %858 = vmatprep.subr.mxu0 %v631
  %859 = vmatpush1.msra.mxu0 %v630
  %860 = vmatprep.subr.mxu0 %v637
  %861 = vmatpush1.msra.mxu0 %v636
  %862 = vmatprep.subr.mxu0 %v643
  %863 = vmatpush1.msra.mxu0 %v642
  %864 = vmatprep.subr.mxu0 %v649
  %865 = vmatpush1.msra.mxu0 %v648
  %866 = vmatprep.subr.mxu0 %v655
  %867 = vmatpush1.msra.mxu0 %v654
  %868 = vmatprep.subr.mxu0 %v661
  %869 = vmatpush1.msra.mxu0 %v660
  %870 = vmatprep.subr.mxu0 %v667
  %871 = vmatpush1.msra.mxu0 %v666
  %872 = vmatprep.subr.mxu0 %v673
  %873 = vmatpush1.msra.mxu0 %v672
  %874 = vmatprep.subr.mxu0 %v679
  %875 = vmatpush1.msra.mxu0 %v678
  %876 = vmatprep.subr.mxu0 %v685
  %877 = vmatpush1.msra.mxu0 %v684
  %878 = vmatprep.subr.mxu0 %v691
  %879 = vmatpush1.msra.mxu0 %v690
  %880 = vmatprep.subr.mxu0 %v697
  %881 = vmatpush1.msra.mxu0 %v696
  %882 = vmatprep.subr.mxu0 %v703
  %883 = vmatpush1.msra.mxu0 %v702
  %884 = vmatprep.mubr.f32.mxu0 %v746
  %885 = vmatmul.mubr.f32.gmra.mrb[0].mxu0 %v745
  %v886 = vpop.f32.mrb[0].mxu0
  %v887 = vadd.f32 %v719, %v886
  %v888 = vpop.f32.mrb[0].mxu0
  %v889 = vadd.f32 %v723, %v888
  %890 = vdwg.mxu0
  %891 = vmatprep.subr.mxu0 %v519
  %892 = vmatpush1.msra.mxu0 %v518
  %893 = vmatprep.subr.mxu0 %v525
  %894 = vmatpush1.msra.mxu0 %v524
  %895 = vmatprep.subr.mxu0 %v531
  %896 = vmatpush1.msra.mxu0 %v530
  %897 = vmatprep.subr.mxu0 %v537
  %898 = vmatpush1.msra.mxu0 %v536
  %899 = vmatprep.subr.mxu0 %v543
  %900 = vmatpush1.msra.mxu0 %v542
  %901 = vmatprep.subr.mxu0 %v549
  %902 = vmatpush1.msra.mxu0 %v548
  %903 = vmatprep.subr.mxu0 %v555
  %904 = vmatpush1.msra.mxu0 %v554
  %905 = vmatprep.subr.mxu0 %v561
  %906 = vmatpush1.msra.mxu0 %v560
  %907 = vmatprep.subr.mxu0 %v567
  %908 = vmatpush1.msra.mxu0 %v566
  %909 = vmatprep.subr.mxu0 %v573
  %910 = vmatpush1.msra.mxu0 %v572
  %911 = vmatprep.subr.mxu0 %v579
  %912 = vmatpush1.msra.mxu0 %v578
  %913 = vmatprep.subr.mxu0 %v585
  %914 = vmatpush1.msra.mxu0 %v584
  %915 = vmatprep.subr.mxu0 %v591
  %916 = vmatpush1.msra.mxu0 %v590
  %917 = vmatprep.subr.mxu0 %v597
  %918 = vmatpush1.msra.mxu0 %v596
  %919 = vmatprep.subr.mxu0 %v603
  %920 = vmatpush1.msra.mxu0 %v602
  %921 = vmatprep.subr.mxu0 %v609
  %922 = vmatpush1.msra.mxu0 %v608
  %923 = vmatprep.subr.mxu0 %v615
  %924 = vmatpush1.msra.mxu0 %v614
  %925 = vmatprep.subr.mxu0 %v621
  %926 = vmatpush1.msra.mxu0 %v620
  %927 = vmatprep.subr.mxu0 %v627
  %928 = vmatpush1.msra.mxu0 %v626
  %929 = vmatprep.subr.mxu0 %v633
  %930 = vmatpush1.msra.mxu0 %v632
  %931 = vmatprep.subr.mxu0 %v639
  %932 = vmatpush1.msra.mxu0 %v638
  %933 = vmatprep.subr.mxu0 %v645
  %934 = vmatpush1.msra.mxu0 %v644
  %935 = vmatprep.subr.mxu0 %v651
  %936 = vmatpush1.msra.mxu0 %v650
  %937 = vmatprep.subr.mxu0 %v657
  %938 = vmatpush1.msra.mxu0 %v656
  %939 = vmatprep.subr.mxu0 %v663
  %940 = vmatpush1.msra.mxu0 %v662
  %941 = vmatprep.subr.mxu0 %v669
  %942 = vmatpush1.msra.mxu0 %v668
  %943 = vmatprep.subr.mxu0 %v675
  %944 = vmatpush1.msra.mxu0 %v674
  %945 = vmatprep.subr.mxu0 %v681
  %946 = vmatpush1.msra.mxu0 %v680
  %947 = vmatprep.subr.mxu0 %v687
  %948 = vmatpush1.msra.mxu0 %v686
  %949 = vmatprep.subr.mxu0 %v693
  %950 = vmatpush1.msra.mxu0 %v692
  %951 = vmatprep.subr.mxu0 %v699
  %952 = vmatpush1.msra.mxu0 %v698
  %953 = vmatprep.subr.mxu0 %v705
  %954 = vmatpush1.msra.mxu0 %v704
  %955 = vmatprep.mubr.f32.mxu0 %v746
  %956 = vmatmul.mubr.f32.gmra.mrb[0].mxu0 %v745
  %v957 = vpop.f32.mrb[0].mxu0
  %v958 = vadd.f32 %v727, %v957
  %v959 = vpop.f32.mrb[0].mxu0
  %v960 = vadd.f32 %v731, %v959
  %961 = vdwg.mxu0
  %v964 = vcombine.low %v816, %v818
  %v966 = vunpack.c.l.s4 1983009808
  %v967 = vunpack.c.0.s8 %v966
  %v968 = vlaneseq
  %v969 = vshrl.u32 %v968, 7
  %v970 = vsub.s32 %v967, %v969
  %v971 = vrot.slane %v964, %v970
  %v973 = vadd.f32 %v512, %v971
  %v974 = vxor.u32 %v973, 2147483648
  %v975 = vmul.f32 %v974, 1.442695
  %v976 = vpow.pop %v975
  %v977 = vadd.f32 %v976, 1.0
  %v978 = vrcp.pop %v977
  %v979 = vmul.f32 1.0, %v978
  %v981 = vrot.slane %v512, 4
  %v985 = vcombine.low %v887, %v889
  %v987 = vunpack.c.l.s4 1983009808
  %v988 = vunpack.c.0.s8 %v987
  %v989 = vlaneseq
  %v990 = vshrl.u32 %v989, 7
  %v991 = vsub.s32 %v988, %v990
  %v992 = vrot.slane %v985, %v991
  %v994 = vadd.f32 %v981, %v992
  %v995 = vxor.u32 %v994, 2147483648
  %v996 = vmul.f32 %v995, 1.442695
  %v997 = vpow.pop %v996
  %v998 = vadd.f32 %v997, 1.0
  %v999 = vrcp.pop %v998
  %v1000 = vmul.f32 1.0, %v999
  %v1003 = vcombine.low %v958, %v960
  %v1005 = vunpack.c.l.s4 1983009808
  %v1006 = vunpack.c.0.s8 %v1005
  %v1007 = vlaneseq
  %v1008 = vshrl.u32 %v1007, 7
  %v1009 = vsub.s32 %v1006, %v1008
  %v1010 = vrot.slane %v1003, %v1009
  %v1012 = vmul.f32 %v979, %v1010
  %v1013 = vadd.f32 %v513, %v1012
  %v1014 = vtanh.pop %v1013
  %v1015 = vsub.f32 1.0, %v1000
  %v1016 = vmul.f32 %v1015, %v1014
  %v1017 = vmul.f32 %v1000, %v509
  %v1018 = vadd.f32 %v1016, %v1017
  %s1019 = scalar_lea.vmem %s3, 4
  %1020 = vst [vmem:[%s1019] sm:$0xf] %v1018
  %s1021 = scalar_lea.vmem %s0, 24
  %v1022 = vld [vmem:[%s1021] sm:$0xff]
  %v1023 = vld [vmem:[%s1021 + $0x8] sm:$0xf]
  %v1024 = vld [vmem:[%s1] sm:$0xff]
  %v1025 = vld [vmem:[%s1 + $0x8] sm:$0xff]
  %v1026 = vld [vmem:[%s1 + $0x10] sm:$0xff]
  %v1027 = vld [vmem:[%s1 + $0x18] sm:$0xff]
  %v1028 = vld [vmem:[%s1 + $0x20] sm:$0xff]
  %v1029 = vld [vmem:[%s1 + $0x28] sm:$0xff]
  %v1030 = vld [vmem:[%s1 + $0x30] sm:$0xff]
  %v1031 = vld [vmem:[%s1 + $0x38] sm:$0xff]
  %v1032 = vld [vmem:[%s1 + $0x40] sm:$0xff]
  %v1033 = vld [vmem:[%s1 + $0x48] sm:$0xff]
  %v1034 = vld [vmem:[%s1 + $0x50] sm:$0xff]
  %v1035 = vld [vmem:[%s1 + $0x58] sm:$0xff]
  %v1036 = vld [vmem:[%s1 + $0x60] sm:$0xff]
  %v1037 = vld [vmem:[%s1 + $0x68] sm:$0xff]
  %v1038 = vld [vmem:[%s1 + $0x70] sm:$0xff]
  %v1039 = vld [vmem:[%s1 + $0x78] sm:$0xff]
  %v1040 = vld [vmem:[%s1 + $0x80] sm:$0xff]
  %v1041 = vld [vmem:[%s1 + $0x88] sm:$0xff]
  %v1042 = vld [vmem:[%s1 + $0x90] sm:$0xff]
  %v1043 = vld [vmem:[%s1 + $0x98] sm:$0xff]
  %v1044 = vld [vmem:[%s1 + $0xa0] sm:$0xff]
  %v1045 = vld [vmem:[%s1 + $0xa8] sm:$0xff]
  %v1046 = vld [vmem:[%s1 + $0xb0] sm:$0xff]
  %v1047 = vld [vmem:[%s1 + $0xb8] sm:$0xff]
  %v1048 = vld [vmem:[%s1 + $0xc0] sm:$0xff]
  %v1049 = vld [vmem:[%s1 + $0xc8] sm:$0xff]
  %v1050 = vld [vmem:[%s1 + $0xd0] sm:$0xff]
  %v1051 = vld [vmem:[%s1 + $0xd8] sm:$0xff]
  %v1052 = vld [vmem:[%s1 + $0xe0] sm:$0xff]
  %v1053 = vld [vmem:[%s1 + $0xe8] sm:$0xff]
  %v1054 = vld [vmem:[%s1 + $0xf0] sm:$0xff]
  %v1055 = vld [vmem:[%s1 + $0xf8] sm:$0xff]
  %v1056 = vld [vmem:[%s1 + $0x100] sm:$0xff]
  %v1057 = vld [vmem:[%s1 + $0x108] sm:$0xff]
  %v1058 = vld [vmem:[%s1 + $0x110] sm:$0xff]
  %v1059 = vld [vmem:[%s1 + $0x118] sm:$0xff]
  %v1060 = vld [vmem:[%s1 + $0x120] sm:$0xff]
  %v1061 = vld [vmem:[%s1 + $0x128] sm:$0xff]
  %v1062 = vld [vmem:[%s1 + $0x130] sm:$0xff]
  %v1063 = vld [vmem:[%s1 + $0x138] sm:$0xff]
  %v1064 = vld [vmem:[%s1 + $0x140] sm:$0xff]
  %v1065 = vld [vmem:[%s1 + $0x148] sm:$0xff]
  %v1066 = vld [vmem:[%s1 + $0x150] sm:$0xff]
  %v1067 = vld [vmem:[%s1 + $0x158] sm:$0xff]
  %v1068 = vld [vmem:[%s1 + $0x160] sm:$0xff]
  %v1069 = vld [vmem:[%s1 + $0x168] sm:$0xff]
  %v1070 = vld [vmem:[%s1 + $0x170] sm:$0xff]
  %v1071 = vld [vmem:[%s1 + $0x178] sm:$0xff]
  %v1072 = vld [vmem:[%s1 + $0x180] sm:$0xff]
  %v1073 = vld [vmem:[%s1 + $0x188] sm:$0xff]
  %v1074 = vld [vmem:[%s1 + $0x190] sm:$0xff]
  %v1075 = vld [vmem:[%s1 + $0x198] sm:$0xff]
  %v1076 = vld [vmem:[%s1 + $0x1a0] sm:$0xff]
  %v1077 = vld [vmem:[%s1 + $0x1a8] sm:$0xff]
  %v1078 = vld [vmem:[%s1 + $0x1b0] sm:$0xff]
  %v1079 = vld [vmem:[%s1 + $0x1b8] sm:$0xff]
  %v1080 = vld [vmem:[%s1 + $0x1c0] sm:$0xff]
  %v1081 = vld [vmem:[%s1 + $0x1c8] sm:$0xff]
  %v1082 = vld [vmem:[%s1 + $0x1d0] sm:$0xff]
  %v1083 = vld [vmem:[%s1 + $0x1d8] sm:$0xff]
  %v1084 = vld [vmem:[%s1 + $0x1e0] sm:$0xff]
  %v1085 = vld [vmem:[%s1 + $0x1e8] sm:$0xff]
  %v1086 = vld [vmem:[%s1 + $0x1f0] sm:$0xff]
  %v1087 = vld [vmem:[%s1 + $0x1f8] sm:$0xff]
  %v1088 = vld [vmem:[%s1 + $0x200] sm:$0xff]
  %v1089 = vld [vmem:[%s1 + $0x208] sm:$0xff]
  %v1090 = vld [vmem:[%s1 + $0x210] sm:$0xff]
  %v1091 = vld [vmem:[%s1 + $0x218] sm:$0xff]
  %v1092 = vld [vmem:[%s1 + $0x220] sm:$0xff]
  %v1093 = vld [vmem:[%s1 + $0x228] sm:$0xff]
  %v1094 = vld [vmem:[%s1 + $0x230] sm:$0xff]
  %v1095 = vld [vmem:[%s1 + $0x238] sm:$0xff]
  %v1096 = vld [vmem:[%s1 + $0x240] sm:$0xff]
  %v1097 = vld [vmem:[%s1 + $0x248] sm:$0xff]
  %v1098 = vld [vmem:[%s1 + $0x250] sm:$0xff]
  %v1099 = vld [vmem:[%s1 + $0x258] sm:$0xff]
  %v1100 = vld [vmem:[%s1 + $0x260] sm:$0xff]
  %v1101 = vld [vmem:[%s1 + $0x268] sm:$0xff]
  %v1102 = vld [vmem:[%s1 + $0x270] sm:$0xff]
  %v1103 = vld [vmem:[%s1 + $0x278] sm:$0xff]
  %v1104 = vld [vmem:[%s1 + $0x280] sm:$0xff]
  %v1105 = vld [vmem:[%s1 + $0x288] sm:$0xff]
  %v1106 = vld [vmem:[%s1 + $0x290] sm:$0xff]
  %v1107 = vld [vmem:[%s1 + $0x298] sm:$0xff]
  %v1108 = vld [vmem:[%s1 + $0x2a0] sm:$0xff]
  %v1109 = vld [vmem:[%s1 + $0x2a8] sm:$0xff]
  %v1110 = vld [vmem:[%s1 + $0x2b0] sm:$0xff]
  %v1111 = vld [vmem:[%s1 + $0x2b8] sm:$0xff]
  %v1112 = vld [vmem:[%s1 + $0x2c0] sm:$0xff]
  %v1113 = vld [vmem:[%s1 + $0x2c8] sm:$0xff]
  %v1114 = vld [vmem:[%s1 + $0x2d0] sm:$0xff]
  %v1115 = vld [vmem:[%s1 + $0x2d8] sm:$0xff]
  %v1116 = vld [vmem:[%s1 + $0x2e0] sm:$0xff]
  %v1117 = vld [vmem:[%s1 + $0x2e8] sm:$0xff]
  %v1118 = vld [vmem:[%s1 + $0x2f0] sm:$0xff]
  %v1119 = vld [vmem:[%s1 + $0x2f8] sm:$0xff]
  %v1120 = vld [vmem:[%s1 + $0x300] sm:$0xff]
  %v1121 = vld [vmem:[%s1 + $0x308] sm:$0xff]
  %v1122 = vld [vmem:[%s1 + $0x310] sm:$0xff]
  %v1123 = vld [vmem:[%s1 + $0x318] sm:$0xff]
  %v1124 = vld [vmem:[%s1 + $0x320] sm:$0xff]
  %v1125 = vld [vmem:[%s1 + $0x328] sm:$0xff]
  %v1126 = vld [vmem:[%s1 + $0x330] sm:$0xff]
  %v1127 = vld [vmem:[%s1 + $0x338] sm:$0xff]
  %v1128 = vld [vmem:[%s1 + $0x340] sm:$0xff]
  %v1129 = vld [vmem:[%s1 + $0x348] sm:$0xff]
  %v1130 = vld [vmem:[%s1 + $0x350] sm:$0xff]
  %v1131 = vld [vmem:[%s1 + $0x358] sm:$0xff]
  %v1132 = vld [vmem:[%s1 + $0x360] sm:$0xff]
  %v1133 = vld [vmem:[%s1 + $0x368] sm:$0xff]
  %v1134 = vld [vmem:[%s1 + $0x370] sm:$0xff]
  %v1135 = vld [vmem:[%s1 + $0x378] sm:$0xff]
  %v1136 = vld [vmem:[%s1 + $0x380] sm:$0xff]
  %v1137 = vld [vmem:[%s1 + $0x388] sm:$0xff]
  %v1138 = vld [vmem:[%s1 + $0x390] sm:$0xff]
  %v1139 = vld [vmem:[%s1 + $0x398] sm:$0xff]
  %v1140 = vld [vmem:[%s1 + $0x3a0] sm:$0xff]
  %v1141 = vld [vmem:[%s1 + $0x3a8] sm:$0xff]
  %v1142 = vld [vmem:[%s1 + $0x3b0] sm:$0xff]
  %v1143 = vld [vmem:[%s1 + $0x3b8] sm:$0xff]
  %v1144 = vld [vmem:[%s1 + $0x3c0] sm:$0xff]
  %v1145 = vld [vmem:[%s1 + $0x3c8] sm:$0xff]
  %v1146 = vld [vmem:[%s1 + $0x3d0] sm:$0xff]
  %v1147 = vld [vmem:[%s1 + $0x3d8] sm:$0xff]
  %v1148 = vld [vmem:[%s1 + $0x3e0] sm:$0xff]
  %v1149 = vld [vmem:[%s1 + $0x3e8] sm:$0xff]
  %v1150 = vld [vmem:[%s1 + $0x3f0] sm:$0xff]
  %v1151 = vld [vmem:[%s1 + $0x3f8] sm:$0xff]
  %v1152 = vld [vmem:[%s1 + $0x400] sm:$0xff]
  %v1153 = vld [vmem:[%s1 + $0x408] sm:$0xff]
  %v1154 = vld [vmem:[%s1 + $0x410] sm:$0xff]
  %v1155 = vld [vmem:[%s1 + $0x418] sm:$0xff]
  %v1156 = vld [vmem:[%s1 + $0x420] sm:$0xff]
  %v1157 = vld [vmem:[%s1 + $0x428] sm:$0xff]
  %v1158 = vld [vmem:[%s1 + $0x430] sm:$0xff]
  %v1159 = vld [vmem:[%s1 + $0x438] sm:$0xff]
  %v1160 = vld [vmem:[%s1 + $0x440] sm:$0xff]
  %v1161 = vld [vmem:[%s1 + $0x448] sm:$0xff]
  %v1162 = vld [vmem:[%s1 + $0x450] sm:$0xff]
  %v1163 = vld [vmem:[%s1 + $0x458] sm:$0xff]
  %v1164 = vld [vmem:[%s1 + $0x460] sm:$0xff]
  %v1165 = vld [vmem:[%s1 + $0x468] sm:$0xff]
  %v1166 = vld [vmem:[%s1 + $0x470] sm:$0xff]
  %v1167 = vld [vmem:[%s1 + $0x478] sm:$0xff]
  %v1168 = vld [vmem:[%s1 + $0x480] sm:$0xff]
  %v1169 = vld [vmem:[%s1 + $0x488] sm:$0xff]
  %v1170 = vld [vmem:[%s1 + $0x490] sm:$0xff]
  %v1171 = vld [vmem:[%s1 + $0x498] sm:$0xff]
  %v1172 = vld [vmem:[%s1 + $0x4a0] sm:$0xff]
  %v1173 = vld [vmem:[%s1 + $0x4a8] sm:$0xff]
  %v1174 = vld [vmem:[%s1 + $0x4b0] sm:$0xff]
  %v1175 = vld [vmem:[%s1 + $0x4b8] sm:$0xff]
  %v1176 = vld [vmem:[%s1 + $0x4c0] sm:$0xff]
  %v1177 = vld [vmem:[%s1 + $0x4c8] sm:$0xff]
  %v1178 = vld [vmem:[%s1 + $0x4d0] sm:$0xff]
  %v1179 = vld [vmem:[%s1 + $0x4d8] sm:$0xff]
  %v1180 = vld [vmem:[%s1 + $0x4e0] sm:$0xff]
  %v1181 = vld [vmem:[%s1 + $0x4e8] sm:$0xff]
  %v1182 = vld [vmem:[%s1 + $0x4f0] sm:$0xff]
  %v1183 = vld [vmem:[%s1 + $0x4f8] sm:$0xff]
  %v1184 = vld [vmem:[%s1 + $0x500] sm:$0xff]
  %v1185 = vld [vmem:[%s1 + $0x508] sm:$0xff]
  %v1186 = vld [vmem:[%s1 + $0x510] sm:$0xff]
  %v1187 = vld [vmem:[%s1 + $0x518] sm:$0xff]
  %v1188 = vld [vmem:[%s1 + $0x520] sm:$0xff]
  %v1189 = vld [vmem:[%s1 + $0x528] sm:$0xff]
  %v1190 = vld [vmem:[%s1 + $0x530] sm:$0xff]
  %v1191 = vld [vmem:[%s1 + $0x538] sm:$0xff]
  %v1192 = vld [vmem:[%s1 + $0x540] sm:$0xff]
  %v1193 = vld [vmem:[%s1 + $0x548] sm:$0xff]
  %v1194 = vld [vmem:[%s1 + $0x550] sm:$0xff]
  %v1195 = vld [vmem:[%s1 + $0x558] sm:$0xff]
  %v1196 = vld [vmem:[%s1 + $0x560] sm:$0xff]
  %v1197 = vld [vmem:[%s1 + $0x568] sm:$0xff]
  %v1198 = vld [vmem:[%s1 + $0x570] sm:$0xff]
  %v1199 = vld [vmem:[%s1 + $0x578] sm:$0xff]
  %v1200 = vld [vmem:[%s1 + $0x580] sm:$0xff]
  %v1201 = vld [vmem:[%s1 + $0x588] sm:$0xff]
  %v1202 = vld [vmem:[%s1 + $0x590] sm:$0xff]
  %v1203 = vld [vmem:[%s1 + $0x598] sm:$0xff]
  %v1204 = vld [vmem:[%s1 + $0x5a0] sm:$0xff]
  %v1205 = vld [vmem:[%s1 + $0x5a8] sm:$0xff]
  %v1206 = vld [vmem:[%s1 + $0x5b0] sm:$0xff]
  %v1207 = vld [vmem:[%s1 + $0x5b8] sm:$0xff]
  %v1208 = vld [vmem:[%s1 + $0x5c0] sm:$0xff]
  %v1209 = vld [vmem:[%s1 + $0x5c8] sm:$0xff]
  %v1210 = vld [vmem:[%s1 + $0x5d0] sm:$0xff]
  %v1211 = vld [vmem:[%s1 + $0x5d8] sm:$0xff]
  %v1212 = vld [vmem:[%s1 + $0x5e0] sm:$0xff]
  %v1213 = vld [vmem:[%s1 + $0x5e8] sm:$0xff]
  %v1214 = vld [vmem:[%s1 + $0x5f0] sm:$0xff]
  %v1215 = vld [vmem:[%s1 + $0x5f8] sm:$0xff]
  %v1216 = vld [vmem:[%s2] sm:$0x3f]
  %v1218 = vlaneseq
  %v1219 = vshrl.u32 %v1218, 7
  %v1220 = vsub.s32 0, %v1219
  %v1221 = vrot.slane %v1216, %v1220
  %v1222 = vlaneseq
  %v1223 = vshrl.u32 %v1222, 7
  %v1224 = vsub.s32 1, %v1223
  %v1225 = vrot.slane %v1216, %v1224
  %v1226 = vlaneseq
  %v1227 = vshrl.u32 %v1226, 7
  %v1228 = vsub.s32 2, %v1227
  %v1229 = vrot.slane %v1216, %v1228
  %v1230 = vlaneseq
  %v1231 = vshrl.u32 %v1230, 7
  %v1232 = vsub.s32 3, %v1231
  %v1233 = vrot.slane %v1216, %v1232
  %v1234 = vlaneseq
  %v1235 = vshrl.u32 %v1234, 7
  %v1236 = vsub.s32 4, %v1235
  %v1237 = vrot.slane %v1216, %v1236
  %v1238 = vlaneseq
  %v1239 = vshrl.u32 %v1238, 7
  %v1240 = vsub.s32 5, %v1239
  %v1241 = vrot.slane %v1216, %v1240
  %v1250 = vunpack.c.l.s4 1983009808
  %v1251 = vunpack.c.0.s8 %v1250
  %v1252 = vlaneseq
  %v1253 = vshrl.u32 %v1252, 7
  %v1254 = vsub.s32 %v1251, %v1253
  %v1255 = vrot.slane %v1018, %v1254
  %v1256 = vcombine.high %v1255, %v1255
  %1259 = vmatprep.subr.mxu0 %v1025
  %1260 = vmatpush1.msra.mxu0 %v1024
  %1261 = vmatprep.subr.mxu0 %v1031
  %1262 = vmatpush1.msra.mxu0 %v1030
  %1263 = vmatprep.subr.mxu0 %v1037
  %1264 = vmatpush1.msra.mxu0 %v1036
  %1265 = vmatprep.subr.mxu0 %v1043
  %1266 = vmatpush1.msra.mxu0 %v1042
  %1267 = vmatprep.subr.mxu0 %v1049
  %1268 = vmatpush1.msra.mxu0 %v1048
  %1269 = vmatprep.subr.mxu0 %v1055
  %1270 = vmatpush1.msra.mxu0 %v1054
  %1271 = vmatprep.subr.mxu0 %v1061
  %1272 = vmatpush1.msra.mxu0 %v1060
  %1273 = vmatprep.subr.mxu0 %v1067
  %1274 = vmatpush1.msra.mxu0 %v1066
  %1275 = vmatprep.subr.mxu0 %v1073
  %1276 = vmatpush1.msra.mxu0 %v1072
  %1277 = vmatprep.subr.mxu0 %v1079
  %1278 = vmatpush1.msra.mxu0 %v1078
  %1279 = vmatprep.subr.mxu0 %v1085
  %1280 = vmatpush1.msra.mxu0 %v1084
  %1281 = vmatprep.subr.mxu0 %v1091
  %1282 = vmatpush1.msra.mxu0 %v1090
  %1283 = vmatprep.subr.mxu0 %v1097
  %1284 = vmatpush1.msra.mxu0 %v1096
  %1285 = vmatprep.subr.mxu0 %v1103
  %1286 = vmatpush1.msra.mxu0 %v1102
  %1287 = vmatprep.subr.mxu0 %v1109
  %1288 = vmatpush1.msra.mxu0 %v1108
  %1289 = vmatprep.subr.mxu0 %v1115
  %1290 = vmatpush1.msra.mxu0 %v1114
  %1291 = vmatprep.subr.mxu0 %v1121
  %1292 = vmatpush1.msra.mxu0 %v1120
  %1293 = vmatprep.subr.mxu0 %v1127
  %1294 = vmatpush1.msra.mxu0 %v1126
  %1295 = vmatprep.subr.mxu0 %v1133
  %1296 = vmatpush1.msra.mxu0 %v1132
  %1297 = vmatprep.subr.mxu0 %v1139
  %1298 = vmatpush1.msra.mxu0 %v1138
  %1299 = vmatprep.subr.mxu0 %v1145
  %1300 = vmatpush1.msra.mxu0 %v1144
  %1301 = vmatprep.subr.mxu0 %v1151
  %1302 = vmatpush1.msra.mxu0 %v1150
  %1303 = vmatprep.subr.mxu0 %v1157
  %1304 = vmatpush1.msra.mxu0 %v1156
  %1305 = vmatprep.subr.mxu0 %v1163
  %1306 = vmatpush1.msra.mxu0 %v1162
  %1307 = vmatprep.subr.mxu0 %v1169
  %1308 = vmatpush1.msra.mxu0 %v1168
  %1309 = vmatprep.subr.mxu0 %v1175
  %1310 = vmatpush1.msra.mxu0 %v1174
  %1311 = vmatprep.subr.mxu0 %v1181
  %1312 = vmatpush1.msra.mxu0 %v1180
  %1313 = vmatprep.subr.mxu0 %v1187
  %1314 = vmatpush1.msra.mxu0 %v1186
  %1315 = vmatprep.subr.mxu0 %v1193
  %1316 = vmatpush1.msra.mxu0 %v1192
  %1317 = vmatprep.subr.mxu0 %v1199
  %1318 = vmatpush1.msra.mxu0 %v1198
  %1319 = vmatprep.subr.mxu0 %v1205
  %1320 = vmatpush1.msra.mxu0 %v1204
  %1321 = vmatprep.subr.mxu0 %v1211
  %1322 = vmatpush1.msra.mxu0 %v1210
  %1323 = vmatprep.mubr.f32.mxu0 %v1256
  %1324 = vmatmul.mubr.f32.gmra.mrb[0].mxu0 %v1255
  %v1325 = vpop.f32.mrb[0].mxu0
  %v1326 = vadd.f32 %v1221, %v1325
  %v1327 = vpop.f32.mrb[0].mxu0
  %v1328 = vadd.f32 %v1225, %v1327
  %1329 = vdwg.mxu0
  %1330 = vmatprep.subr.mxu0 %v1027
  %1331 = vmatpush1.msra.mxu0 %v1026
  %1332 = vmatprep.subr.mxu0 %v1033
  %1333 = vmatpush1.msra.mxu0 %v1032
  %1334 = vmatprep.subr.mxu0 %v1039
  %1335 = vmatpush1.msra.mxu0 %v1038
  %1336 = vmatprep.subr.mxu0 %v1045
  %1337 = vmatpush1.msra.mxu0 %v1044
  %1338 = vmatprep.subr.mxu0 %v1051
  %1339 = vmatpush1.msra.mxu0 %v1050
  %1340 = vmatprep.subr.mxu0 %v1057
  %1341 = vmatpush1.msra.mxu0 %v1056
  %1342 = vmatprep.subr.mxu0 %v1063
  %1343 = vmatpush1.msra.mxu0 %v1062
  %1344 = vmatprep.subr.mxu0 %v1069
  %1345 = vmatpush1.msra.mxu0 %v1068
  %1346 = vmatprep.subr.mxu0 %v1075
  %1347 = vmatpush1.msra.mxu0 %v1074
  %1348 = vmatprep.subr.mxu0 %v1081
  %1349 = vmatpush1.msra.mxu0 %v1080
  %1350 = vmatprep.subr.mxu0 %v1087
  %1351 = vmatpush1.msra.mxu0 %v1086
  %1352 = vmatprep.subr.mxu0 %v1093
  %1353 = vmatpush1.msra.mxu0 %v1092
  %1354 = vmatprep.subr.mxu0 %v1099
  %1355 = vmatpush1.msra.mxu0 %v1098
  %1356 = vmatprep.subr.mxu0 %v1105
  %1357 = vmatpush1.msra.mxu0 %v1104
  %1358 = vmatprep.subr.mxu0 %v1111
  %1359 = vmatpush1.msra.mxu0 %v1110
  %1360 = vmatprep.subr.mxu0 %v1117
  %1361 = vmatpush1.msra.mxu0 %v1116
  %1362 = vmatprep.subr.mxu0 %v1123
  %1363 = vmatpush1.msra.mxu0 %v1122
  %1364 = vmatprep.subr.mxu0 %v1129
  %1365 = vmatpush1.msra.mxu0 %v1128
  %1366 = vmatprep.subr.mxu0 %v1135
  %1367 = vmatpush1.msra.mxu0 %v1134
  %1368 = vmatprep.subr.mxu0 %v1141
  %1369 = vmatpush1.msra.mxu0 %v1140
  %1370 = vmatprep.subr.mxu0 %v1147
  %1371 = vmatpush1.msra.mxu0 %v1146
  %1372 = vmatprep.subr.mxu0 %v1153
  %1373 = vmatpush1.msra.mxu0 %v1152
  %1374 = vmatprep.subr.mxu0 %v1159
  %1375 = vmatpush1.msra.mxu0 %v1158
  %1376 = vmatprep.subr.mxu0 %v1165
  %1377 = vmatpush1.msra.mxu0 %v1164
  %1378 = vmatprep.subr.mxu0 %v1171
  %1379 = vmatpush1.msra.mxu0 %v1170
  %1380 = vmatprep.subr.mxu0 %v1177
  %1381 = vmatpush1.msra.mxu0 %v1176
  %1382 = vmatprep.subr.mxu0 %v1183
  %1383 = vmatpush1.msra.mxu0 %v1182
  %1384 = vmatprep.subr.mxu0 %v1189
  %1385 = vmatpush1.msra.mxu0 %v1188
  %1386 = vmatprep.subr.mxu0 %v1195
  %1387 = vmatpush1.msra.mxu0 %v1194
  %1388 = vmatprep.subr.mxu0 %v1201
  %1389 = vmatpush1.msra.mxu0 %v1200
  %1390 = vmatprep.subr.mxu0 %v1207
  %1391 = vmatpush1.msra.mxu0 %v1206
  %1392 = vmatprep.subr.mxu0 %v1213
  %1393 = vmatpush1.msra.mxu0 %v1212
  %1394 = vmatprep.mubr.f32.mxu0 %v1256
  %1395 = vmatmul.mubr.f32.gmra.mrb[0].mxu0 %v1255
  %v1396 = vpop.f32.mrb[0].mxu0
  %v1397 = vadd.f32 %v1229, %v1396
  %v1398 = vpop.f32.mrb[0].mxu0
  %v1399 = vadd.f32 %v1233, %v1398
  %1400 = vdwg.mxu0
  %1401 = vmatprep.subr.mxu0 %v1029
  %1402 = vmatpush1.msra.mxu0 %v1028
  %1403 = vmatprep.subr.mxu0 %v1035
  %1404 = vmatpush1.msra.mxu0 %v1034
  %1405 = vmatprep.subr.mxu0 %v1041
  %1406 = vmatpush1.msra.mxu0 %v1040
  %1407 = vmatprep.subr.mxu0 %v1047
  %1408 = vmatpush1.msra.mxu0 %v1046
  %1409 = vmatprep.subr.mxu0 %v1053
  %1410 = vmatpush1.msra.mxu0 %v1052
  %1411 = vmatprep.subr.mxu0 %v1059
  %1412 = vmatpush1.msra.mxu0 %v1058
  %1413 = vmatprep.subr.mxu0 %v1065
  %1414 = vmatpush1.msra.mxu0 %v1064
  %1415 = vmatprep.subr.mxu0 %v1071
  %1416 = vmatpush1.msra.mxu0 %v1070
  %1417 = vmatprep.subr.mxu0 %v1077
  %1418 = vmatpush1.msra.mxu0 %v1076
  %1419 = vmatprep.subr.mxu0 %v1083
  %1420 = vmatpush1.msra.mxu0 %v1082
  %1421 = vmatprep.subr.mxu0 %v1089
  %1422 = vmatpush1.msra.mxu0 %v1088
  %1423 = vmatprep.subr.mxu0 %v1095
  %1424 = vmatpush1.msra.mxu0 %v1094
  %1425 = vmatprep.subr.mxu0 %v1101
  %1426 = vmatpush1.msra.mxu0 %v1100
  %1427 = vmatprep.subr.mxu0 %v1107
  %1428 = vmatpush1.msra.mxu0 %v1106
  %1429 = vmatprep.subr.mxu0 %v1113
  %1430 = vmatpush1.msra.mxu0 %v1112
  %1431 = vmatprep.subr.mxu0 %v1119
  %1432 = vmatpush1.msra.mxu0 %v1118
  %1433 = vmatprep.subr.mxu0 %v1125
  %1434 = vmatpush1.msra.mxu0 %v1124
  %1435 = vmatprep.subr.mxu0 %v1131
  %1436 = vmatpush1.msra.mxu0 %v1130
  %1437 = vmatprep.subr.mxu0 %v1137
  %1438 = vmatpush1.msra.mxu0 %v1136
  %1439 = vmatprep.subr.mxu0 %v1143
  %1440 = vmatpush1.msra.mxu0 %v1142
  %1441 = vmatprep.subr.mxu0 %v1149
  %1442 = vmatpush1.msra.mxu0 %v1148
  %1443 = vmatprep.subr.mxu0 %v1155
  %1444 = vmatpush1.msra.mxu0 %v1154
  %1445 = vmatprep.subr.mxu0 %v1161
  %1446 = vmatpush1.msra.mxu0 %v1160
  %1447 = vmatprep.subr.mxu0 %v1167
  %1448 = vmatpush1.msra.mxu0 %v1166
  %1449 = vmatprep.subr.mxu0 %v1173
  %1450 = vmatpush1.msra.mxu0 %v1172
  %1451 = vmatprep.subr.mxu0 %v1179
  %1452 = vmatpush1.msra.mxu0 %v1178
  %1453 = vmatprep.subr.mxu0 %v1185
  %1454 = vmatpush1.msra.mxu0 %v1184
  %1455 = vmatprep.subr.mxu0 %v1191
  %1456 = vmatpush1.msra.mxu0 %v1190
  %1457 = vmatprep.subr.mxu0 %v1197
  %1458 = vmatpush1.msra.mxu0 %v1196
  %1459 = vmatprep.subr.mxu0 %v1203
  %1460 = vmatpush1.msra.mxu0 %v1202
  %1461 = vmatprep.subr.mxu0 %v1209
  %1462 = vmatpush1.msra.mxu0 %v1208
  %1463 = vmatprep.subr.mxu0 %v1215
  %1464 = vmatpush1.msra.mxu0 %v1214
  %1465 = vmatprep.mubr.f32.mxu0 %v1256
  %1466 = vmatmul.mubr.f32.gmra.mrb[0].mxu0 %v1255
  %v1467 = vpop.f32.mrb[0].mxu0
  %v1468 = vadd.f32 %v1237, %v1467
  %v1469 = vpop.f32.mrb[0].mxu0
  %v1470 = vadd.f32 %v1241, %v1469
  %1471 = vdwg.mxu0
  %v1474 = vcombine.low %v1326, %v1328
  %v1476 = vunpack.c.l.s4 1983009808
  %v1477 = vunpack.c.0.s8 %v1476
  %v1478 = vlaneseq
  %v1479 = vshrl.u32 %v1478, 7
  %v1480 = vsub.s32 %v1477, %v1479
  %v1481 = vrot.slane %v1474, %v1480
  %v1483 = vadd.f32 %v1022, %v1481
  %v1484 = vxor.u32 %v1483, 2147483648
  %v1485 = vmul.f32 %v1484, 1.442695
  %v1486 = vpow.pop %v1485
  %v1487 = vadd.f32 %v1486, 1.0
  %v1488 = vrcp.pop %v1487
  %v1489 = vmul.f32 1.0, %v1488
  %v1491 = vrot.slane %v1022, 4
  %v1495 = vcombine.low %v1397, %v1399
  %v1497 = vunpack.c.l.s4 1983009808
  %v1498 = vunpack.c.0.s8 %v1497
  %v1499 = vlaneseq
  %v1500 = vshrl.u32 %v1499, 7
  %v1501 = vsub.s32 %v1498, %v1500
  %v1502 = vrot.slane %v1495, %v1501
  %v1504 = vadd.f32 %v1491, %v1502
  %v1505 = vxor.u32 %v1504, 2147483648
  %v1506 = vmul.f32 %v1505, 1.442695
  %v1507 = vpow.pop %v1506
  %v1508 = vadd.f32 %v1507, 1.0
  %v1509 = vrcp.pop %v1508
  %v1510 = vmul.f32 1.0, %v1509
  %v1513 = vcombine.low %v1468, %v1470
  %v1515 = vunpack.c.l.s4 1983009808
  %v1516 = vunpack.c.0.s8 %v1515
  %v1517 = vlaneseq
  %v1518 = vshrl.u32 %v1517, 7
  %v1519 = vsub.s32 %v1516, %v1518
  %v1520 = vrot.slane %v1513, %v1519
  %v1522 = vmul.f32 %v1489, %v1520
  %v1523 = vadd.f32 %v1023, %v1522
  %v1524 = vtanh.pop %v1523
  %v1525 = vsub.f32 1.0, %v1510
  %v1526 = vmul.f32 %v1525, %v1524
  %v1527 = vmul.f32 %v1510, %v1018
  %v1528 = vadd.f32 %v1526, %v1527
  %s1529 = scalar_lea.vmem %s3, 8
  %1530 = vst [vmem:[%s1529] sm:$0xf] %v1528
  %s1531 = scalar_lea.vmem %s0, 36
  %v1532 = vld [vmem:[%s1531] sm:$0xff]
  %v1533 = vld [vmem:[%s1531 + $0x8] sm:$0xf]
  %v1534 = vld [vmem:[%s1] sm:$0xff]
  %v1535 = vld [vmem:[%s1 + $0x8] sm:$0xff]
  %v1536 = vld [vmem:[%s1 + $0x10] sm:$0xff]
  %v1537 = vld [vmem:[%s1 + $0x18] sm:$0xff]
  %v1538 = vld [vmem:[%s1 + $0x20] sm:$0xff]
  %v1539 = vld [vmem:[%s1 + $0x28] sm:$0xff]
  %v1540 = vld [vmem:[%s1 + $0x30] sm:$0xff]
  %v1541 = vld [vmem:[%s1 + $0x38] sm:$0xff]
  %v1542 = vld [vmem:[%s1 + $0x40] sm:$0xff]
  %v1543 = vld [vmem:[%s1 + $0x48] sm:$0xff]
  %v1544 = vld [vmem:[%s1 + $0x50] sm:$0xff]
  %v1545 = vld [vmem:[%s1 + $0x58] sm:$0xff]
  %v1546 = vld [vmem:[%s1 + $0x60] sm:$0xff]
  %v1547 = vld [vmem:[%s1 + $0x68] sm:$0xff]
  %v1548 = vld [vmem:[%s1 + $0x70] sm:$0xff]
  %v1549 = vld [vmem:[%s1 + $0x78] sm:$0xff]
  %v1550 = vld [vmem:[%s1 + $0x80] sm:$0xff]
  %v1551 = vld [vmem:[%s1 + $0x88] sm:$0xff]
  %v1552 = vld [vmem:[%s1 + $0x90] sm:$0xff]
  %v1553 = vld [vmem:[%s1 + $0x98] sm:$0xff]
  %v1554 = vld [vmem:[%s1 + $0xa0] sm:$0xff]
  %v1555 = vld [vmem:[%s1 + $0xa8] sm:$0xff]
  %v1556 = vld [vmem:[%s1 + $0xb0] sm:$0xff]
  %v1557 = vld [vmem:[%s1 + $0xb8] sm:$0xff]
  %v1558 = vld [vmem:[%s1 + $0xc0] sm:$0xff]
  %v1559 = vld [vmem:[%s1 + $0xc8] sm:$0xff]
  %v1560 = vld [vmem:[%s1 + $0xd0] sm:$0xff]
  %v1561 = vld [vmem:[%s1 + $0xd8] sm:$0xff]
  %v1562 = vld [vmem:[%s1 + $0xe0] sm:$0xff]
  %v1563 = vld [vmem:[%s1 + $0xe8] sm:$0xff]
  %v1564 = vld [vmem:[%s1 + $0xf0] sm:$0xff]
  %v1565 = vld [vmem:[%s1 + $0xf8] sm:$0xff]
  %v1566 = vld [vmem:[%s1 + $0x100] sm:$0xff]
  %v1567 = vld [vmem:[%s1 + $0x108] sm:$0xff]
  %v1568 = vld [vmem:[%s1 + $0x110] sm:$0xff]
  %v1569 = vld [vmem:[%s1 + $0x118] sm:$0xff]
  %v1570 = vld [vmem:[%s1 + $0x120] sm:$0xff]
  %v1571 = vld [vmem:[%s1 + $0x128] sm:$0xff]
  %v1572 = vld [vmem:[%s1 + $0x130] sm:$0xff]
  %v1573 = vld [vmem:[%s1 + $0x138] sm:$0xff]
  %v1574 = vld [vmem:[%s1 + $0x140] sm:$0xff]
  %v1575 = vld [vmem:[%s1 + $0x148] sm:$0xff]
  %v1576 = vld [vmem:[%s1 + $0x150] sm:$0xff]
  %v1577 = vld [vmem:[%s1 + $0x158] sm:$0xff]
  %v1578 = vld [vmem:[%s1 + $0x160] sm:$0xff]
  %v1579 = vld [vmem:[%s1 + $0x168] sm:$0xff]
  %v1580 = vld [vmem:[%s1 + $0x170] sm:$0xff]
  %v1581 = vld [vmem:[%s1 + $0x178] sm:$0xff]
  %v1582 = vld [vmem:[%s1 + $0x180] sm:$0xff]
  %v1583 = vld [vmem:[%s1 + $0x188] sm:$0xff]
  %v1584 = vld [vmem:[%s1 + $0x190] sm:$0xff]
  %v1585 = vld [vmem:[%s1 + $0x198] sm:$0xff]
  %v1586 = vld [vmem:[%s1 + $0x1a0] sm:$0xff]
  %v1587 = vld [vmem:[%s1 + $0x1a8] sm:$0xff]
  %v1588 = vld [vmem:[%s1 + $0x1b0] sm:$0xff]
  %v1589 = vld [vmem:[%s1 + $0x1b8] sm:$0xff]
  %v1590 = vld [vmem:[%s1 + $0x1c0] sm:$0xff]
  %v1591 = vld [vmem:[%s1 + $0x1c8] sm:$0xff]
  %v1592 = vld [vmem:[%s1 + $0x1d0] sm:$0xff]
  %v1593 = vld [vmem:[%s1 + $0x1d8] sm:$0xff]
  %v1594 = vld [vmem:[%s1 + $0x1e0] sm:$0xff]
  %v1595 = vld [vmem:[%s1 + $0x1e8] sm:$0xff]
  %v1596 = vld [vmem:[%s1 + $0x1f0] sm:$0xff]
  %v1597 = vld [vmem:[%s1 + $0x1f8] sm:$0xff]
  %v1598 = vld [vmem:[%s1 + $0x200] sm:$0xff]
  %v1599 = vld [vmem:[%s1 + $0x208] sm:$0xff]
  %v1600 = vld [vmem:[%s1 + $0x210] sm:$0xff]
  %v1601 = vld [vmem:[%s1 + $0x218] sm:$0xff]
  %v1602 = vld [vmem:[%s1 + $0x220] sm:$0xff]
  %v1603 = vld [vmem:[%s1 + $0x228] sm:$0xff]
  %v1604 = vld [vmem:[%s1 + $0x230] sm:$0xff]
  %v1605 = vld [vmem:[%s1 + $0x238] sm:$0xff]
  %v1606 = vld [vmem:[%s1 + $0x240] sm:$0xff]
  %v1607 = vld [vmem:[%s1 + $0x248] sm:$0xff]
  %v1608 = vld [vmem:[%s1 + $0x250] sm:$0xff]
  %v1609 = vld [vmem:[%s1 + $0x258] sm:$0xff]
  %v1610 = vld [vmem:[%s1 + $0x260] sm:$0xff]
  %v1611 = vld [vmem:[%s1 + $0x268] sm:$0xff]
  %v1612 = vld [vmem:[%s1 + $0x270] sm:$0xff]
  %v1613 = vld [vmem:[%s1 + $0x278] sm:$0xff]
  %v1614 = vld [vmem:[%s1 + $0x280] sm:$0xff]
  %v1615 = vld [vmem:[%s1 + $0x288] sm:$0xff]
  %v1616 = vld [vmem:[%s1 + $0x290] sm:$0xff]
  %v1617 = vld [vmem:[%s1 + $0x298] sm:$0xff]
  %v1618 = vld [vmem:[%s1 + $0x2a0] sm:$0xff]
  %v1619 = vld [vmem:[%s1 + $0x2a8] sm:$0xff]
  %v1620 = vld [vmem:[%s1 + $0x2b0] sm:$0xff]
  %v1621 = vld [vmem:[%s1 + $0x2b8] sm:$0xff]
  %v1622 = vld [vmem:[%s1 + $0x2c0] sm:$0xff]
  %v1623 = vld [vmem:[%s1 + $0x2c8] sm:$0xff]
  %v1624 = vld [vmem:[%s1 + $0x2d0] sm:$0xff]
  %v1625 = vld [vmem:[%s1 + $0x2d8] sm:$0xff]
  %v1626 = vld [vmem:[%s1 + $0x2e0] sm:$0xff]
  %v1627 = vld [vmem:[%s1 + $0x2e8] sm:$0xff]
  %v1628 = vld [vmem:[%s1 + $0x2f0] sm:$0xff]
  %v1629 = vld [vmem:[%s1 + $0x2f8] sm:$0xff]
  %v1630 = vld [vmem:[%s1 + $0x300] sm:$0xff]
  %v1631 = vld [vmem:[%s1 + $0x308] sm:$0xff]
  %v1632 = vld [vmem:[%s1 + $0x310] sm:$0xff]
  %v1633 = vld [vmem:[%s1 + $0x318] sm:$0xff]
  %v1634 = vld [vmem:[%s1 + $0x320] sm:$0xff]
  %v1635 = vld [vmem:[%s1 + $0x328] sm:$0xff]
  %v1636 = vld [vmem:[%s1 + $0x330] sm:$0xff]
  %v1637 = vld [vmem:[%s1 + $0x338] sm:$0xff]
  %v1638 = vld [vmem:[%s1 + $0x340] sm:$0xff]
  %v1639 = vld [vmem:[%s1 + $0x348] sm:$0xff]
  %v1640 = vld [vmem:[%s1 + $0x350] sm:$0xff]
  %v1641 = vld [vmem:[%s1 + $0x358] sm:$0xff]
  %v1642 = vld [vmem:[%s1 + $0x360] sm:$0xff]
  %v1643 = vld [vmem:[%s1 + $0x368] sm:$0xff]
  %v1644 = vld [vmem:[%s1 + $0x370] sm:$0xff]
  %v1645 = vld [vmem:[%s1 + $0x378] sm:$0xff]
  %v1646 = vld [vmem:[%s1 + $0x380] sm:$0xff]
  %v1647 = vld [vmem:[%s1 + $0x388] sm:$0xff]
  %v1648 = vld [vmem:[%s1 + $0x390] sm:$0xff]
  %v1649 = vld [vmem:[%s1 + $0x398] sm:$0xff]
  %v1650 = vld [vmem:[%s1 + $0x3a0] sm:$0xff]
  %v1651 = vld [vmem:[%s1 + $0x3a8] sm:$0xff]
  %v1652 = vld [vmem:[%s1 + $0x3b0] sm:$0xff]
  %v1653 = vld [vmem:[%s1 + $0x3b8] sm:$0xff]
  %v1654 = vld [vmem:[%s1 + $0x3c0] sm:$0xff]
  %v1655 = vld [vmem:[%s1 + $0x3c8] sm:$0xff]
  %v1656 = vld [vmem:[%s1 + $0x3d0] sm:$0xff]
  %v1657 = vld [vmem:[%s1 + $0x3d8] sm:$0xff]
  %v1658 = vld [vmem:[%s1 + $0x3e0] sm:$0xff]
  %v1659 = vld [vmem:[%s1 + $0x3e8] sm:$0xff]
  %v1660 = vld [vmem:[%s1 + $0x3f0] sm:$0xff]
  %v1661 = vld [vmem:[%s1 + $0x3f8] sm:$0xff]
  %v1662 = vld [vmem:[%s1 + $0x400] sm:$0xff]
  %v1663 = vld [vmem:[%s1 + $0x408] sm:$0xff]
  %v1664 = vld [vmem:[%s1 + $0x410] sm:$0xff]
  %v1665 = vld [vmem:[%s1 + $0x418] sm:$0xff]
  %v1666 = vld [vmem:[%s1 + $0x420] sm:$0xff]
  %v1667 = vld [vmem:[%s1 + $0x428] sm:$0xff]
  %v1668 = vld [vmem:[%s1 + $0x430] sm:$0xff]
  %v1669 = vld [vmem:[%s1 + $0x438] sm:$0xff]
  %v1670 = vld [vmem:[%s1 + $0x440] sm:$0xff]
  %v1671 = vld [vmem:[%s1 + $0x448] sm:$0xff]
  %v1672 = vld [vmem:[%s1 + $0x450] sm:$0xff]
  %v1673 = vld [vmem:[%s1 + $0x458] sm:$0xff]
  %v1674 = vld [vmem:[%s1 + $0x460] sm:$0xff]
  %v1675 = vld [vmem:[%s1 + $0x468] sm:$0xff]
  %v1676 = vld [vmem:[%s1 + $0x470] sm:$0xff]
  %v1677 = vld [vmem:[%s1 + $0x478] sm:$0xff]
  %v1678 = vld [vmem:[%s1 + $0x480] sm:$0xff]
  %v1679 = vld [vmem:[%s1 + $0x488] sm:$0xff]
  %v1680 = vld [vmem:[%s1 + $0x490] sm:$0xff]
  %v1681 = vld [vmem:[%s1 + $0x498] sm:$0xff]
  %v1682 = vld [vmem:[%s1 + $0x4a0] sm:$0xff]
  %v1683 = vld [vmem:[%s1 + $0x4a8] sm:$0xff]
  %v1684 = vld [vmem:[%s1 + $0x4b0] sm:$0xff]
  %v1685 = vld [vmem:[%s1 + $0x4b8] sm:$0xff]
  %v1686 = vld [vmem:[%s1 + $0x4c0] sm:$0xff]
  %v1687 = vld [vmem:[%s1 + $0x4c8] sm:$0xff]
  %v1688 = vld [vmem:[%s1 + $0x4d0] sm:$0xff]
  %v1689 = vld [vmem:[%s1 + $0x4d8] sm:$0xff]
  %v1690 = vld [vmem:[%s1 + $0x4e0] sm:$0xff]
  %v1691 = vld [vmem:[%s1 + $0x4e8] sm:$0xff]
  %v1692 = vld [vmem:[%s1 + $0x4f0] sm:$0xff]
  %v1693 = vld [vmem:[%s1 + $0x4f8] sm:$0xff]
  %v1694 = vld [vmem:[%s1 + $0x500] sm:$0xff]
  %v1695 = vld [vmem:[%s1 + $0x508] sm:$0xff]
  %v1696 = vld [vmem:[%s1 + $0x510] sm:$0xff]
  %v1697 = vld [vmem:[%s1 + $0x518] sm:$0xff]
  %v1698 = vld [vmem:[%s1 + $0x520] sm:$0xff]
  %v1699 = vld [vmem:[%s1 + $0x528] sm:$0xff]
  %v1700 = vld [vmem:[%s1 + $0x530] sm:$0xff]
  %v1701 = vld [vmem:[%s1 + $0x538] sm:$0xff]
  %v1702 = vld [vmem:[%s1 + $0x540] sm:$0xff]
  %v1703 = vld [vmem:[%s1 + $0x548] sm:$0xff]
  %v1704 = vld [vmem:[%s1 + $0x550] sm:$0xff]
  %v1705 = vld [vmem:[%s1 + $0x558] sm:$0xff]
  %v1706 = vld [vmem:[%s1 + $0x560] sm:$0xff]
  %v1707 = vld [vmem:[%s1 + $0x568] sm:$0xff]
  %v1708 = vld [vmem:[%s1 + $0x570] sm:$0xff]
  %v1709 = vld [vmem:[%s1 + $0x578] sm:$0xff]
  %v1710 = vld [vmem:[%s1 + $0x580] sm:$0xff]
  %v1711 = vld [vmem:[%s1 + $0x588] sm:$0xff]
  %v1712 = vld [vmem:[%s1 + $0x590] sm:$0xff]
  %v1713 = vld [vmem:[%s1 + $0x598] sm:$0xff]
  %v1714 = vld [vmem:[%s1 + $0x5a0] sm:$0xff]
  %v1715 = vld [vmem:[%s1 + $0x5a8] sm:$0xff]
  %v1716 = vld [vmem:[%s1 + $0x5b0] sm:$0xff]
  %v1717 = vld [vmem:[%s1 + $0x5b8] sm:$0xff]
  %v1718 = vld [vmem:[%s1 + $0x5c0] sm:$0xff]
  %v1719 = vld [vmem:[%s1 + $0x5c8] sm:$0xff]
  %v1720 = vld [vmem:[%s1 + $0x5d0] sm:$0xff]
  %v1721 = vld [vmem:[%s1 + $0x5d8] sm:$0xff]
  %v1722 = vld [vmem:[%s1 + $0x5e0] sm:$0xff]
  %v1723 = vld [vmem:[%s1 + $0x5e8] sm:$0xff]
  %v1724 = vld [vmem:[%s1 + $0x5f0] sm:$0xff]
  %v1725 = vld [vmem:[%s1 + $0x5f8] sm:$0xff]
  %v1726 = vld [vmem:[%s2] sm:$0x3f]
  %v1728 = vlaneseq
  %v1729 = vshrl.u32 %v1728, 7
  %v1730 = vsub.s32 0, %v1729
  %v1731 = vrot.slane %v1726, %v1730
  %v1732 = vlaneseq
  %v1733 = vshrl.u32 %v1732, 7
  %v1734 = vsub.s32 1, %v1733
  %v1735 = vrot.slane %v1726, %v1734
  %v1736 = vlaneseq
  %v1737 = vshrl.u32 %v1736, 7
  %v1738 = vsub.s32 2, %v1737
  %v1739 = vrot.slane %v1726, %v1738
  %v1740 = vlaneseq
  %v1741 = vshrl.u32 %v1740, 7
  %v1742 = vsub.s32 3, %v1741
  %v1743 = vrot.slane %v1726, %v1742
  %v1744 = vlaneseq
  %v1745 = vshrl.u32 %v1744, 7
  %v1746 = vsub.s32 4, %v1745
  %v1747 = vrot.slane %v1726, %v1746
  %v1748 = vlaneseq
  %v1749 = vshrl.u32 %v1748, 7
  %v1750 = vsub.s32 5, %v1749
  %v1751 = vrot.slane %v1726, %v1750
  %v1760 = vunpack.c.l.s4 1983009808
  %v1761 = vunpack.c.0.s8 %v1760
  %v1762 = vlaneseq
  %v1763 = vshrl.u32 %v1762, 7
  %v1764 = vsub.s32 %v1761, %v1763
  %v1765 = vrot.slane %v1528, %v1764
  %v1766 = vcombine.high %v1765, %v1765
  %1769 = vmatprep.subr.mxu0 %v1535
  %1770 = vmatpush1.msra.mxu0 %v1534
  %1771 = vmatprep.subr.mxu0 %v1541
  %1772 = vmatpush1.msra.mxu0 %v1540
  %1773 = vmatprep.subr.mxu0 %v1547
  %1774 = vmatpush1.msra.mxu0 %v1546
  %1775 = vmatprep.subr.mxu0 %v1553
  %1776 = vmatpush1.msra.mxu0 %v1552
  %1777 = vmatprep.subr.mxu0 %v1559
  %1778 = vmatpush1.msra.mxu0 %v1558
  %1779 = vmatprep.subr.mxu0 %v1565
  %1780 = vmatpush1.msra.mxu0 %v1564
  %1781 = vmatprep.subr.mxu0 %v1571
  %1782 = vmatpush1.msra.mxu0 %v1570
  %1783 = vmatprep.subr.mxu0 %v1577
  %1784 = vmatpush1.msra.mxu0 %v1576
  %1785 = vmatprep.subr.mxu0 %v1583
  %1786 = vmatpush1.msra.mxu0 %v1582
  %1787 = vmatprep.subr.mxu0 %v1589
  %1788 = vmatpush1.msra.mxu0 %v1588
  %1789 = vmatprep.subr.mxu0 %v1595
  %1790 = vmatpush1.msra.mxu0 %v1594
  %1791 = vmatprep.subr.mxu0 %v1601
  %1792 = vmatpush1.msra.mxu0 %v1600
  %1793 = vmatprep.subr.mxu0 %v1607
  %1794 = vmatpush1.msra.mxu0 %v1606
  %1795 = vmatprep.subr.mxu0 %v1613
  %1796 = vmatpush1.msra.mxu0 %v1612
  %1797 = vmatprep.subr.mxu0 %v1619
  %1798 = vmatpush1.msra.mxu0 %v1618
  %1799 = vmatprep.subr.mxu0 %v1625
  %1800 = vmatpush1.msra.mxu0 %v1624
  %1801 = vmatprep.subr.mxu0 %v1631
  %1802 = vmatpush1.msra.mxu0 %v1630
  %1803 = vmatprep.subr.mxu0 %v1637
  %1804 = vmatpush1.msra.mxu0 %v1636
  %1805 = vmatprep.subr.mxu0 %v1643
  %1806 = vmatpush1.msra.mxu0 %v1642
  %1807 = vmatprep.subr.mxu0 %v1649
  %1808 = vmatpush1.msra.mxu0 %v1648
  %1809 = vmatprep.subr.mxu0 %v1655
  %1810 = vmatpush1.msra.mxu0 %v1654
  %1811 = vmatprep.subr.mxu0 %v1661
  %1812 = vmatpush1.msra.mxu0 %v1660
  %1813 = vmatprep.subr.mxu0 %v1667
  %1814 = vmatpush1.msra.mxu0 %v1666
  %1815 = vmatprep.subr.mxu0 %v1673
  %1816 = vmatpush1.msra.mxu0 %v1672
  %1817 = vmatprep.subr.mxu0 %v1679
  %1818 = vmatpush1.msra.mxu0 %v1678
  %1819 = vmatprep.subr.mxu0 %v1685
  %1820 = vmatpush1.msra.mxu0 %v1684
  %1821 = vmatprep.subr.mxu0 %v1691
  %1822 = vmatpush1.msra.mxu0 %v1690
  %1823 = vmatprep.subr.mxu0 %v1697
  %1824 = vmatpush1.msra.mxu0 %v1696
  %1825 = vmatprep.subr.mxu0 %v1703
  %1826 = vmatpush1.msra.mxu0 %v1702
  %1827 = vmatprep.subr.mxu0 %v1709
  %1828 = vmatpush1.msra.mxu0 %v1708
  %1829 = vmatprep.subr.mxu0 %v1715
  %1830 = vmatpush1.msra.mxu0 %v1714
  %1831 = vmatprep.subr.mxu0 %v1721
  %1832 = vmatpush1.msra.mxu0 %v1720
  %1833 = vmatprep.mubr.f32.mxu0 %v1766
  %1834 = vmatmul.mubr.f32.gmra.mrb[0].mxu0 %v1765
  %v1835 = vpop.f32.mrb[0].mxu0
  %v1836 = vadd.f32 %v1731, %v1835
  %v1837 = vpop.f32.mrb[0].mxu0
  %v1838 = vadd.f32 %v1735, %v1837
  %1839 = vdwg.mxu0
  %1840 = vmatprep.subr.mxu0 %v1537
  %1841 = vmatpush1.msra.mxu0 %v1536
  %1842 = vmatprep.subr.mxu0 %v1543
  %1843 = vmatpush1.msra.mxu0 %v1542
  %1844 = vmatprep.subr.mxu0 %v1549
  %1845 = vmatpush1.msra.mxu0 %v1548
  %1846 = vmatprep.subr.mxu0 %v1555
  %1847 = vmatpush1.msra.mxu0 %v1554
  %1848 = vmatprep.subr.mxu0 %v1561
  %1849 = vmatpush1.msra.mxu0 %v1560
  %1850 = vmatprep.subr.mxu0 %v1567
  %1851 = vmatpush1.msra.mxu0 %v1566
  %1852 = vmatprep.subr.mxu0 %v1573
  %1853 = vmatpush1.msra.mxu0 %v1572
  %1854 = vmatprep.subr.mxu0 %v1579
  %1855 = vmatpush1.msra.mxu0 %v1578
  %1856 = vmatprep.subr.mxu0 %v1585
  %1857 = vmatpush1.msra.mxu0 %v1584
  %1858 = vmatprep.subr.mxu0 %v1591
  %1859 = vmatpush1.msra.mxu0 %v1590
  %1860 = vmatprep.subr.mxu0 %v1597
  %1861 = vmatpush1.msra.mxu0 %v1596
  %1862 = vmatprep.subr.mxu0 %v1603
  %1863 = vmatpush1.msra.mxu0 %v1602
  %1864 = vmatprep.subr.mxu0 %v1609
  %1865 = vmatpush1.msra.mxu0 %v1608
  %1866 = vmatprep.subr.mxu0 %v1615
  %1867 = vmatpush1.msra.mxu0 %v1614
  %1868 = vmatprep.subr.mxu0 %v1621
  %1869 = vmatpush1.msra.mxu0 %v1620
  %1870 = vmatprep.subr.mxu0 %v1627
  %1871 = vmatpush1.msra.mxu0 %v1626
  %1872 = vmatprep.subr.mxu0 %v1633
  %1873 = vmatpush1.msra.mxu0 %v1632
  %1874 = vmatprep.subr.mxu0 %v1639
  %1875 = vmatpush1.msra.mxu0 %v1638
  %1876 = vmatprep.subr.mxu0 %v1645
  %1877 = vmatpush1.msra.mxu0 %v1644
  %1878 = vmatprep.subr.mxu0 %v1651
  %1879 = vmatpush1.msra.mxu0 %v1650
  %1880 = vmatprep.subr.mxu0 %v1657
  %1881 = vmatpush1.msra.mxu0 %v1656
  %1882 = vmatprep.subr.mxu0 %v1663
  %1883 = vmatpush1.msra.mxu0 %v1662
  %1884 = vmatprep.subr.mxu0 %v1669
  %1885 = vmatpush1.msra.mxu0 %v1668
  %1886 = vmatprep.subr.mxu0 %v1675
  %1887 = vmatpush1.msra.mxu0 %v1674
  %1888 = vmatprep.subr.mxu0 %v1681
  %1889 = vmatpush1.msra.mxu0 %v1680
  %1890 = vmatprep.subr.mxu0 %v1687
  %1891 = vmatpush1.msra.mxu0 %v1686
  %1892 = vmatprep.subr.mxu0 %v1693
  %1893 = vmatpush1.msra.mxu0 %v1692
  %1894 = vmatprep.subr.mxu0 %v1699
  %1895 = vmatpush1.msra.mxu0 %v1698
  %1896 = vmatprep.subr.mxu0 %v1705
  %1897 = vmatpush1.msra.mxu0 %v1704
  %1898 = vmatprep.subr.mxu0 %v1711
  %1899 = vmatpush1.msra.mxu0 %v1710
  %1900 = vmatprep.subr.mxu0 %v1717
  %1901 = vmatpush1.msra.mxu0 %v1716
  %1902 = vmatprep.subr.mxu0 %v1723
  %1903 = vmatpush1.msra.mxu0 %v1722
  %1904 = vmatprep.mubr.f32.mxu0 %v1766
  %1905 = vmatmul.mubr.f32.gmra.mrb[0].mxu0 %v1765
  %v1906 = vpop.f32.mrb[0].mxu0
  %v1907 = vadd.f32 %v1739, %v1906
  %v1908 = vpop.f32.mrb[0].mxu0
  %v1909 = vadd.f32 %v1743, %v1908
  %1910 = vdwg.mxu0
  %1911 = vmatprep.subr.mxu0 %v1539
  %1912 = vmatpush1.msra.mxu0 %v1538
  %1913 = vmatprep.subr.mxu0 %v1545
  %1914 = vmatpush1.msra.mxu0 %v1544
  %1915 = vmatprep.subr.mxu0 %v1551
  %1916 = vmatpush1.msra.mxu0 %v1550
  %1917 = vmatprep.subr.mxu0 %v1557
  %1918 = vmatpush1.msra.mxu0 %v1556
  %1919 = vmatprep.subr.mxu0 %v1563
  %1920 = vmatpush1.msra.mxu0 %v1562
  %1921 = vmatprep.subr.mxu0 %v1569
  %1922 = vmatpush1.msra.mxu0 %v1568
  %1923 = vmatprep.subr.mxu0 %v1575
  %1924 = vmatpush1.msra.mxu0 %v1574
  %1925 = vmatprep.subr.mxu0 %v1581
  %1926 = vmatpush1.msra.mxu0 %v1580
  %1927 = vmatprep.subr.mxu0 %v1587
  %1928 = vmatpush1.msra.mxu0 %v1586
  %1929 = vmatprep.subr.mxu0 %v1593
  %1930 = vmatpush1.msra.mxu0 %v1592
  %1931 = vmatprep.subr.mxu0 %v1599
  %1932 = vmatpush1.msra.mxu0 %v1598
  %1933 = vmatprep.subr.mxu0 %v1605
  %1934 = vmatpush1.msra.mxu0 %v1604
  %1935 = vmatprep.subr.mxu0 %v1611
  %1936 = vmatpush1.msra.mxu0 %v1610
  %1937 = vmatprep.subr.mxu0 %v1617
  %1938 = vmatpush1.msra.mxu0 %v1616
  %1939 = vmatprep.subr.mxu0 %v1623
  %1940 = vmatpush1.msra.mxu0 %v1622
  %1941 = vmatprep.subr.mxu0 %v1629
  %1942 = vmatpush1.msra.mxu0 %v1628
  %1943 = vmatprep.subr.mxu0 %v1635
  %1944 = vmatpush1.msra.mxu0 %v1634
  %1945 = vmatprep.subr.mxu0 %v1641
  %1946 = vmatpush1.msra.mxu0 %v1640
  %1947 = vmatprep.subr.mxu0 %v1647
  %1948 = vmatpush1.msra.mxu0 %v1646
  %1949 = vmatprep.subr.mxu0 %v1653
  %1950 = vmatpush1.msra.mxu0 %v1652
  %1951 = vmatprep.subr.mxu0 %v1659
  %1952 = vmatpush1.msra.mxu0 %v1658
  %1953 = vmatprep.subr.mxu0 %v1665
  %1954 = vmatpush1.msra.mxu0 %v1664
  %1955 = vmatprep.subr.mxu0 %v1671
  %1956 = vmatpush1.msra.mxu0 %v1670
  %1957 = vmatprep.subr.mxu0 %v1677
  %1958 = vmatpush1.msra.mxu0 %v1676
  %1959 = vmatprep.subr.mxu0 %v1683
  %1960 = vmatpush1.msra.mxu0 %v1682
  %1961 = vmatprep.subr.mxu0 %v1689
  %1962 = vmatpush1.msra.mxu0 %v1688
  %1963 = vmatprep.subr.mxu0 %v1695
  %1964 = vmatpush1.msra.mxu0 %v1694
  %1965 = vmatprep.subr.mxu0 %v1701
  %1966 = vmatpush1.msra.mxu0 %v1700
  %1967 = vmatprep.subr.mxu0 %v1707
  %1968 = vmatpush1.msra.mxu0 %v1706
  %1969 = vmatprep.subr.mxu0 %v1713
  %1970 = vmatpush1.msra.mxu0 %v1712
  %1971 = vmatprep.subr.mxu0 %v1719
  %1972 = vmatpush1.msra.mxu0 %v1718
  %1973 = vmatprep.subr.mxu0 %v1725
  %1974 = vmatpush1.msra.mxu0 %v1724
  %1975 = vmatprep.mubr.f32.mxu0 %v1766
  %1976 = vmatmul.mubr.f32.gmra.mrb[0].mxu0 %v1765
  %v1977 = vpop.f32.mrb[0].mxu0
  %v1978 = vadd.f32 %v1747, %v1977
  %v1979 = vpop.f32.mrb[0].mxu0
  %v1980 = vadd.f32 %v1751, %v1979
  %1981 = vdwg.mxu0
  %v1984 = vcombine.low %v1836, %v1838
  %v1986 = vunpack.c.l.s4 1983009808
  %v1987 = vunpack.c.0.s8 %v1986
  %v1988 = vlaneseq
  %v1989 = vshrl.u32 %v1988, 7
  %v1990 = vsub.s32 %v1987, %v1989
  %v1991 = vrot.slane %v1984, %v1990
  %v1993 = vadd.f32 %v1532, %v1991
  %v1994 = vxor.u32 %v1993, 2147483648
  %v1995 = vmul.f32 %v1994, 1.442695
  %v1996 = vpow.pop %v1995
  %v1997 = vadd.f32 %v1996, 1.0
  %v1998 = vrcp.pop %v1997
  %v1999 = vmul.f32 1.0, %v1998
  %v2001 = vrot.slane %v1532, 4
  %v2005 = vcombine.low %v1907, %v1909
  %v2007 = vunpack.c.l.s4 1983009808
  %v2008 = vunpack.c.0.s8 %v2007
  %v2009 = vlaneseq
  %v2010 = vshrl.u32 %v2009, 7
  %v2011 = vsub.s32 %v2008, %v2010
  %v2012 = vrot.slane %v2005, %v2011
  %v2014 = vadd.f32 %v2001, %v2012
  %v2015 = vxor.u32 %v2014, 2147483648
  %v2016 = vmul.f32 %v2015, 1.442695
  %v2017 = vpow.pop %v2016
  %v2018 = vadd.f32 %v2017, 1.0
  %v2019 = vrcp.pop %v2018
  %v2020 = vmul.f32 1.0, %v2019
  %v2023 = vcombine.low %v1978, %v1980
  %v2025 = vunpack.c.l.s4 1983009808
  %v2026 = vunpack.c.0.s8 %v2025
  %v2027 = vlaneseq
  %v2028 = vshrl.u32 %v2027, 7
  %v2029 = vsub.s32 %v2026, %v2028
  %v2030 = vrot.slane %v2023, %v2029
  %v2032 = vmul.f32 %v1999, %v2030
  %v2033 = vadd.f32 %v1533, %v2032
  %v2034 = vtanh.pop %v2033
  %v2035 = vsub.f32 1.0, %v2020
  %v2036 = vmul.f32 %v2035, %v2034
  %v2037 = vmul.f32 %v2020, %v1528
  %v2038 = vadd.f32 %v2036, %v2037
  %s2039 = scalar_lea.vmem %s3, 12
  %2040 = vst [vmem:[%s2039] sm:$0xf] %v2038
  %s2041 = scalar_lea.vmem %s0, 48
  %v2042 = vld [vmem:[%s2041] sm:$0xff]
  %v2043 = vld [vmem:[%s2041 + $0x8] sm:$0xf]
  %v2044 = vld [vmem:[%s1] sm:$0xff]
  %v2045 = vld [vmem:[%s1 + $0x8] sm:$0xff]
  %v2046 = vld [vmem:[%s1 + $0x10] sm:$0xff]
  %v2047 = vld [vmem:[%s1 + $0x18] sm:$0xff]
  %v2048 = vld [vmem:[%s1 + $0x20] sm:$0xff]
  %v2049 = vld [vmem:[%s1 + $0x28] sm:$0xff]
  %v2050 = vld [vmem:[%s1 + $0x30] sm:$0xff]
  %v2051 = vld [vmem:[%s1 + $0x38] sm:$0xff]
  %v2052 = vld [vmem:[%s1 + $0x40] sm:$0xff]
  %v2053 = vld [vmem:[%s1 + $0x48] sm:$0xff]
  %v2054 = vld [vmem:[%s1 + $0x50] sm:$0xff]
  %v2055 = vld [vmem:[%s1 + $0x58] sm:$0xff]
  %v2056 = vld [vmem:[%s1 + $0x60] sm:$0xff]
  %v2057 = vld [vmem:[%s1 + $0x68] sm:$0xff]
  %v2058 = vld [vmem:[%s1 + $0x70] sm:$0xff]
  %v2059 = vld [vmem:[%s1 + $0x78] sm:$0xff]
  %v2060 = vld [vmem:[%s1 + $0x80] sm:$0xff]
  %v2061 = vld [vmem:[%s1 + $0x88] sm:$0xff]
  %v2062 = vld [vmem:[%s1 + $0x90] sm:$0xff]
  %v2063 = vld [vmem:[%s1 + $0x98] sm:$0xff]
  %v2064 = vld [vmem:[%s1 + $0xa0] sm:$0xff]
  %v2065 = vld [vmem:[%s1 + $0xa8] sm:$0xff]
  %v2066 = vld [vmem:[%s1 + $0xb0] sm:$0xff]
  %v2067 = vld [vmem:[%s1 + $0xb8] sm:$0xff]
  %v2068 = vld [vmem:[%s1 + $0xc0] sm:$0xff]
  %v2069 = vld [vmem:[%s1 + $0xc8] sm:$0xff]
  %v2070 = vld [vmem:[%s1 + $0xd0] sm:$0xff]
  %v2071 = vld [vmem:[%s1 + $0xd8] sm:$0xff]
  %v2072 = vld [vmem:[%s1 + $0xe0] sm:$0xff]
  %v2073 = vld [vmem:[%s1 + $0xe8] sm:$0xff]
  %v2074 = vld [vmem:[%s1 + $0xf0] sm:$0xff]
  %v2075 = vld [vmem:[%s1 + $0xf8] sm:$0xff]
  %v2076 = vld [vmem:[%s1 + $0x100] sm:$0xff]
  %v2077 = vld [vmem:[%s1 + $0x108] sm:$0xff]
  %v2078 = vld [vmem:[%s1 + $0x110] sm:$0xff]
  %v2079 = vld [vmem:[%s1 + $0x118] sm:$0xff]
  %v2080 = vld [vmem:[%s1 + $0x120] sm:$0xff]
  %v2081 = vld [vmem:[%s1 + $0x128] sm:$0xff]
  %v2082 = vld [vmem:[%s1 + $0x130] sm:$0xff]
  %v2083 = vld [vmem:[%s1 + $0x138] sm:$0xff]
  %v2084 = vld [vmem:[%s1 + $0x140] sm:$0xff]
  %v2085 = vld [vmem:[%s1 + $0x148] sm:$0xff]
  %v2086 = vld [vmem:[%s1 + $0x150] sm:$0xff]
  %v2087 = vld [vmem:[%s1 + $0x158] sm:$0xff]
  %v2088 = vld [vmem:[%s1 + $0x160] sm:$0xff]
  %v2089 = vld [vmem:[%s1 + $0x168] sm:$0xff]
  %v2090 = vld [vmem:[%s1 + $0x170] sm:$0xff]
  %v2091 = vld [vmem:[%s1 + $0x178] sm:$0xff]
  %v2092 = vld [vmem:[%s1 + $0x180] sm:$0xff]
  %v2093 = vld [vmem:[%s1 + $0x188] sm:$0xff]
  %v2094 = vld [vmem:[%s1 + $0x190] sm:$0xff]
  %v2095 = vld [vmem:[%s1 + $0x198] sm:$0xff]
  %v2096 = vld [vmem:[%s1 + $0x1a0] sm:$0xff]
  %v2097 = vld [vmem:[%s1 + $0x1a8] sm:$0xff]
  %v2098 = vld [vmem:[%s1 + $0x1b0] sm:$0xff]
  %v2099 = vld [vmem:[%s1 + $0x1b8] sm:$0xff]
  %v2100 = vld [vmem:[%s1 + $0x1c0] sm:$0xff]
  %v2101 = vld [vmem:[%s1 + $0x1c8] sm:$0xff]
  %v2102 = vld [vmem:[%s1 + $0x1d0] sm:$0xff]
  %v2103 = vld [vmem:[%s1 + $0x1d8] sm:$0xff]
  %v2104 = vld [vmem:[%s1 + $0x1e0] sm:$0xff]
  %v2105 = vld [vmem:[%s1 + $0x1e8] sm:$0xff]
  %v2106 = vld [vmem:[%s1 + $0x1f0] sm:$0xff]
  %v2107 = vld [vmem:[%s1 + $0x1f8] sm:$0xff]
  %v2108 = vld [vmem:[%s1 + $0x200] sm:$0xff]
  %v2109 = vld [vmem:[%s1 + $0x208] sm:$0xff]
  %v2110 = vld [vmem:[%s1 + $0x210] sm:$0xff]
  %v2111 = vld [vmem:[%s1 + $0x218] sm:$0xff]
  %v2112 = vld [vmem:[%s1 + $0x220] sm:$0xff]
  %v2113 = vld [vmem:[%s1 + $0x228] sm:$0xff]
  %v2114 = vld [vmem:[%s1 + $0x230] sm:$0xff]
  %v2115 = vld [vmem:[%s1 + $0x238] sm:$0xff]
  %v2116 = vld [vmem:[%s1 + $0x240] sm:$0xff]
  %v2117 = vld [vmem:[%s1 + $0x248] sm:$0xff]
  %v2118 = vld [vmem:[%s1 + $0x250] sm:$0xff]
  %v2119 = vld [vmem:[%s1 + $0x258] sm:$0xff]
  %v2120 = vld [vmem:[%s1 + $0x260] sm:$0xff]
  %v2121 = vld [vmem:[%s1 + $0x268] sm:$0xff]
  %v2122 = vld [vmem:[%s1 + $0x270] sm:$0xff]
  %v2123 = vld [vmem:[%s1 + $0x278] sm:$0xff]
  %v2124 = vld [vmem:[%s1 + $0x280] sm:$0xff]
  %v2125 = vld [vmem:[%s1 + $0x288] sm:$0xff]
  %v2126 = vld [vmem:[%s1 + $0x290] sm:$0xff]
  %v2127 = vld [vmem:[%s1 + $0x298] sm:$0xff]
  %v2128 = vld [vmem:[%s1 + $0x2a0] sm:$0xff]
  %v2129 = vld [vmem:[%s1 + $0x2a8] sm:$0xff]
  %v2130 = vld [vmem:[%s1 + $0x2b0] sm:$0xff]
  %v2131 = vld [vmem:[%s1 + $0x2b8] sm:$0xff]
  %v2132 = vld [vmem:[%s1 + $0x2c0] sm:$0xff]
  %v2133 = vld [vmem:[%s1 + $0x2c8] sm:$0xff]
  %v2134 = vld [vmem:[%s1 + $0x2d0] sm:$0xff]
  %v2135 = vld [vmem:[%s1 + $0x2d8] sm:$0xff]
  %v2136 = vld [vmem:[%s1 + $0x2e0] sm:$0xff]
  %v2137 = vld [vmem:[%s1 + $0x2e8] sm:$0xff]
  %v2138 = vld [vmem:[%s1 + $0x2f0] sm:$0xff]
  %v2139 = vld [vmem:[%s1 + $0x2f8] sm:$0xff]
  %v2140 = vld [vmem:[%s1 + $0x300] sm:$0xff]
  %v2141 = vld [vmem:[%s1 + $0x308] sm:$0xff]
  %v2142 = vld [vmem:[%s1 + $0x310] sm:$0xff]
  %v2143 = vld [vmem:[%s1 + $0x318] sm:$0xff]
  %v2144 = vld [vmem:[%s1 + $0x320] sm:$0xff]
  %v2145 = vld [vmem:[%s1 + $0x328] sm:$0xff]
  %v2146 = vld [vmem:[%s1 + $0x330] sm:$0xff]
  %v2147 = vld [vmem:[%s1 + $0x338] sm:$0xff]
  %v2148 = vld [vmem:[%s1 + $0x340] sm:$0xff]
  %v2149 = vld [vmem:[%s1 + $0x348] sm:$0xff]
  %v2150 = vld [vmem:[%s1 + $0x350] sm:$0xff]
  %v2151 = vld [vmem:[%s1 + $0x358] sm:$0xff]
  %v2152 = vld [vmem:[%s1 + $0x360] sm:$0xff]
  %v2153 = vld [vmem:[%s1 + $0x368] sm:$0xff]
  %v2154 = vld [vmem:[%s1 + $0x370] sm:$0xff]
  %v2155 = vld [vmem:[%s1 + $0x378] sm:$0xff]
  %v2156 = vld [vmem:[%s1 + $0x380] sm:$0xff]
  %v2157 = vld [vmem:[%s1 + $0x388] sm:$0xff]
  %v2158 = vld [vmem:[%s1 + $0x390] sm:$0xff]
  %v2159 = vld [vmem:[%s1 + $0x398] sm:$0xff]
  %v2160 = vld [vmem:[%s1 + $0x3a0] sm:$0xff]
  %v2161 = vld [vmem:[%s1 + $0x3a8] sm:$0xff]
  %v2162 = vld [vmem:[%s1 + $0x3b0] sm:$0xff]
  %v2163 = vld [vmem:[%s1 + $0x3b8] sm:$0xff]
  %v2164 = vld [vmem:[%s1 + $0x3c0] sm:$0xff]
  %v2165 = vld [vmem:[%s1 + $0x3c8] sm:$0xff]
  %v2166 = vld [vmem:[%s1 + $0x3d0] sm:$0xff]
  %v2167 = vld [vmem:[%s1 + $0x3d8] sm:$0xff]
  %v2168 = vld [vmem:[%s1 + $0x3e0] sm:$0xff]
  %v2169 = vld [vmem:[%s1 + $0x3e8] sm:$0xff]
  %v2170 = vld [vmem:[%s1 + $0x3f0] sm:$0xff]
  %v2171 = vld [vmem:[%s1 + $0x3f8] sm:$0xff]
  %v2172 = vld [vmem:[%s1 + $0x400] sm:$0xff]
  %v2173 = vld [vmem:[%s1 + $0x408] sm:$0xff]
  %v2174 = vld [vmem:[%s1 + $0x410] sm:$0xff]
  %v2175 = vld [vmem:[%s1 + $0x418] sm:$0xff]
  %v2176 = vld [vmem:[%s1 + $0x420] sm:$0xff]
  %v2177 = vld [vmem:[%s1 + $0x428] sm:$0xff]
  %v2178 = vld [vmem:[%s1 + $0x430] sm:$0xff]
  %v2179 = vld [vmem:[%s1 + $0x438] sm:$0xff]
  %v2180 = vld [vmem:[%s1 + $0x440] sm:$0xff]
  %v2181 = vld [vmem:[%s1 + $0x448] sm:$0xff]
  %v2182 = vld [vmem:[%s1 + $0x450] sm:$0xff]
  %v2183 = vld [vmem:[%s1 + $0x458] sm:$0xff]
  %v2184 = vld [vmem:[%s1 + $0x460] sm:$0xff]
  %v2185 = vld [vmem:[%s1 + $0x468] sm:$0xff]
  %v2186 = vld [vmem:[%s1 + $0x470] sm:$0xff]
  %v2187 = vld [vmem:[%s1 + $0x478] sm:$0xff]
  %v2188 = vld [vmem:[%s1 + $0x480] sm:$0xff]
  %v2189 = vld [vmem:[%s1 + $0x488] sm:$0xff]
  %v2190 = vld [vmem:[%s1 + $0x490] sm:$0xff]
  %v2191 = vld [vmem:[%s1 + $0x498] sm:$0xff]
  %v2192 = vld [vmem:[%s1 + $0x4a0] sm:$0xff]
  %v2193 = vld [vmem:[%s1 + $0x4a8] sm:$0xff]
  %v2194 = vld [vmem:[%s1 + $0x4b0] sm:$0xff]
  %v2195 = vld [vmem:[%s1 + $0x4b8] sm:$0xff]
  %v2196 = vld [vmem:[%s1 + $0x4c0] sm:$0xff]
  %v2197 = vld [vmem:[%s1 + $0x4c8] sm:$0xff]
  %v2198 = vld [vmem:[%s1 + $0x4d0] sm:$0xff]
  %v2199 = vld [vmem:[%s1 + $0x4d8] sm:$0xff]
  %v2200 = vld [vmem:[%s1 + $0x4e0] sm:$0xff]
  %v2201 = vld [vmem:[%s1 + $0x4e8] sm:$0xff]
  %v2202 = vld [vmem:[%s1 + $0x4f0] sm:$0xff]
  %v2203 = vld [vmem:[%s1 + $0x4f8] sm:$0xff]
  %v2204 = vld [vmem:[%s1 + $0x500] sm:$0xff]
  %v2205 = vld [vmem:[%s1 + $0x508] sm:$0xff]
  %v2206 = vld [vmem:[%s1 + $0x510] sm:$0xff]
  %v2207 = vld [vmem:[%s1 + $0x518] sm:$0xff]
  %v2208 = vld [vmem:[%s1 + $0x520] sm:$0xff]
  %v2209 = vld [vmem:[%s1 + $0x528] sm:$0xff]
  %v2210 = vld [vmem:[%s1 + $0x530] sm:$0xff]
  %v2211 = vld [vmem:[%s1 + $0x538] sm:$0xff]
  %v2212 = vld [vmem:[%s1 + $0x540] sm:$0xff]
  %v2213 = vld [vmem:[%s1 + $0x548] sm:$0xff]
  %v2214 = vld [vmem:[%s1 + $0x550] sm:$0xff]
  %v2215 = vld [vmem:[%s1 + $0x558] sm:$0xff]
  %v2216 = vld [vmem:[%s1 + $0x560] sm:$0xff]
  %v2217 = vld [vmem:[%s1 + $0x568] sm:$0xff]
  %v2218 = vld [vmem:[%s1 + $0x570] sm:$0xff]
  %v2219 = vld [vmem:[%s1 + $0x578] sm:$0xff]
  %v2220 = vld [vmem:[%s1 + $0x580] sm:$0xff]
  %v2221 = vld [vmem:[%s1 + $0x588] sm:$0xff]
  %v2222 = vld [vmem:[%s1 + $0x590] sm:$0xff]
  %v2223 = vld [vmem:[%s1 + $0x598] sm:$0xff]
  %v2224 = vld [vmem:[%s1 + $0x5a0] sm:$0xff]
  %v2225 = vld [vmem:[%s1 + $0x5a8] sm:$0xff]
  %v2226 = vld [vmem:[%s1 + $0x5b0] sm:$0xff]
  %v2227 = vld [vmem:[%s1 + $0x5b8] sm:$0xff]
  %v2228 = vld [vmem:[%s1 + $0x5c0] sm:$0xff]
  %v2229 = vld [vmem:[%s1 + $0x5c8] sm:$0xff]
  %v2230 = vld [vmem:[%s1 + $0x5d0] sm:$0xff]
  %v2231 = vld [vmem:[%s1 + $0x5d8] sm:$0xff]
  %v2232 = vld [vmem:[%s1 + $0x5e0] sm:$0xff]
  %v2233 = vld [vmem:[%s1 + $0x5e8] sm:$0xff]
  %v2234 = vld [vmem:[%s1 + $0x5f0] sm:$0xff]
  %v2235 = vld [vmem:[%s1 + $0x5f8] sm:$0xff]
  %v2236 = vld [vmem:[%s2] sm:$0x3f]
  %v2238 = vlaneseq
  %v2239 = vshrl.u32 %v2238, 7
  %v2240 = vsub.s32 0, %v2239
  %v2241 = vrot.slane %v2236, %v2240
  %v2242 = vlaneseq
  %v2243 = vshrl.u32 %v2242, 7
  %v2244 = vsub.s32 1, %v2243
  %v2245 = vrot.slane %v2236, %v2244
  %v2246 = vlaneseq
  %v2247 = vshrl.u32 %v2246, 7
  %v2248 = vsub.s32 2, %v2247
  %v2249 = vrot.slane %v2236, %v2248
  %v2250 = vlaneseq
  %v2251 = vshrl.u32 %v2250, 7
  %v2252 = vsub.s32 3, %v2251
  %v2253 = vrot.slane %v2236, %v2252
  %v2254 = vlaneseq
  %v2255 = vshrl.u32 %v2254, 7
  %v2256 = vsub.s32 4, %v2255
  %v2257 = vrot.slane %v2236, %v2256
  %v2258 = vlaneseq
  %v2259 = vshrl.u32 %v2258, 7
  %v2260 = vsub.s32 5, %v2259
  %v2261 = vrot.slane %v2236, %v2260
  %v2270 = vunpack.c.l.s4 1983009808
  %v2271 = vunpack.c.0.s8 %v2270
  %v2272 = vlaneseq
  %v2273 = vshrl.u32 %v2272, 7
  %v2274 = vsub.s32 %v2271, %v2273
  %v2275 = vrot.slane %v2038, %v2274
  %v2276 = vcombine.high %v2275, %v2275
  %2279 = vmatprep.subr.mxu0 %v2045
  %2280 = vmatpush1.msra.mxu0 %v2044
  %2281 = vmatprep.subr.mxu0 %v2051
  %2282 = vmatpush1.msra.mxu0 %v2050
  %2283 = vmatprep.subr.mxu0 %v2057
  %2284 = vmatpush1.msra.mxu0 %v2056
  %2285 = vmatprep.subr.mxu0 %v2063
  %2286 = vmatpush1.msra.mxu0 %v2062
  %2287 = vmatprep.subr.mxu0 %v2069
  %2288 = vmatpush1.msra.mxu0 %v2068
  %2289 = vmatprep.subr.mxu0 %v2075
  %2290 = vmatpush1.msra.mxu0 %v2074
  %2291 = vmatprep.subr.mxu0 %v2081
  %2292 = vmatpush1.msra.mxu0 %v2080
  %2293 = vmatprep.subr.mxu0 %v2087
  %2294 = vmatpush1.msra.mxu0 %v2086
  %2295 = vmatprep.subr.mxu0 %v2093
  %2296 = vmatpush1.msra.mxu0 %v2092
  %2297 = vmatprep.subr.mxu0 %v2099
  %2298 = vmatpush1.msra.mxu0 %v2098
  %2299 = vmatprep.subr.mxu0 %v2105
  %2300 = vmatpush1.msra.mxu0 %v2104
  %2301 = vmatprep.subr.mxu0 %v2111
  %2302 = vmatpush1.msra.mxu0 %v2110
  %2303 = vmatprep.subr.mxu0 %v2117
  %2304 = vmatpush1.msra.mxu0 %v2116
  %2305 = vmatprep.subr.mxu0 %v2123
  %2306 = vmatpush1.msra.mxu0 %v2122
  %2307 = vmatprep.subr.mxu0 %v2129
  %2308 = vmatpush1.msra.mxu0 %v2128
  %2309 = vmatprep.subr.mxu0 %v2135
  %2310 = vmatpush1.msra.mxu0 %v2134
  %2311 = vmatprep.subr.mxu0 %v2141
  %2312 = vmatpush1.msra.mxu0 %v2140
  %2313 = vmatprep.subr.mxu0 %v2147
  %2314 = vmatpush1.msra.mxu0 %v2146
  %2315 = vmatprep.subr.mxu0 %v2153
  %2316 = vmatpush1.msra.mxu0 %v2152
  %2317 = vmatprep.subr.mxu0 %v2159
  %2318 = vmatpush1.msra.mxu0 %v2158
  %2319 = vmatprep.subr.mxu0 %v2165
  %2320 = vmatpush1.msra.mxu0 %v2164
  %2321 = vmatprep.subr.mxu0 %v2171
  %2322 = vmatpush1.msra.mxu0 %v2170
  %2323 = vmatprep.subr.mxu0 %v2177
  %2324 = vmatpush1.msra.mxu0 %v2176
  %2325 = vmatprep.subr.mxu0 %v2183
  %2326 = vmatpush1.msra.mxu0 %v2182
  %2327 = vmatprep.subr.mxu0 %v2189
  %2328 = vmatpush1.msra.mxu0 %v2188
  %2329 = vmatprep.subr.mxu0 %v2195
  %2330 = vmatpush1.msra.mxu0 %v2194
  %2331 = vmatprep.subr.mxu0 %v2201
  %2332 = vmatpush1.msra.mxu0 %v2200
  %2333 = vmatprep.subr.mxu0 %v2207
  %2334 = vmatpush1.msra.mxu0 %v2206
  %2335 = vmatprep.subr.mxu0 %v2213
  %2336 = vmatpush1.msra.mxu0 %v2212
  %2337 = vmatprep.subr.mxu0 %v2219
  %2338 = vmatpush1.msra.mxu0 %v2218
  %2339 = vmatprep.subr.mxu0 %v2225
  %2340 = vmatpush1.msra.mxu0 %v2224
  %2341 = vmatprep.subr.mxu0 %v2231
  %2342 = vmatpush1.msra.mxu0 %v2230
  %2343 = vmatprep.mubr.f32.mxu0 %v2276
  %2344 = vmatmul.mubr.f32.gmra.mrb[0].mxu0 %v2275
  %v2345 = vpop.f32.mrb[0].mxu0
  %v2346 = vadd.f32 %v2241, %v2345
  %v2347 = vpop.f32.mrb[0].mxu0
  %v2348 = vadd.f32 %v2245, %v2347
  %2349 = vdwg.mxu0
  %2350 = vmatprep.subr.mxu0 %v2047
  %2351 = vmatpush1.msra.mxu0 %v2046
  %2352 = vmatprep.subr.mxu0 %v2053
  %2353 = vmatpush1.msra.mxu0 %v2052
  %2354 = vmatprep.subr.mxu0 %v2059
  %2355 = vmatpush1.msra.mxu0 %v2058
  %2356 = vmatprep.subr.mxu0 %v2065
  %2357 = vmatpush1.msra.mxu0 %v2064
  %2358 = vmatprep.subr.mxu0 %v2071
  %2359 = vmatpush1.msra.mxu0 %v2070
  %2360 = vmatprep.subr.mxu0 %v2077
  %2361 = vmatpush1.msra.mxu0 %v2076
  %2362 = vmatprep.subr.mxu0 %v2083
  %2363 = vmatpush1.msra.mxu0 %v2082
  %2364 = vmatprep.subr.mxu0 %v2089
  %2365 = vmatpush1.msra.mxu0 %v2088
  %2366 = vmatprep.subr.mxu0 %v2095
  %2367 = vmatpush1.msra.mxu0 %v2094
  %2368 = vmatprep.subr.mxu0 %v2101
  %2369 = vmatpush1.msra.mxu0 %v2100
  %2370 = vmatprep.subr.mxu0 %v2107
  %2371 = vmatpush1.msra.mxu0 %v2106
  %2372 = vmatprep.subr.mxu0 %v2113
  %2373 = vmatpush1.msra.mxu0 %v2112
  %2374 = vmatprep.subr.mxu0 %v2119
  %2375 = vmatpush1.msra.mxu0 %v2118
  %2376 = vmatprep.subr.mxu0 %v2125
  %2377 = vmatpush1.msra.mxu0 %v2124
  %2378 = vmatprep.subr.mxu0 %v2131
  %2379 = vmatpush1.msra.mxu0 %v2130
  %2380 = vmatprep.subr.mxu0 %v2137
  %2381 = vmatpush1.msra.mxu0 %v2136
  %2382 = vmatprep.subr.mxu0 %v2143
  %2383 = vmatpush1.msra.mxu0 %v2142
  %2384 = vmatprep.subr.mxu0 %v2149
  %2385 = vmatpush1.msra.mxu0 %v2148
  %2386 = vmatprep.subr.mxu0 %v2155
  %2387 = vmatpush1.msra.mxu0 %v2154
  %2388 = vmatprep.subr.mxu0 %v2161
  %2389 = vmatpush1.msra.mxu0 %v2160
  %2390 = vmatprep.subr.mxu0 %v2167
  %2391 = vmatpush1.msra.mxu0 %v2166
  %2392 = vmatprep.subr.mxu0 %v2173
  %2393 = vmatpush1.msra.mxu0 %v2172
  %2394 = vmatprep.subr.mxu0 %v2179
  %2395 = vmatpush1.msra.mxu0 %v2178
  %2396 = vmatprep.subr.mxu0 %v2185
  %2397 = vmatpush1.msra.mxu0 %v2184
  %2398 = vmatprep.subr.mxu0 %v2191
  %2399 = vmatpush1.msra.mxu0 %v2190
  %2400 = vmatprep.subr.mxu0 %v2197
  %2401 = vmatpush1.msra.mxu0 %v2196
  %2402 = vmatprep.subr.mxu0 %v2203
  %2403 = vmatpush1.msra.mxu0 %v2202
  %2404 = vmatprep.subr.mxu0 %v2209
  %2405 = vmatpush1.msra.mxu0 %v2208
  %2406 = vmatprep.subr.mxu0 %v2215
  %2407 = vmatpush1.msra.mxu0 %v2214
  %2408 = vmatprep.subr.mxu0 %v2221
  %2409 = vmatpush1.msra.mxu0 %v2220
  %2410 = vmatprep.subr.mxu0 %v2227
  %2411 = vmatpush1.msra.mxu0 %v2226
  %2412 = vmatprep.subr.mxu0 %v2233
  %2413 = vmatpush1.msra.mxu0 %v2232
  %2414 = vmatprep.mubr.f32.mxu0 %v2276
  %2415 = vmatmul.mubr.f32.gmra.mrb[0].mxu0 %v2275
  %v2416 = vpop.f32.mrb[0].mxu0
  %v2417 = vadd.f32 %v2249, %v2416
  %v2418 = vpop.f32.mrb[0].mxu0
  %v2419 = vadd.f32 %v2253, %v2418
  %2420 = vdwg.mxu0
  %2421 = vmatprep.subr.mxu0 %v2049
  %2422 = vmatpush1.msra.mxu0 %v2048
  %2423 = vmatprep.subr.mxu0 %v2055
  %2424 = vmatpush1.msra.mxu0 %v2054
  %2425 = vmatprep.subr.mxu0 %v2061
  %2426 = vmatpush1.msra.mxu0 %v2060
  %2427 = vmatprep.subr.mxu0 %v2067
  %2428 = vmatpush1.msra.mxu0 %v2066
  %2429 = vmatprep.subr.mxu0 %v2073
  %2430 = vmatpush1.msra.mxu0 %v2072
  %2431 = vmatprep.subr.mxu0 %v2079
  %2432 = vmatpush1.msra.mxu0 %v2078
  %2433 = vmatprep.subr.mxu0 %v2085
  %2434 = vmatpush1.msra.mxu0 %v2084
  %2435 = vmatprep.subr.mxu0 %v2091
  %2436 = vmatpush1.msra.mxu0 %v2090
  %2437 = vmatprep.subr.mxu0 %v2097
  %2438 = vmatpush1.msra.mxu0 %v2096
  %2439 = vmatprep.subr.mxu0 %v2103
  %2440 = vmatpush1.msra.mxu0 %v2102
  %2441 = vmatprep.subr.mxu0 %v2109
  %2442 = vmatpush1.msra.mxu0 %v2108
  %2443 = vmatprep.subr.mxu0 %v2115
  %2444 = vmatpush1.msra.mxu0 %v2114
  %2445 = vmatprep.subr.mxu0 %v2121
  %2446 = vmatpush1.msra.mxu0 %v2120
  %2447 = vmatprep.subr.mxu0 %v2127
  %2448 = vmatpush1.msra.mxu0 %v2126
  %2449 = vmatprep.subr.mxu0 %v2133
  %2450 = vmatpush1.msra.mxu0 %v2132
  %2451 = vmatprep.subr.mxu0 %v2139
  %2452 = vmatpush1.msra.mxu0 %v2138
  %2453 = vmatprep.subr.mxu0 %v2145
  %2454 = vmatpush1.msra.mxu0 %v2144
  %2455 = vmatprep.subr.mxu0 %v2151
  %2456 = vmatpush1.msra.mxu0 %v2150
  %2457 = vmatprep.subr.mxu0 %v2157
  %2458 = vmatpush1.msra.mxu0 %v2156
  %2459 = vmatprep.subr.mxu0 %v2163
  %2460 = vmatpush1.msra.mxu0 %v2162
  %2461 = vmatprep.subr.mxu0 %v2169
  %2462 = vmatpush1.msra.mxu0 %v2168
  %2463 = vmatprep.subr.mxu0 %v2175
  %2464 = vmatpush1.msra.mxu0 %v2174
  %2465 = vmatprep.subr.mxu0 %v2181
  %2466 = vmatpush1.msra.mxu0 %v2180
  %2467 = vmatprep.subr.mxu0 %v2187
  %2468 = vmatpush1.msra.mxu0 %v2186
  %2469 = vmatprep.subr.mxu0 %v2193
  %2470 = vmatpush1.msra.mxu0 %v2192
  %2471 = vmatprep.subr.mxu0 %v2199
  %2472 = vmatpush1.msra.mxu0 %v2198
  %2473 = vmatprep.subr.mxu0 %v2205
  %2474 = vmatpush1.msra.mxu0 %v2204
  %2475 = vmatprep.subr.mxu0 %v2211
  %2476 = vmatpush1.msra.mxu0 %v2210
  %2477 = vmatprep.subr.mxu0 %v2217
  %2478 = vmatpush1.msra.mxu0 %v2216
  %2479 = vmatprep.subr.mxu0 %v2223
  %2480 = vmatpush1.msra.mxu0 %v2222
  %2481 = vmatprep.subr.mxu0 %v2229
  %2482 = vmatpush1.msra.mxu0 %v2228
  %2483 = vmatprep.subr.mxu0 %v2235
  %2484 = vmatpush1.msra.mxu0 %v2234
  %2485 = vmatprep.mubr.f32.mxu0 %v2276
  %2486 = vmatmul.mubr.f32.gmra.mrb[0].mxu0 %v2275
  %v2487 = vpop.f32.mrb[0].mxu0
  %v2488 = vadd.f32 %v2257, %v2487
  %v2489 = vpop.f32.mrb[0].mxu0
  %v2490 = vadd.f32 %v2261, %v2489
  %2491 = vdwg.mxu0
  %v2494 = vcombine.low %v2346, %v2348
  %v2496 = vunpack.c.l.s4 1983009808
  %v2497 = vunpack.c.0.s8 %v2496
  %v2498 = vlaneseq
  %v2499 = vshrl.u32 %v2498, 7
  %v2500 = vsub.s32 %v2497, %v2499
  %v2501 = vrot.slane %v2494, %v2500
  %v2503 = vadd.f32 %v2042, %v2501
  %v2504 = vxor.u32 %v2503, 2147483648
  %v2505 = vmul.f32 %v2504, 1.442695
  %v2506 = vpow.pop %v2505
  %v2507 = vadd.f32 %v2506, 1.0
  %v2508 = vrcp.pop %v2507
  %v2509 = vmul.f32 1.0, %v2508
  %v2511 = vrot.slane %v2042, 4
  %v2515 = vcombine.low %v2417, %v2419
  %v2517 = vunpack.c.l.s4 1983009808
  %v2518 = vunpack.c.0.s8 %v2517
  %v2519 = vlaneseq
  %v2520 = vshrl.u32 %v2519, 7
  %v2521 = vsub.s32 %v2518, %v2520
  %v2522 = vrot.slane %v2515, %v2521
  %v2524 = vadd.f32 %v2511, %v2522
  %v2525 = vxor.u32 %v2524, 2147483648
  %v2526 = vmul.f32 %v2525, 1.442695
  %v2527 = vpow.pop %v2526
  %v2528 = vadd.f32 %v2527, 1.0
  %v2529 = vrcp.pop %v2528
  %v2530 = vmul.f32 1.0, %v2529
  %v2533 = vcombine.low %v2488, %v2490
  %v2535 = vunpack.c.l.s4 1983009808
  %v2536 = vunpack.c.0.s8 %v2535
  %v2537 = vlaneseq
  %v2538 = vshrl.u32 %v2537, 7
  %v2539 = vsub.s32 %v2536, %v2538
  %v2540 = vrot.slane %v2533, %v2539
  %v2542 = vmul.f32 %v2509, %v2540
  %v2543 = vadd.f32 %v2043, %v2542
  %v2544 = vtanh.pop %v2543
  %v2545 = vsub.f32 1.0, %v2530
  %v2546 = vmul.f32 %v2545, %v2544
  %v2547 = vmul.f32 %v2530, %v2038
  %v2548 = vadd.f32 %v2546, %v2547
  %s2549 = scalar_lea.vmem %s3, 16
  %2550 = vst [vmem:[%s2549] sm:$0xf] %v2548
  %s2551 = scalar_lea.vmem %s0, 60
  %v2552 = vld [vmem:[%s2551] sm:$0xff]
  %v2553 = vld [vmem:[%s2551 + $0x8] sm:$0xf]
  %v2554 = vld [vmem:[%s1] sm:$0xff]
  %v2555 = vld [vmem:[%s1 + $0x8] sm:$0xff]
  %v2556 = vld [vmem:[%s1 + $0x10] sm:$0xff]
  %v2557 = vld [vmem:[%s1 + $0x18] sm:$0xff]
  %v2558 = vld [vmem:[%s1 + $0x20] sm:$0xff]
  %v2559 = vld [vmem:[%s1 + $0x28] sm:$0xff]
  %v2560 = vld [vmem:[%s1 + $0x30] sm:$0xff]
  %v2561 = vld [vmem:[%s1 + $0x38] sm:$0xff]
  %v2562 = vld [vmem:[%s1 + $0x40] sm:$0xff]
  %v2563 = vld [vmem:[%s1 + $0x48] sm:$0xff]
  %v2564 = vld [vmem:[%s1 + $0x50] sm:$0xff]
  %v2565 = vld [vmem:[%s1 + $0x58] sm:$0xff]
  %v2566 = vld [vmem:[%s1 + $0x60] sm:$0xff]
  %v2567 = vld [vmem:[%s1 + $0x68] sm:$0xff]
  %v2568 = vld [vmem:[%s1 + $0x70] sm:$0xff]
  %v2569 = vld [vmem:[%s1 + $0x78] sm:$0xff]
  %v2570 = vld [vmem:[%s1 + $0x80] sm:$0xff]
  %v2571 = vld [vmem:[%s1 + $0x88] sm:$0xff]
  %v2572 = vld [vmem:[%s1 + $0x90] sm:$0xff]
  %v2573 = vld [vmem:[%s1 + $0x98] sm:$0xff]
  %v2574 = vld [vmem:[%s1 + $0xa0] sm:$0xff]
  %v2575 = vld [vmem:[%s1 + $0xa8] sm:$0xff]
  %v2576 = vld [vmem:[%s1 + $0xb0] sm:$0xff]
  %v2577 = vld [vmem:[%s1 + $0xb8] sm:$0xff]
  %v2578 = vld [vmem:[%s1 + $0xc0] sm:$0xff]
  %v2579 = vld [vmem:[%s1 + $0xc8] sm:$0xff]
  %v2580 = vld [vmem:[%s1 + $0xd0] sm:$0xff]
  %v2581 = vld [vmem:[%s1 + $0xd8] sm:$0xff]
  %v2582 = vld [vmem:[%s1 + $0xe0] sm:$0xff]
  %v2583 = vld [vmem:[%s1 + $0xe8] sm:$0xff]
  %v2584 = vld [vmem:[%s1 + $0xf0] sm:$0xff]
  %v2585 = vld [vmem:[%s1 + $0xf8] sm:$0xff]
  %v2586 = vld [vmem:[%s1 + $0x100] sm:$0xff]
  %v2587 = vld [vmem:[%s1 + $0x108] sm:$0xff]
  %v2588 = vld [vmem:[%s1 + $0x110] sm:$0xff]
  %v2589 = vld [vmem:[%s1 + $0x118] sm:$0xff]
  %v2590 = vld [vmem:[%s1 + $0x120] sm:$0xff]
  %v2591 = vld [vmem:[%s1 + $0x128] sm:$0xff]
  %v2592 = vld [vmem:[%s1 + $0x130] sm:$0xff]
  %v2593 = vld [vmem:[%s1 + $0x138] sm:$0xff]
  %v2594 = vld [vmem:[%s1 + $0x140] sm:$0xff]
  %v2595 = vld [vmem:[%s1 + $0x148] sm:$0xff]
  %v2596 = vld [vmem:[%s1 + $0x150] sm:$0xff]
  %v2597 = vld [vmem:[%s1 + $0x158] sm:$0xff]
  %v2598 = vld [vmem:[%s1 + $0x160] sm:$0xff]
  %v2599 = vld [vmem:[%s1 + $0x168] sm:$0xff]
  %v2600 = vld [vmem:[%s1 + $0x170] sm:$0xff]
  %v2601 = vld [vmem:[%s1 + $0x178] sm:$0xff]
  %v2602 = vld [vmem:[%s1 + $0x180] sm:$0xff]
  %v2603 = vld [vmem:[%s1 + $0x188] sm:$0xff]
  %v2604 = vld [vmem:[%s1 + $0x190] sm:$0xff]
  %v2605 = vld [vmem:[%s1 + $0x198] sm:$0xff]
  %v2606 = vld [vmem:[%s1 + $0x1a0] sm:$0xff]
  %v2607 = vld [vmem:[%s1 + $0x1a8] sm:$0xff]
  %v2608 = vld [vmem:[%s1 + $0x1b0] sm:$0xff]
  %v2609 = vld [vmem:[%s1 + $0x1b8] sm:$0xff]
  %v2610 = vld [vmem:[%s1 + $0x1c0] sm:$0xff]
  %v2611 = vld [vmem:[%s1 + $0x1c8] sm:$0xff]
  %v2612 = vld [vmem:[%s1 + $0x1d0] sm:$0xff]
  %v2613 = vld [vmem:[%s1 + $0x1d8] sm:$0xff]
  %v2614 = vld [vmem:[%s1 + $0x1e0] sm:$0xff]
  %v2615 = vld [vmem:[%s1 + $0x1e8] sm:$0xff]
  %v2616 = vld [vmem:[%s1 + $0x1f0] sm:$0xff]
  %v2617 = vld [vmem:[%s1 + $0x1f8] sm:$0xff]
  %v2618 = vld [vmem:[%s1 + $0x200] sm:$0xff]
  %v2619 = vld [vmem:[%s1 + $0x208] sm:$0xff]
  %v2620 = vld [vmem:[%s1 + $0x210] sm:$0xff]
  %v2621 = vld [vmem:[%s1 + $0x218] sm:$0xff]
  %v2622 = vld [vmem:[%s1 + $0x220] sm:$0xff]
  %v2623 = vld [vmem:[%s1 + $0x228] sm:$0xff]
  %v2624 = vld [vmem:[%s1 + $0x230] sm:$0xff]
  %v2625 = vld [vmem:[%s1 + $0x238] sm:$0xff]
  %v2626 = vld [vmem:[%s1 + $0x240] sm:$0xff]
  %v2627 = vld [vmem:[%s1 + $0x248] sm:$0xff]
  %v2628 = vld [vmem:[%s1 + $0x250] sm:$0xff]
  %v2629 = vld [vmem:[%s1 + $0x258] sm:$0xff]
  %v2630 = vld [vmem:[%s1 + $0x260] sm:$0xff]
  %v2631 = vld [vmem:[%s1 + $0x268] sm:$0xff]
  %v2632 = vld [vmem:[%s1 + $0x270] sm:$0xff]
  %v2633 = vld [vmem:[%s1 + $0x278] sm:$0xff]
  %v2634 = vld [vmem:[%s1 + $0x280] sm:$0xff]
  %v2635 = vld [vmem:[%s1 + $0x288] sm:$0xff]
  %v2636 = vld [vmem:[%s1 + $0x290] sm:$0xff]
  %v2637 = vld [vmem:[%s1 + $0x298] sm:$0xff]
  %v2638 = vld [vmem:[%s1 + $0x2a0] sm:$0xff]
  %v2639 = vld [vmem:[%s1 + $0x2a8] sm:$0xff]
  %v2640 = vld [vmem:[%s1 + $0x2b0] sm:$0xff]
  %v2641 = vld [vmem:[%s1 + $0x2b8] sm:$0xff]
  %v2642 = vld [vmem:[%s1 + $0x2c0] sm:$0xff]
  %v2643 = vld [vmem:[%s1 + $0x2c8] sm:$0xff]
  %v2644 = vld [vmem:[%s1 + $0x2d0] sm:$0xff]
  %v2645 = vld [vmem:[%s1 + $0x2d8] sm:$0xff]
  %v2646 = vld [vmem:[%s1 + $0x2e0] sm:$0xff]
  %v2647 = vld [vmem:[%s1 + $0x2e8] sm:$0xff]
  %v2648 = vld [vmem:[%s1 + $0x2f0] sm:$0xff]
  %v2649 = vld [vmem:[%s1 + $0x2f8] sm:$0xff]
  %v2650 = vld [vmem:[%s1 + $0x300] sm:$0xff]
  %v2651 = vld [vmem:[%s1 + $0x308] sm:$0xff]
  %v2652 = vld [vmem:[%s1 + $0x310] sm:$0xff]
  %v2653 = vld [vmem:[%s1 + $0x318] sm:$0xff]
  %v2654 = vld [vmem:[%s1 + $0x320] sm:$0xff]
  %v2655 = vld [vmem:[%s1 + $0x328] sm:$0xff]
  %v2656 = vld [vmem:[%s1 + $0x330] sm:$0xff]
  %v2657 = vld [vmem:[%s1 + $0x338] sm:$0xff]
  %v2658 = vld [vmem:[%s1 + $0x340] sm:$0xff]
  %v2659 = vld [vmem:[%s1 + $0x348] sm:$0xff]
  %v2660 = vld [vmem:[%s1 + $0x350] sm:$0xff]
  %v2661 = vld [vmem:[%s1 + $0x358] sm:$0xff]
  %v2662 = vld [vmem:[%s1 + $0x360] sm:$0xff]
  %v2663 = vld [vmem:[%s1 + $0x368] sm:$0xff]
  %v2664 = vld [vmem:[%s1 + $0x370] sm:$0xff]
  %v2665 = vld [vmem:[%s1 + $0x378] sm:$0xff]
  %v2666 = vld [vmem:[%s1 + $0x380] sm:$0xff]
  %v2667 = vld [vmem:[%s1 + $0x388] sm:$0xff]
  %v2668 = vld [vmem:[%s1 + $0x390] sm:$0xff]
  %v2669 = vld [vmem:[%s1 + $0x398] sm:$0xff]
  %v2670 = vld [vmem:[%s1 + $0x3a0] sm:$0xff]
  %v2671 = vld [vmem:[%s1 + $0x3a8] sm:$0xff]
  %v2672 = vld [vmem:[%s1 + $0x3b0] sm:$0xff]
  %v2673 = vld [vmem:[%s1 + $0x3b8] sm:$0xff]
  %v2674 = vld [vmem:[%s1 + $0x3c0] sm:$0xff]
  %v2675 = vld [vmem:[%s1 + $0x3c8] sm:$0xff]
  %v2676 = vld [vmem:[%s1 + $0x3d0] sm:$0xff]
  %v2677 = vld [vmem:[%s1 + $0x3d8] sm:$0xff]
  %v2678 = vld [vmem:[%s1 + $0x3e0] sm:$0xff]
  %v2679 = vld [vmem:[%s1 + $0x3e8] sm:$0xff]
  %v2680 = vld [vmem:[%s1 + $0x3f0] sm:$0xff]
  %v2681 = vld [vmem:[%s1 + $0x3f8] sm:$0xff]
  %v2682 = vld [vmem:[%s1 + $0x400] sm:$0xff]
  %v2683 = vld [vmem:[%s1 + $0x408] sm:$0xff]
  %v2684 = vld [vmem:[%s1 + $0x410] sm:$0xff]
  %v2685 = vld [vmem:[%s1 + $0x418] sm:$0xff]
  %v2686 = vld [vmem:[%s1 + $0x420] sm:$0xff]
  %v2687 = vld [vmem:[%s1 + $0x428] sm:$0xff]
  %v2688 = vld [vmem:[%s1 + $0x430] sm:$0xff]
  %v2689 = vld [vmem:[%s1 + $0x438] sm:$0xff]
  %v2690 = vld [vmem:[%s1 + $0x440] sm:$0xff]
  %v2691 = vld [vmem:[%s1 + $0x448] sm:$0xff]
  %v2692 = vld [vmem:[%s1 + $0x450] sm:$0xff]
  %v2693 = vld [vmem:[%s1 + $0x458] sm:$0xff]
  %v2694 = vld [vmem:[%s1 + $0x460] sm:$0xff]
  %v2695 = vld [vmem:[%s1 + $0x468] sm:$0xff]
  %v2696 = vld [vmem:[%s1 + $0x470] sm:$0xff]
  %v2697 = vld [vmem:[%s1 + $0x478] sm:$0xff]
  %v2698 = vld [vmem:[%s1 + $0x480] sm:$0xff]
  %v2699 = vld [vmem:[%s1 + $0x488] sm:$0xff]
  %v2700 = vld [vmem:[%s1 + $0x490] sm:$0xff]
  %v2701 = vld [vmem:[%s1 + $0x498] sm:$0xff]
  %v2702 = vld [vmem:[%s1 + $0x4a0] sm:$0xff]
  %v2703 = vld [vmem:[%s1 + $0x4a8] sm:$0xff]
  %v2704 = vld [vmem:[%s1 + $0x4b0] sm:$0xff]
  %v2705 = vld [vmem:[%s1 + $0x4b8] sm:$0xff]
  %v2706 = vld [vmem:[%s1 + $0x4c0] sm:$0xff]
  %v2707 = vld [vmem:[%s1 + $0x4c8] sm:$0xff]
  %v2708 = vld [vmem:[%s1 + $0x4d0] sm:$0xff]
  %v2709 = vld [vmem:[%s1 + $0x4d8] sm:$0xff]
  %v2710 = vld [vmem:[%s1 + $0x4e0] sm:$0xff]
  %v2711 = vld [vmem:[%s1 + $0x4e8] sm:$0xff]
  %v2712 = vld [vmem:[%s1 + $0x4f0] sm:$0xff]
  %v2713 = vld [vmem:[%s1 + $0x4f8] sm:$0xff]
  %v2714 = vld [vmem:[%s1 + $0x500] sm:$0xff]
  %v2715 = vld [vmem:[%s1 + $0x508] sm:$0xff]
  %v2716 = vld [vmem:[%s1 + $0x510] sm:$0xff]
  %v2717 = vld [vmem:[%s1 + $0x518] sm:$0xff]
  %v2718 = vld [vmem:[%s1 + $0x520] sm:$0xff]
  %v2719 = vld [vmem:[%s1 + $0x528] sm:$0xff]
  %v2720 = vld [vmem:[%s1 + $0x530] sm:$0xff]
  %v2721 = vld [vmem:[%s1 + $0x538] sm:$0xff]
  %v2722 = vld [vmem:[%s1 + $0x540] sm:$0xff]
  %v2723 = vld [vmem:[%s1 + $0x548] sm:$0xff]
  %v2724 = vld [vmem:[%s1 + $0x550] sm:$0xff]
  %v2725 = vld [vmem:[%s1 + $0x558] sm:$0xff]
  %v2726 = vld [vmem:[%s1 + $0x560] sm:$0xff]
  %v2727 = vld [vmem:[%s1 + $0x568] sm:$0xff]
  %v2728 = vld [vmem:[%s1 + $0x570] sm:$0xff]
  %v2729 = vld [vmem:[%s1 + $0x578] sm:$0xff]
  %v2730 = vld [vmem:[%s1 + $0x580] sm:$0xff]
  %v2731 = vld [vmem:[%s1 + $0x588] sm:$0xff]
  %v2732 = vld [vmem:[%s1 + $0x590] sm:$0xff]
  %v2733 = vld [vmem:[%s1 + $0x598] sm:$0xff]
  %v2734 = vld [vmem:[%s1 + $0x5a0] sm:$0xff]
  %v2735 = vld [vmem:[%s1 + $0x5a8] sm:$0xff]
  %v2736 = vld [vmem:[%s1 + $0x5b0] sm:$0xff]
  %v2737 = vld [vmem:[%s1 + $0x5b8] sm:$0xff]
  %v2738 = vld [vmem:[%s1 + $0x5c0] sm:$0xff]
  %v2739 = vld [vmem:[%s1 + $0x5c8] sm:$0xff]
  %v2740 = vld [vmem:[%s1 + $0x5d0] sm:$0xff]
  %v2741 = vld [vmem:[%s1 + $0x5d8] sm:$0xff]
  %v2742 = vld [vmem:[%s1 + $0x5e0] sm:$0xff]
  %v2743 = vld [vmem:[%s1 + $0x5e8] sm:$0xff]
  %v2744 = vld [vmem:[%s1 + $0x5f0] sm:$0xff]
  %v2745 = vld [vmem:[%s1 + $0x5f8] sm:$0xff]
  %v2746 = vld [vmem:[%s2] sm:$0x3f]
  %v2748 = vlaneseq
  %v2749 = vshrl.u32 %v2748, 7
  %v2750 = vsub.s32 0, %v2749
  %v2751 = vrot.slane %v2746, %v2750
  %v2752 = vlaneseq
  %v2753 = vshrl.u32 %v2752, 7
  %v2754 = vsub.s32 1, %v2753
  %v2755 = vrot.slane %v2746, %v2754
  %v2756 = vlaneseq
  %v2757 = vshrl.u32 %v2756, 7
  %v2758 = vsub.s32 2, %v2757
  %v2759 = vrot.slane %v2746, %v2758
  %v2760 = vlaneseq
  %v2761 = vshrl.u32 %v2760, 7
  %v2762 = vsub.s32 3, %v2761
  %v2763 = vrot.slane %v2746, %v2762
  %v2764 = vlaneseq
  %v2765 = vshrl.u32 %v2764, 7
  %v2766 = vsub.s32 4, %v2765
  %v2767 = vrot.slane %v2746, %v2766
  %v2768 = vlaneseq
  %v2769 = vshrl.u32 %v2768, 7
  %v2770 = vsub.s32 5, %v2769
  %v2771 = vrot.slane %v2746, %v2770
  %v2780 = vunpack.c.l.s4 1983009808
  %v2781 = vunpack.c.0.s8 %v2780
  %v2782 = vlaneseq
  %v2783 = vshrl.u32 %v2782, 7
  %v2784 = vsub.s32 %v2781, %v2783
  %v2785 = vrot.slane %v2548, %v2784
  %v2786 = vcombine.high %v2785, %v2785
  %2789 = vmatprep.subr.mxu0 %v2555
  %2790 = vmatpush1.msra.mxu0 %v2554
  %2791 = vmatprep.subr.mxu0 %v2561
  %2792 = vmatpush1.msra.mxu0 %v2560
  %2793 = vmatprep.subr.mxu0 %v2567
  %2794 = vmatpush1.msra.mxu0 %v2566
  %2795 = vmatprep.subr.mxu0 %v2573
  %2796 = vmatpush1.msra.mxu0 %v2572
  %2797 = vmatprep.subr.mxu0 %v2579
  %2798 = vmatpush1.msra.mxu0 %v2578
  %2799 = vmatprep.subr.mxu0 %v2585
  %2800 = vmatpush1.msra.mxu0 %v2584
  %2801 = vmatprep.subr.mxu0 %v2591
  %2802 = vmatpush1.msra.mxu0 %v2590
  %2803 = vmatprep.subr.mxu0 %v2597
  %2804 = vmatpush1.msra.mxu0 %v2596
  %2805 = vmatprep.subr.mxu0 %v2603
  %2806 = vmatpush1.msra.mxu0 %v2602
  %2807 = vmatprep.subr.mxu0 %v2609
  %2808 = vmatpush1.msra.mxu0 %v2608
  %2809 = vmatprep.subr.mxu0 %v2615
  %2810 = vmatpush1.msra.mxu0 %v2614
  %2811 = vmatprep.subr.mxu0 %v2621
  %2812 = vmatpush1.msra.mxu0 %v2620
  %2813 = vmatprep.subr.mxu0 %v2627
  %2814 = vmatpush1.msra.mxu0 %v2626
  %2815 = vmatprep.subr.mxu0 %v2633
  %2816 = vmatpush1.msra.mxu0 %v2632
  %2817 = vmatprep.subr.mxu0 %v2639
  %2818 = vmatpush1.msra.mxu0 %v2638
  %2819 = vmatprep.subr.mxu0 %v2645
  %2820 = vmatpush1.msra.mxu0 %v2644
  %2821 = vmatprep.subr.mxu0 %v2651
  %2822 = vmatpush1.msra.mxu0 %v2650
  %2823 = vmatprep.subr.mxu0 %v2657
  %2824 = vmatpush1.msra.mxu0 %v2656
  %2825 = vmatprep.subr.mxu0 %v2663
  %2826 = vmatpush1.msra.mxu0 %v2662
  %2827 = vmatprep.subr.mxu0 %v2669
  %2828 = vmatpush1.msra.mxu0 %v2668
  %2829 = vmatprep.subr.mxu0 %v2675
  %2830 = vmatpush1.msra.mxu0 %v2674
  %2831 = vmatprep.subr.mxu0 %v2681
  %2832 = vmatpush1.msra.mxu0 %v2680
  %2833 = vmatprep.subr.mxu0 %v2687
  %2834 = vmatpush1.msra.mxu0 %v2686
  %2835 = vmatprep.subr.mxu0 %v2693
  %2836 = vmatpush1.msra.mxu0 %v2692
  %2837 = vmatprep.subr.mxu0 %v2699
  %2838 = vmatpush1.msra.mxu0 %v2698
  %2839 = vmatprep.subr.mxu0 %v2705
  %2840 = vmatpush1.msra.mxu0 %v2704
  %2841 = vmatprep.subr.mxu0 %v2711
  %2842 = vmatpush1.msra.mxu0 %v2710
  %2843 = vmatprep.subr.mxu0 %v2717
  %2844 = vmatpush1.msra.mxu0 %v2716
  %2845 = vmatprep.subr.mxu0 %v2723
  %2846 = vmatpush1.msra.mxu0 %v2722
  %2847 = vmatprep.subr.mxu0 %v2729
  %2848 = vmatpush1.msra.mxu0 %v2728
  %2849 = vmatprep.subr.mxu0 %v2735
  %2850 = vmatpush1.msra.mxu0 %v2734
  %2851 = vmatprep.subr.mxu0 %v2741
  %2852 = vmatpush1.msra.mxu0 %v2740
  %2853 = vmatprep.mubr.f32.mxu0 %v2786
  %2854 = vmatmul.mubr.f32.gmra.mrb[0].mxu0 %v2785
  %v2855 = vpop.f32.mrb[0].mxu0
  %v2856 = vadd.f32 %v2751, %v2855
  %v2857 = vpop.f32.mrb[0].mxu0
  %v2858 = vadd.f32 %v2755, %v2857
  %2859 = vdwg.mxu0
  %2860 = vmatprep.subr.mxu0 %v2557
  %2861 = vmatpush1.msra.mxu0 %v2556
  %2862 = vmatprep.subr.mxu0 %v2563
  %2863 = vmatpush1.msra.mxu0 %v2562
  %2864 = vmatprep.subr.mxu0 %v2569
  %2865 = vmatpush1.msra.mxu0 %v2568
  %2866 = vmatprep.subr.mxu0 %v2575
  %2867 = vmatpush1.msra.mxu0 %v2574
  %2868 = vmatprep.subr.mxu0 %v2581
  %2869 = vmatpush1.msra.mxu0 %v2580
  %2870 = vmatprep.subr.mxu0 %v2587
  %2871 = vmatpush1.msra.mxu0 %v2586
  %2872 = vmatprep.subr.mxu0 %v2593
  %2873 = vmatpush1.msra.mxu0 %v2592
  %2874 = vmatprep.subr.mxu0 %v2599
  %2875 = vmatpush1.msra.mxu0 %v2598
  %2876 = vmatprep.subr.mxu0 %v2605
  %2877 = vmatpush1.msra.mxu0 %v2604
  %2878 = vmatprep.subr.mxu0 %v2611
  %2879 = vmatpush1.msra.mxu0 %v2610
  %2880 = vmatprep.subr.mxu0 %v2617
  %2881 = vmatpush1.msra.mxu0 %v2616
  %2882 = vmatprep.subr.mxu0 %v2623
  %2883 = vmatpush1.msra.mxu0 %v2622
  %2884 = vmatprep.subr.mxu0 %v2629
  %2885 = vmatpush1.msra.mxu0 %v2628
  %2886 = vmatprep.subr.mxu0 %v2635
  %2887 = vmatpush1.msra.mxu0 %v2634
  %2888 = vmatprep.subr.mxu0 %v2641
  %2889 = vmatpush1.msra.mxu0 %v2640
  %2890 = vmatprep.subr.mxu0 %v2647
  %2891 = vmatpush1.msra.mxu0 %v2646
  %2892 = vmatprep.subr.mxu0 %v2653
  %2893 = vmatpush1.msra.mxu0 %v2652
  %2894 = vmatprep.subr.mxu0 %v2659
  %2895 = vmatpush1.msra.mxu0 %v2658
  %2896 = vmatprep.subr.mxu0 %v2665
  %2897 = vmatpush1.msra.mxu0 %v2664
  %2898 = vmatprep.subr.mxu0 %v2671
  %2899 = vmatpush1.msra.mxu0 %v2670
  %2900 = vmatprep.subr.mxu0 %v2677
  %2901 = vmatpush1.msra.mxu0 %v2676
  %2902 = vmatprep.subr.mxu0 %v2683
  %2903 = vmatpush1.msra.mxu0 %v2682
  %2904 = vmatprep.subr.mxu0 %v2689
  %2905 = vmatpush1.msra.mxu0 %v2688
  %2906 = vmatprep.subr.mxu0 %v2695
  %2907 = vmatpush1.msra.mxu0 %v2694
  %2908 = vmatprep.subr.mxu0 %v2701
  %2909 = vmatpush1.msra.mxu0 %v2700
  %2910 = vmatprep.subr.mxu0 %v2707
  %2911 = vmatpush1.msra.mxu0 %v2706
  %2912 = vmatprep.subr.mxu0 %v2713
  %2913 = vmatpush1.msra.mxu0 %v2712
  %2914 = vmatprep.subr.mxu0 %v2719
  %2915 = vmatpush1.msra.mxu0 %v2718
  %2916 = vmatprep.subr.mxu0 %v2725
  %2917 = vmatpush1.msra.mxu0 %v2724
  %2918 = vmatprep.subr.mxu0 %v2731
  %2919 = vmatpush1.msra.mxu0 %v2730
  %2920 = vmatprep.subr.mxu0 %v2737
  %2921 = vmatpush1.msra.mxu0 %v2736
  %2922 = vmatprep.subr.mxu0 %v2743
  %2923 = vmatpush1.msra.mxu0 %v2742
  %2924 = vmatprep.mubr.f32.mxu0 %v2786
  %2925 = vmatmul.mubr.f32.gmra.mrb[0].mxu0 %v2785
  %v2926 = vpop.f32.mrb[0].mxu0
  %v2927 = vadd.f32 %v2759, %v2926
  %v2928 = vpop.f32.mrb[0].mxu0
  %v2929 = vadd.f32 %v2763, %v2928
  %2930 = vdwg.mxu0
  %2931 = vmatprep.subr.mxu0 %v2559
  %2932 = vmatpush1.msra.mxu0 %v2558
  %2933 = vmatprep.subr.mxu0 %v2565
  %2934 = vmatpush1.msra.mxu0 %v2564
  %2935 = vmatprep.subr.mxu0 %v2571
  %2936 = vmatpush1.msra.mxu0 %v2570
  %2937 = vmatprep.subr.mxu0 %v2577
  %2938 = vmatpush1.msra.mxu0 %v2576
  %2939 = vmatprep.subr.mxu0 %v2583
  %2940 = vmatpush1.msra.mxu0 %v2582
  %2941 = vmatprep.subr.mxu0 %v2589
  %2942 = vmatpush1.msra.mxu0 %v2588
  %2943 = vmatprep.subr.mxu0 %v2595
  %2944 = vmatpush1.msra.mxu0 %v2594
  %2945 = vmatprep.subr.mxu0 %v2601
  %2946 = vmatpush1.msra.mxu0 %v2600
  %2947 = vmatprep.subr.mxu0 %v2607
  %2948 = vmatpush1.msra.mxu0 %v2606
  %2949 = vmatprep.subr.mxu0 %v2613
  %2950 = vmatpush1.msra.mxu0 %v2612
  %2951 = vmatprep.subr.mxu0 %v2619
  %2952 = vmatpush1.msra.mxu0 %v2618
  %2953 = vmatprep.subr.mxu0 %v2625
  %2954 = vmatpush1.msra.mxu0 %v2624
  %2955 = vmatprep.subr.mxu0 %v2631
  %2956 = vmatpush1.msra.mxu0 %v2630
  %2957 = vmatprep.subr.mxu0 %v2637
  %2958 = vmatpush1.msra.mxu0 %v2636
  %2959 = vmatprep.subr.mxu0 %v2643
  %2960 = vmatpush1.msra.mxu0 %v2642
  %2961 = vmatprep.subr.mxu0 %v2649
  %2962 = vmatpush1.msra.mxu0 %v2648
  %2963 = vmatprep.subr.mxu0 %v2655
  %2964 = vmatpush1.msra.mxu0 %v2654
  %2965 = vmatprep.subr.mxu0 %v2661
  %2966 = vmatpush1.msra.mxu0 %v2660
  %2967 = vmatprep.subr.mxu0 %v2667
  %2968 = vmatpush1.msra.mxu0 %v2666
  %2969 = vmatprep.subr.mxu0 %v2673
  %2970 = vmatpush1.msra.mxu0 %v2672
  %2971 = vmatprep.subr.mxu0 %v2679
  %2972 = vmatpush1.msra.mxu0 %v2678
  %2973 = vmatprep.subr.mxu0 %v2685
  %2974 = vmatpush1.msra.mxu0 %v2684
  %2975 = vmatprep.subr.mxu0 %v2691
  %2976 = vmatpush1.msra.mxu0 %v2690
  %2977 = vmatprep.subr.mxu0 %v2697
  %2978 = vmatpush1.msra.mxu0 %v2696
  %2979 = vmatprep.subr.mxu0 %v2703
  %2980 = vmatpush1.msra.mxu0 %v2702
  %2981 = vmatprep.subr.mxu0 %v2709
  %2982 = vmatpush1.msra.mxu0 %v2708
  %2983 = vmatprep.subr.mxu0 %v2715
  %2984 = vmatpush1.msra.mxu0 %v2714
  %2985 = vmatprep.subr.mxu0 %v2721
  %2986 = vmatpush1.msra.mxu0 %v2720
  %2987 = vmatprep.subr.mxu0 %v2727
  %2988 = vmatpush1.msra.mxu0 %v2726
  %2989 = vmatprep.subr.mxu0 %v2733
  %2990 = vmatpush1.msra.mxu0 %v2732
  %2991 = vmatprep.subr.mxu0 %v2739
  %2992 = vmatpush1.msra.mxu0 %v2738
  %2993 = vmatprep.subr.mxu0 %v2745
  %2994 = vmatpush1.msra.mxu0 %v2744
  %2995 = vmatprep.mubr.f32.mxu0 %v2786
  %2996 = vmatmul.mubr.f32.gmra.mrb[0].mxu0 %v2785
  %v2997 = vpop.f32.mrb[0].mxu0
  %v2998 = vadd.f32 %v2767, %v2997
  %v2999 = vpop.f32.mrb[0].mxu0
  %v3000 = vadd.f32 %v2771, %v2999
  %3001 = vdwg.mxu0
  %v3004 = vcombine.low %v2856, %v2858
  %v3006 = vunpack.c.l.s4 1983009808
  %v3007 = vunpack.c.0.s8 %v3006
  %v3008 = vlaneseq
  %v3009 = vshrl.u32 %v3008, 7
  %v3010 = vsub.s32 %v3007, %v3009
  %v3011 = vrot.slane %v3004, %v3010
  %v3013 = vadd.f32 %v2552, %v3011
  %v3014 = vxor.u32 %v3013, 2147483648
  %v3015 = vmul.f32 %v3014, 1.442695
  %v3016 = vpow.pop %v3015
  %v3017 = vadd.f32 %v3016, 1.0
  %v3018 = vrcp.pop %v3017
  %v3019 = vmul.f32 1.0, %v3018
  %v3021 = vrot.slane %v2552, 4
  %v3025 = vcombine.low %v2927, %v2929
  %v3027 = vunpack.c.l.s4 1983009808
  %v3028 = vunpack.c.0.s8 %v3027
  %v3029 = vlaneseq
  %v3030 = vshrl.u32 %v3029, 7
  %v3031 = vsub.s32 %v3028, %v3030
  %v3032 = vrot.slane %v3025, %v3031
  %v3034 = vadd.f32 %v3021, %v3032
  %v3035 = vxor.u32 %v3034, 2147483648
  %v3036 = vmul.f32 %v3035, 1.442695
  %v3037 = vpow.pop %v3036
  %v3038 = vadd.f32 %v3037, 1.0
  %v3039 = vrcp.pop %v3038
  %v3040 = vmul.f32 1.0, %v3039
  %v3043 = vcombine.low %v2998, %v3000
  %v3045 = vunpack.c.l.s4 1983009808
  %v3046 = vunpack.c.0.s8 %v3045
  %v3047 = vlaneseq
  %v3048 = vshrl.u32 %v3047, 7
  %v3049 = vsub.s32 %v3046, %v3048
  %v3050 = vrot.slane %v3043, %v3049
  %v3052 = vmul.f32 %v3019, %v3050
  %v3053 = vadd.f32 %v2553, %v3052
  %v3054 = vtanh.pop %v3053
  %v3055 = vsub.f32 1.0, %v3040
  %v3056 = vmul.f32 %v3055, %v3054
  %v3057 = vmul.f32 %v3040, %v2548
  %v3058 = vadd.f32 %v3056, %v3057
  %s3059 = scalar_lea.vmem %s3, 20
  %3060 = vst [vmem:[%s3059] sm:$0xf] %v3058
  %s3061 = scalar_lea.vmem %s0, 72
  %v3062 = vld [vmem:[%s3061] sm:$0xff]
  %v3063 = vld [vmem:[%s3061 + $0x8] sm:$0xf]
  %v3064 = vld [vmem:[%s1] sm:$0xff]
  %v3065 = vld [vmem:[%s1 + $0x8] sm:$0xff]
  %v3066 = vld [vmem:[%s1 + $0x10] sm:$0xff]
  %v3067 = vld [vmem:[%s1 + $0x18] sm:$0xff]
  %v3068 = vld [vmem:[%s1 + $0x20] sm:$0xff]
  %v3069 = vld [vmem:[%s1 + $0x28] sm:$0xff]
  %v3070 = vld [vmem:[%s1 + $0x30] sm:$0xff]
  %v3071 = vld [vmem:[%s1 + $0x38] sm:$0xff]
  %v3072 = vld [vmem:[%s1 + $0x40] sm:$0xff]
  %v3073 = vld [vmem:[%s1 + $0x48] sm:$0xff]
  %v3074 = vld [vmem:[%s1 + $0x50] sm:$0xff]
  %v3075 = vld [vmem:[%s1 + $0x58] sm:$0xff]
  %v3076 = vld [vmem:[%s1 + $0x60] sm:$0xff]
  %v3077 = vld [vmem:[%s1 + $0x68] sm:$0xff]
  %v3078 = vld [vmem:[%s1 + $0x70] sm:$0xff]
  %v3079 = vld [vmem:[%s1 + $0x78] sm:$0xff]
  %v3080 = vld [vmem:[%s1 + $0x80] sm:$0xff]
  %v3081 = vld [vmem:[%s1 + $0x88] sm:$0xff]
  %v3082 = vld [vmem:[%s1 + $0x90] sm:$0xff]
  %v3083 = vld [vmem:[%s1 + $0x98] sm:$0xff]
  %v3084 = vld [vmem:[%s1 + $0xa0] sm:$0xff]
  %v3085 = vld [vmem:[%s1 + $0xa8] sm:$0xff]
  %v3086 = vld [vmem:[%s1 + $0xb0] sm:$0xff]
  %v3087 = vld [vmem:[%s1 + $0xb8] sm:$0xff]
  %v3088 = vld [vmem:[%s1 + $0xc0] sm:$0xff]
  %v3089 = vld [vmem:[%s1 + $0xc8] sm:$0xff]
  %v3090 = vld [vmem:[%s1 + $0xd0] sm:$0xff]
  %v3091 = vld [vmem:[%s1 + $0xd8] sm:$0xff]
  %v3092 = vld [vmem:[%s1 + $0xe0] sm:$0xff]
  %v3093 = vld [vmem:[%s1 + $0xe8] sm:$0xff]
  %v3094 = vld [vmem:[%s1 + $0xf0] sm:$0xff]
  %v3095 = vld [vmem:[%s1 + $0xf8] sm:$0xff]
  %v3096 = vld [vmem:[%s1 + $0x100] sm:$0xff]
  %v3097 = vld [vmem:[%s1 + $0x108] sm:$0xff]
  %v3098 = vld [vmem:[%s1 + $0x110] sm:$0xff]
  %v3099 = vld [vmem:[%s1 + $0x118] sm:$0xff]
  %v3100 = vld [vmem:[%s1 + $0x120] sm:$0xff]
  %v3101 = vld [vmem:[%s1 + $0x128] sm:$0xff]
  %v3102 = vld [vmem:[%s1 + $0x130] sm:$0xff]
  %v3103 = vld [vmem:[%s1 + $0x138] sm:$0xff]
  %v3104 = vld [vmem:[%s1 + $0x140] sm:$0xff]
  %v3105 = vld [vmem:[%s1 + $0x148] sm:$0xff]
  %v3106 = vld [vmem:[%s1 + $0x150] sm:$0xff]
  %v3107 = vld [vmem:[%s1 + $0x158] sm:$0xff]
  %v3108 = vld [vmem:[%s1 + $0x160] sm:$0xff]
  %v3109 = vld [vmem:[%s1 + $0x168] sm:$0xff]
  %v3110 = vld [vmem:[%s1 + $0x170] sm:$0xff]
  %v3111 = vld [vmem:[%s1 + $0x178] sm:$0xff]
  %v3112 = vld [vmem:[%s1 + $0x180] sm:$0xff]
  %v3113 = vld [vmem:[%s1 + $0x188] sm:$0xff]
  %v3114 = vld [vmem:[%s1 + $0x190] sm:$0xff]
  %v3115 = vld [vmem:[%s1 + $0x198] sm:$0xff]
  %v3116 = vld [vmem:[%s1 + $0x1a0] sm:$0xff]
  %v3117 = vld [vmem:[%s1 + $0x1a8] sm:$0xff]
  %v3118 = vld [vmem:[%s1 + $0x1b0] sm:$0xff]
  %v3119 = vld [vmem:[%s1 + $0x1b8] sm:$0xff]
  %v3120 = vld [vmem:[%s1 + $0x1c0] sm:$0xff]
  %v3121 = vld [vmem:[%s1 + $0x1c8] sm:$0xff]
  %v3122 = vld [vmem:[%s1 + $0x1d0] sm:$0xff]
  %v3123 = vld [vmem:[%s1 + $0x1d8] sm:$0xff]
  %v3124 = vld [vmem:[%s1 + $0x1e0] sm:$0xff]
  %v3125 = vld [vmem:[%s1 + $0x1e8] sm:$0xff]
  %v3126 = vld [vmem:[%s1 + $0x1f0] sm:$0xff]
  %v3127 = vld [vmem:[%s1 + $0x1f8] sm:$0xff]
  %v3128 = vld [vmem:[%s1 + $0x200] sm:$0xff]
  %v3129 = vld [vmem:[%s1 + $0x208] sm:$0xff]
  %v3130 = vld [vmem:[%s1 + $0x210] sm:$0xff]
  %v3131 = vld [vmem:[%s1 + $0x218] sm:$0xff]
  %v3132 = vld [vmem:[%s1 + $0x220] sm:$0xff]
  %v3133 = vld [vmem:[%s1 + $0x228] sm:$0xff]
  %v3134 = vld [vmem:[%s1 + $0x230] sm:$0xff]
  %v3135 = vld [vmem:[%s1 + $0x238] sm:$0xff]
  %v3136 = vld [vmem:[%s1 + $0x240] sm:$0xff]
  %v3137 = vld [vmem:[%s1 + $0x248] sm:$0xff]
  %v3138 = vld [vmem:[%s1 + $0x250] sm:$0xff]
  %v3139 = vld [vmem:[%s1 + $0x258] sm:$0xff]
  %v3140 = vld [vmem:[%s1 + $0x260] sm:$0xff]
  %v3141 = vld [vmem:[%s1 + $0x268] sm:$0xff]
  %v3142 = vld [vmem:[%s1 + $0x270] sm:$0xff]
  %v3143 = vld [vmem:[%s1 + $0x278] sm:$0xff]
  %v3144 = vld [vmem:[%s1 + $0x280] sm:$0xff]
  %v3145 = vld [vmem:[%s1 + $0x288] sm:$0xff]
  %v3146 = vld [vmem:[%s1 + $0x290] sm:$0xff]
  %v3147 = vld [vmem:[%s1 + $0x298] sm:$0xff]
  %v3148 = vld [vmem:[%s1 + $0x2a0] sm:$0xff]
  %v3149 = vld [vmem:[%s1 + $0x2a8] sm:$0xff]
  %v3150 = vld [vmem:[%s1 + $0x2b0] sm:$0xff]
  %v3151 = vld [vmem:[%s1 + $0x2b8] sm:$0xff]
  %v3152 = vld [vmem:[%s1 + $0x2c0] sm:$0xff]
  %v3153 = vld [vmem:[%s1 + $0x2c8] sm:$0xff]
  %v3154 = vld [vmem:[%s1 + $0x2d0] sm:$0xff]
  %v3155 = vld [vmem:[%s1 + $0x2d8] sm:$0xff]
  %v3156 = vld [vmem:[%s1 + $0x2e0] sm:$0xff]
  %v3157 = vld [vmem:[%s1 + $0x2e8] sm:$0xff]
  %v3158 = vld [vmem:[%s1 + $0x2f0] sm:$0xff]
  %v3159 = vld [vmem:[%s1 + $0x2f8] sm:$0xff]
  %v3160 = vld [vmem:[%s1 + $0x300] sm:$0xff]
  %v3161 = vld [vmem:[%s1 + $0x308] sm:$0xff]
  %v3162 = vld [vmem:[%s1 + $0x310] sm:$0xff]
  %v3163 = vld [vmem:[%s1 + $0x318] sm:$0xff]
  %v3164 = vld [vmem:[%s1 + $0x320] sm:$0xff]
  %v3165 = vld [vmem:[%s1 + $0x328] sm:$0xff]
  %v3166 = vld [vmem:[%s1 + $0x330] sm:$0xff]
  %v3167 = vld [vmem:[%s1 + $0x338] sm:$0xff]
  %v3168 = vld [vmem:[%s1 + $0x340] sm:$0xff]
  %v3169 = vld [vmem:[%s1 + $0x348] sm:$0xff]
  %v3170 = vld [vmem:[%s1 + $0x350] sm:$0xff]
  %v3171 = vld [vmem:[%s1 + $0x358] sm:$0xff]
  %v3172 = vld [vmem:[%s1 + $0x360] sm:$0xff]
  %v3173 = vld [vmem:[%s1 + $0x368] sm:$0xff]
  %v3174 = vld [vmem:[%s1 + $0x370] sm:$0xff]
  %v3175 = vld [vmem:[%s1 + $0x378] sm:$0xff]
  %v3176 = vld [vmem:[%s1 + $0x380] sm:$0xff]
  %v3177 = vld [vmem:[%s1 + $0x388] sm:$0xff]
  %v3178 = vld [vmem:[%s1 + $0x390] sm:$0xff]
  %v3179 = vld [vmem:[%s1 + $0x398] sm:$0xff]
  %v3180 = vld [vmem:[%s1 + $0x3a0] sm:$0xff]
  %v3181 = vld [vmem:[%s1 + $0x3a8] sm:$0xff]
  %v3182 = vld [vmem:[%s1 + $0x3b0] sm:$0xff]
  %v3183 = vld [vmem:[%s1 + $0x3b8] sm:$0xff]
  %v3184 = vld [vmem:[%s1 + $0x3c0] sm:$0xff]
  %v3185 = vld [vmem:[%s1 + $0x3c8] sm:$0xff]
  %v3186 = vld [vmem:[%s1 + $0x3d0] sm:$0xff]
  %v3187 = vld [vmem:[%s1 + $0x3d8] sm:$0xff]
  %v3188 = vld [vmem:[%s1 + $0x3e0] sm:$0xff]
  %v3189 = vld [vmem:[%s1 + $0x3e8] sm:$0xff]
  %v3190 = vld [vmem:[%s1 + $0x3f0] sm:$0xff]
  %v3191 = vld [vmem:[%s1 + $0x3f8] sm:$0xff]
  %v3192 = vld [vmem:[%s1 + $0x400] sm:$0xff]
  %v3193 = vld [vmem:[%s1 + $0x408] sm:$0xff]
  %v3194 = vld [vmem:[%s1 + $0x410] sm:$0xff]
  %v3195 = vld [vmem:[%s1 + $0x418] sm:$0xff]
  %v3196 = vld [vmem:[%s1 + $0x420] sm:$0xff]
  %v3197 = vld [vmem:[%s1 + $0x428] sm:$0xff]
  %v3198 = vld [vmem:[%s1 + $0x430] sm:$0xff]
  %v3199 = vld [vmem:[%s1 + $0x438] sm:$0xff]
  %v3200 = vld [vmem:[%s1 + $0x440] sm:$0xff]
  %v3201 = vld [vmem:[%s1 + $0x448] sm:$0xff]
  %v3202 = vld [vmem:[%s1 + $0x450] sm:$0xff]
  %v3203 = vld [vmem:[%s1 + $0x458] sm:$0xff]
  %v3204 = vld [vmem:[%s1 + $0x460] sm:$0xff]
  %v3205 = vld [vmem:[%s1 + $0x468] sm:$0xff]
  %v3206 = vld [vmem:[%s1 + $0x470] sm:$0xff]
  %v3207 = vld [vmem:[%s1 + $0x478] sm:$0xff]
  %v3208 = vld [vmem:[%s1 + $0x480] sm:$0xff]
  %v3209 = vld [vmem:[%s1 + $0x488] sm:$0xff]
  %v3210 = vld [vmem:[%s1 + $0x490] sm:$0xff]
  %v3211 = vld [vmem:[%s1 + $0x498] sm:$0xff]
  %v3212 = vld [vmem:[%s1 + $0x4a0] sm:$0xff]
  %v3213 = vld [vmem:[%s1 + $0x4a8] sm:$0xff]
  %v3214 = vld [vmem:[%s1 + $0x4b0] sm:$0xff]
  %v3215 = vld [vmem:[%s1 + $0x4b8] sm:$0xff]
  %v3216 = vld [vmem:[%s1 + $0x4c0] sm:$0xff]
  %v3217 = vld [vmem:[%s1 + $0x4c8] sm:$0xff]
  %v3218 = vld [vmem:[%s1 + $0x4d0] sm:$0xff]
  %v3219 = vld [vmem:[%s1 + $0x4d8] sm:$0xff]
  %v3220 = vld [vmem:[%s1 + $0x4e0] sm:$0xff]
  %v3221 = vld [vmem:[%s1 + $0x4e8] sm:$0xff]
  %v3222 = vld [vmem:[%s1 + $0x4f0] sm:$0xff]
  %v3223 = vld [vmem:[%s1 + $0x4f8] sm:$0xff]
  %v3224 = vld [vmem:[%s1 + $0x500] sm:$0xff]
  %v3225 = vld [vmem:[%s1 + $0x508] sm:$0xff]
  %v3226 = vld [vmem:[%s1 + $0x510] sm:$0xff]
  %v3227 = vld [vmem:[%s1 + $0x518] sm:$0xff]
  %v3228 = vld [vmem:[%s1 + $0x520] sm:$0xff]
  %v3229 = vld [vmem:[%s1 + $0x528] sm:$0xff]
  %v3230 = vld [vmem:[%s1 + $0x530] sm:$0xff]
  %v3231 = vld [vmem:[%s1 + $0x538] sm:$0xff]
  %v3232 = vld [vmem:[%s1 + $0x540] sm:$0xff]
  %v3233 = vld [vmem:[%s1 + $0x548] sm:$0xff]
  %v3234 = vld [vmem:[%s1 + $0x550] sm:$0xff]
  %v3235 = vld [vmem:[%s1 + $0x558] sm:$0xff]
  %v3236 = vld [vmem:[%s1 + $0x560] sm:$0xff]
  %v3237 = vld [vmem:[%s1 + $0x568] sm:$0xff]
  %v3238 = vld [vmem:[%s1 + $0x570] sm:$0xff]
  %v3239 = vld [vmem:[%s1 + $0x578] sm:$0xff]
  %v3240 = vld [vmem:[%s1 + $0x580] sm:$0xff]
  %v3241 = vld [vmem:[%s1 + $0x588] sm:$0xff]
  %v3242 = vld [vmem:[%s1 + $0x590] sm:$0xff]
  %v3243 = vld [vmem:[%s1 + $0x598] sm:$0xff]
  %v3244 = vld [vmem:[%s1 + $0x5a0] sm:$0xff]
  %v3245 = vld [vmem:[%s1 + $0x5a8] sm:$0xff]
  %v3246 = vld [vmem:[%s1 + $0x5b0] sm:$0xff]
  %v3247 = vld [vmem:[%s1 + $0x5b8] sm:$0xff]
  %v3248 = vld [vmem:[%s1 + $0x5c0] sm:$0xff]
  %v3249 = vld [vmem:[%s1 + $0x5c8] sm:$0xff]
  %v3250 = vld [vmem:[%s1 + $0x5d0] sm:$0xff]
  %v3251 = vld [vmem:[%s1 + $0x5d8] sm:$0xff]
  %v3252 = vld [vmem:[%s1 + $0x5e0] sm:$0xff]
  %v3253 = vld [vmem:[%s1 + $0x5e8] sm:$0xff]
  %v3254 = vld [vmem:[%s1 + $0x5f0] sm:$0xff]
  %v3255 = vld [vmem:[%s1 + $0x5f8] sm:$0xff]
  %v3256 = vld [vmem:[%s2] sm:$0x3f]
  %v3258 = vlaneseq
  %v3259 = vshrl.u32 %v3258, 7
  %v3260 = vsub.s32 0, %v3259
  %v3261 = vrot.slane %v3256, %v3260
  %v3262 = vlaneseq
  %v3263 = vshrl.u32 %v3262, 7
  %v3264 = vsub.s32 1, %v3263
  %v3265 = vrot.slane %v3256, %v3264
  %v3266 = vlaneseq
  %v3267 = vshrl.u32 %v3266, 7
  %v3268 = vsub.s32 2, %v3267
  %v3269 = vrot.slane %v3256, %v3268
  %v3270 = vlaneseq
  %v3271 = vshrl.u32 %v3270, 7
  %v3272 = vsub.s32 3, %v3271
  %v3273 = vrot.slane %v3256, %v3272
  %v3274 = vlaneseq
  %v3275 = vshrl.u32 %v3274, 7
  %v3276 = vsub.s32 4, %v3275
  %v3277 = vrot.slane %v3256, %v3276
  %v3278 = vlaneseq
  %v3279 = vshrl.u32 %v3278, 7
  %v3280 = vsub.s32 5, %v3279
  %v3281 = vrot.slane %v3256, %v3280
  %v3290 = vunpack.c.l.s4 1983009808
  %v3291 = vunpack.c.0.s8 %v3290
  %v3292 = vlaneseq
  %v3293 = vshrl.u32 %v3292, 7
  %v3294 = vsub.s32 %v3291, %v3293
  %v3295 = vrot.slane %v3058, %v3294
  %v3296 = vcombine.high %v3295, %v3295
  %3299 = vmatprep.subr.mxu0 %v3065
  %3300 = vmatpush1.msra.mxu0 %v3064
  %3301 = vmatprep.subr.mxu0 %v3071
  %3302 = vmatpush1.msra.mxu0 %v3070
  %3303 = vmatprep.subr.mxu0 %v3077
  %3304 = vmatpush1.msra.mxu0 %v3076
  %3305 = vmatprep.subr.mxu0 %v3083
  %3306 = vmatpush1.msra.mxu0 %v3082
  %3307 = vmatprep.subr.mxu0 %v3089
  %3308 = vmatpush1.msra.mxu0 %v3088
  %3309 = vmatprep.subr.mxu0 %v3095
  %3310 = vmatpush1.msra.mxu0 %v3094
  %3311 = vmatprep.subr.mxu0 %v3101
  %3312 = vmatpush1.msra.mxu0 %v3100
  %3313 = vmatprep.subr.mxu0 %v3107
  %3314 = vmatpush1.msra.mxu0 %v3106
  %3315 = vmatprep.subr.mxu0 %v3113
  %3316 = vmatpush1.msra.mxu0 %v3112
  %3317 = vmatprep.subr.mxu0 %v3119
  %3318 = vmatpush1.msra.mxu0 %v3118
  %3319 = vmatprep.subr.mxu0 %v3125
  %3320 = vmatpush1.msra.mxu0 %v3124
  %3321 = vmatprep.subr.mxu0 %v3131
  %3322 = vmatpush1.msra.mxu0 %v3130
  %3323 = vmatprep.subr.mxu0 %v3137
  %3324 = vmatpush1.msra.mxu0 %v3136
  %3325 = vmatprep.subr.mxu0 %v3143
  %3326 = vmatpush1.msra.mxu0 %v3142
  %3327 = vmatprep.subr.mxu0 %v3149
  %3328 = vmatpush1.msra.mxu0 %v3148
  %3329 = vmatprep.subr.mxu0 %v3155
  %3330 = vmatpush1.msra.mxu0 %v3154
  %3331 = vmatprep.subr.mxu0 %v3161
  %3332 = vmatpush1.msra.mxu0 %v3160
  %3333 = vmatprep.subr.mxu0 %v3167
  %3334 = vmatpush1.msra.mxu0 %v3166
  %3335 = vmatprep.subr.mxu0 %v3173
  %3336 = vmatpush1.msra.mxu0 %v3172
  %3337 = vmatprep.subr.mxu0 %v3179
  %3338 = vmatpush1.msra.mxu0 %v3178
  %3339 = vmatprep.subr.mxu0 %v3185
  %3340 = vmatpush1.msra.mxu0 %v3184
  %3341 = vmatprep.subr.mxu0 %v3191
  %3342 = vmatpush1.msra.mxu0 %v3190
  %3343 = vmatprep.subr.mxu0 %v3197
  %3344 = vmatpush1.msra.mxu0 %v3196
  %3345 = vmatprep.subr.mxu0 %v3203
  %3346 = vmatpush1.msra.mxu0 %v3202
  %3347 = vmatprep.subr.mxu0 %v3209
  %3348 = vmatpush1.msra.mxu0 %v3208
  %3349 = vmatprep.subr.mxu0 %v3215
  %3350 = vmatpush1.msra.mxu0 %v3214
  %3351 = vmatprep.subr.mxu0 %v3221
  %3352 = vmatpush1.msra.mxu0 %v3220
  %3353 = vmatprep.subr.mxu0 %v3227
  %3354 = vmatpush1.msra.mxu0 %v3226
  %3355 = vmatprep.subr.mxu0 %v3233
  %3356 = vmatpush1.msra.mxu0 %v3232
  %3357 = vmatprep.subr.mxu0 %v3239
  %3358 = vmatpush1.msra.mxu0 %v3238
  %3359 = vmatprep.subr.mxu0 %v3245
  %3360 = vmatpush1.msra.mxu0 %v3244
  %3361 = vmatprep.subr.mxu0 %v3251
  %3362 = vmatpush1.msra.mxu0 %v3250
  %3363 = vmatprep.mubr.f32.mxu0 %v3296
  %3364 = vmatmul.mubr.f32.gmra.mrb[0].mxu0 %v3295
  %v3365 = vpop.f32.mrb[0].mxu0
  %v3366 = vadd.f32 %v3261, %v3365
  %v3367 = vpop.f32.mrb[0].mxu0
  %v3368 = vadd.f32 %v3265, %v3367
  %3369 = vdwg.mxu0
  %3370 = vmatprep.subr.mxu0 %v3067
  %3371 = vmatpush1.msra.mxu0 %v3066
  %3372 = vmatprep.subr.mxu0 %v3073
  %3373 = vmatpush1.msra.mxu0 %v3072
  %3374 = vmatprep.subr.mxu0 %v3079
  %3375 = vmatpush1.msra.mxu0 %v3078
  %3376 = vmatprep.subr.mxu0 %v3085
  %3377 = vmatpush1.msra.mxu0 %v3084
  %3378 = vmatprep.subr.mxu0 %v3091
  %3379 = vmatpush1.msra.mxu0 %v3090
  %3380 = vmatprep.subr.mxu0 %v3097
  %3381 = vmatpush1.msra.mxu0 %v3096
  %3382 = vmatprep.subr.mxu0 %v3103
  %3383 = vmatpush1.msra.mxu0 %v3102
  %3384 = vmatprep.subr.mxu0 %v3109
  %3385 = vmatpush1.msra.mxu0 %v3108
  %3386 = vmatprep.subr.mxu0 %v3115
  %3387 = vmatpush1.msra.mxu0 %v3114
  %3388 = vmatprep.subr.mxu0 %v3121
  %3389 = vmatpush1.msra.mxu0 %v3120
  %3390 = vmatprep.subr.mxu0 %v3127
  %3391 = vmatpush1.msra.mxu0 %v3126
  %3392 = vmatprep.subr.mxu0 %v3133
  %3393 = vmatpush1.msra.mxu0 %v3132
  %3394 = vmatprep.subr.mxu0 %v3139
  %3395 = vmatpush1.msra.mxu0 %v3138
  %3396 = vmatprep.subr.mxu0 %v3145
  %3397 = vmatpush1.msra.mxu0 %v3144
  %3398 = vmatprep.subr.mxu0 %v3151
  %3399 = vmatpush1.msra.mxu0 %v3150
  %3400 = vmatprep.subr.mxu0 %v3157
  %3401 = vmatpush1.msra.mxu0 %v3156
  %3402 = vmatprep.subr.mxu0 %v3163
  %3403 = vmatpush1.msra.mxu0 %v3162
  %3404 = vmatprep.subr.mxu0 %v3169
  %3405 = vmatpush1.msra.mxu0 %v3168
  %3406 = vmatprep.subr.mxu0 %v3175
  %3407 = vmatpush1.msra.mxu0 %v3174
  %3408 = vmatprep.subr.mxu0 %v3181
  %3409 = vmatpush1.msra.mxu0 %v3180
  %3410 = vmatprep.subr.mxu0 %v3187
  %3411 = vmatpush1.msra.mxu0 %v3186
  %3412 = vmatprep.subr.mxu0 %v3193
  %3413 = vmatpush1.msra.mxu0 %v3192
  %3414 = vmatprep.subr.mxu0 %v3199
  %3415 = vmatpush1.msra.mxu0 %v3198
  %3416 = vmatprep.subr.mxu0 %v3205
  %3417 = vmatpush1.msra.mxu0 %v3204
  %3418 = vmatprep.subr.mxu0 %v3211
  %3419 = vmatpush1.msra.mxu0 %v3210
  %3420 = vmatprep.subr.mxu0 %v3217
  %3421 = vmatpush1.msra.mxu0 %v3216
  %3422 = vmatprep.subr.mxu0 %v3223
  %3423 = vmatpush1.msra.mxu0 %v3222
  %3424 = vmatprep.subr.mxu0 %v3229
  %3425 = vmatpush1.msra.mxu0 %v3228
  %3426 = vmatprep.subr.mxu0 %v3235
  %3427 = vmatpush1.msra.mxu0 %v3234
  %3428 = vmatprep.subr.mxu0 %v3241
  %3429 = vmatpush1.msra.mxu0 %v3240
  %3430 = vmatprep.subr.mxu0 %v3247
  %3431 = vmatpush1.msra.mxu0 %v3246
  %3432 = vmatprep.subr.mxu0 %v3253
  %3433 = vmatpush1.msra.mxu0 %v3252
  %3434 = vmatprep.mubr.f32.mxu0 %v3296
  %3435 = vmatmul.mubr.f32.gmra.mrb[0].mxu0 %v3295
  %v3436 = vpop.f32.mrb[0].mxu0
  %v3437 = vadd.f32 %v3269, %v3436
  %v3438 = vpop.f32.mrb[0].mxu0
  %v3439 = vadd.f32 %v3273, %v3438
  %3440 = vdwg.mxu0
  %3441 = vmatprep.subr.mxu0 %v3069
  %3442 = vmatpush1.msra.mxu0 %v3068
  %3443 = vmatprep.subr.mxu0 %v3075
  %3444 = vmatpush1.msra.mxu0 %v3074
  %3445 = vmatprep.subr.mxu0 %v3081
  %3446 = vmatpush1.msra.mxu0 %v3080
  %3447 = vmatprep.subr.mxu0 %v3087
  %3448 = vmatpush1.msra.mxu0 %v3086
  %3449 = vmatprep.subr.mxu0 %v3093
  %3450 = vmatpush1.msra.mxu0 %v3092
  %3451 = vmatprep.subr.mxu0 %v3099
  %3452 = vmatpush1.msra.mxu0 %v3098
  %3453 = vmatprep.subr.mxu0 %v3105
  %3454 = vmatpush1.msra.mxu0 %v3104
  %3455 = vmatprep.subr.mxu0 %v3111
  %3456 = vmatpush1.msra.mxu0 %v3110
  %3457 = vmatprep.subr.mxu0 %v3117
  %3458 = vmatpush1.msra.mxu0 %v3116
  %3459 = vmatprep.subr.mxu0 %v3123
  %3460 = vmatpush1.msra.mxu0 %v3122
  %3461 = vmatprep.subr.mxu0 %v3129
  %3462 = vmatpush1.msra.mxu0 %v3128
  %3463 = vmatprep.subr.mxu0 %v3135
  %3464 = vmatpush1.msra.mxu0 %v3134
  %3465 = vmatprep.subr.mxu0 %v3141
  %3466 = vmatpush1.msra.mxu0 %v3140
  %3467 = vmatprep.subr.mxu0 %v3147
  %3468 = vmatpush1.msra.mxu0 %v3146
  %3469 = vmatprep.subr.mxu0 %v3153
  %3470 = vmatpush1.msra.mxu0 %v3152
  %3471 = vmatprep.subr.mxu0 %v3159
  %3472 = vmatpush1.msra.mxu0 %v3158
  %3473 = vmatprep.subr.mxu0 %v3165
  %3474 = vmatpush1.msra.mxu0 %v3164
  %3475 = vmatprep.subr.mxu0 %v3171
  %3476 = vmatpush1.msra.mxu0 %v3170
  %3477 = vmatprep.subr.mxu0 %v3177
  %3478 = vmatpush1.msra.mxu0 %v3176
  %3479 = vmatprep.subr.mxu0 %v3183
  %3480 = vmatpush1.msra.mxu0 %v3182
  %3481 = vmatprep.subr.mxu0 %v3189
  %3482 = vmatpush1.msra.mxu0 %v3188
  %3483 = vmatprep.subr.mxu0 %v3195
  %3484 = vmatpush1.msra.mxu0 %v3194
  %3485 = vmatprep.subr.mxu0 %v3201
  %3486 = vmatpush1.msra.mxu0 %v3200
  %3487 = vmatprep.subr.mxu0 %v3207
  %3488 = vmatpush1.msra.mxu0 %v3206
  %3489 = vmatprep.subr.mxu0 %v3213
  %3490 = vmatpush1.msra.mxu0 %v3212
  %3491 = vmatprep.subr.mxu0 %v3219
  %3492 = vmatpush1.msra.mxu0 %v3218
  %3493 = vmatprep.subr.mxu0 %v3225
  %3494 = vmatpush1.msra.mxu0 %v3224
  %3495 = vmatprep.subr.mxu0 %v3231
  %3496 = vmatpush1.msra.mxu0 %v3230
  %3497 = vmatprep.subr.mxu0 %v3237
  %3498 = vmatpush1.msra.mxu0 %v3236
  %3499 = vmatprep.subr.mxu0 %v3243
  %3500 = vmatpush1.msra.mxu0 %v3242
  %3501 = vmatprep.subr.mxu0 %v3249
  %3502 = vmatpush1.msra.mxu0 %v3248
  %3503 = vmatprep.subr.mxu0 %v3255
  %3504 = vmatpush1.msra.mxu0 %v3254
  %3505 = vmatprep.mubr.f32.mxu0 %v3296
  %3506 = vmatmul.mubr.f32.gmra.mrb[0].mxu0 %v3295
  %v3507 = vpop.f32.mrb[0].mxu0
  %v3508 = vadd.f32 %v3277, %v3507
  %v3509 = vpop.f32.mrb[0].mxu0
  %v3510 = vadd.f32 %v3281, %v3509
  %3511 = vdwg.mxu0
  %v3514 = vcombine.low %v3366, %v3368
  %v3516 = vunpack.c.l.s4 1983009808
  %v3517 = vunpack.c.0.s8 %v3516
  %v3518 = vlaneseq
  %v3519 = vshrl.u32 %v3518, 7
  %v3520 = vsub.s32 %v3517, %v3519
  %v3521 = vrot.slane %v3514, %v3520
  %v3523 = vadd.f32 %v3062, %v3521
  %v3524 = vxor.u32 %v3523, 2147483648
  %v3525 = vmul.f32 %v3524, 1.442695
  %v3526 = vpow.pop %v3525
  %v3527 = vadd.f32 %v3526, 1.0
  %v3528 = vrcp.pop %v3527
  %v3529 = vmul.f32 1.0, %v3528
  %v3531 = vrot.slane %v3062, 4
  %v3535 = vcombine.low %v3437, %v3439
  %v3537 = vunpack.c.l.s4 1983009808
  %v3538 = vunpack.c.0.s8 %v3537
  %v3539 = vlaneseq
  %v3540 = vshrl.u32 %v3539, 7
  %v3541 = vsub.s32 %v3538, %v3540
  %v3542 = vrot.slane %v3535, %v3541
  %v3544 = vadd.f32 %v3531, %v3542
  %v3545 = vxor.u32 %v3544, 2147483648
  %v3546 = vmul.f32 %v3545, 1.442695
  %v3547 = vpow.pop %v3546
  %v3548 = vadd.f32 %v3547, 1.0
  %v3549 = vrcp.pop %v3548
  %v3550 = vmul.f32 1.0, %v3549
  %v3553 = vcombine.low %v3508, %v3510
  %v3555 = vunpack.c.l.s4 1983009808
  %v3556 = vunpack.c.0.s8 %v3555
  %v3557 = vlaneseq
  %v3558 = vshrl.u32 %v3557, 7
  %v3559 = vsub.s32 %v3556, %v3558
  %v3560 = vrot.slane %v3553, %v3559
  %v3562 = vmul.f32 %v3529, %v3560
  %v3563 = vadd.f32 %v3063, %v3562
  %v3564 = vtanh.pop %v3563
  %v3565 = vsub.f32 1.0, %v3550
  %v3566 = vmul.f32 %v3565, %v3564
  %v3567 = vmul.f32 %v3550, %v3058
  %v3568 = vadd.f32 %v3566, %v3567
  %s3569 = scalar_lea.vmem %s3, 24
  %3570 = vst [vmem:[%s3569] sm:$0xf] %v3568
  %s3571 = scalar_lea.vmem %s0, 84
  %v3572 = vld [vmem:[%s3571] sm:$0xff]
  %v3573 = vld [vmem:[%s3571 + $0x8] sm:$0xf]
  %v3574 = vld [vmem:[%s1] sm:$0xff]
  %v3575 = vld [vmem:[%s1 + $0x8] sm:$0xff]
  %v3576 = vld [vmem:[%s1 + $0x10] sm:$0xff]
  %v3577 = vld [vmem:[%s1 + $0x18] sm:$0xff]
  %v3578 = vld [vmem:[%s1 + $0x20] sm:$0xff]
  %v3579 = vld [vmem:[%s1 + $0x28] sm:$0xff]
  %v3580 = vld [vmem:[%s1 + $0x30] sm:$0xff]
  %v3581 = vld [vmem:[%s1 + $0x38] sm:$0xff]
  %v3582 = vld [vmem:[%s1 + $0x40] sm:$0xff]
  %v3583 = vld [vmem:[%s1 + $0x48] sm:$0xff]
  %v3584 = vld [vmem:[%s1 + $0x50] sm:$0xff]
  %v3585 = vld [vmem:[%s1 + $0x58] sm:$0xff]
  %v3586 = vld [vmem:[%s1 + $0x60] sm:$0xff]
  %v3587 = vld [vmem:[%s1 + $0x68] sm:$0xff]
  %v3588 = vld [vmem:[%s1 + $0x70] sm:$0xff]
  %v3589 = vld [vmem:[%s1 + $0x78] sm:$0xff]
  %v3590 = vld [vmem:[%s1 + $0x80] sm:$0xff]
  %v3591 = vld [vmem:[%s1 + $0x88] sm:$0xff]
  %v3592 = vld [vmem:[%s1 + $0x90] sm:$0xff]
  %v3593 = vld [vmem:[%s1 + $0x98] sm:$0xff]
  %v3594 = vld [vmem:[%s1 + $0xa0] sm:$0xff]
  %v3595 = vld [vmem:[%s1 + $0xa8] sm:$0xff]
  %v3596 = vld [vmem:[%s1 + $0xb0] sm:$0xff]
  %v3597 = vld [vmem:[%s1 + $0xb8] sm:$0xff]
  %v3598 = vld [vmem:[%s1 + $0xc0] sm:$0xff]
  %v3599 = vld [vmem:[%s1 + $0xc8] sm:$0xff]
  %v3600 = vld [vmem:[%s1 + $0xd0] sm:$0xff]
  %v3601 = vld [vmem:[%s1 + $0xd8] sm:$0xff]
  %v3602 = vld [vmem:[%s1 + $0xe0] sm:$0xff]
  %v3603 = vld [vmem:[%s1 + $0xe8] sm:$0xff]
  %v3604 = vld [vmem:[%s1 + $0xf0] sm:$0xff]
  %v3605 = vld [vmem:[%s1 + $0xf8] sm:$0xff]
  %v3606 = vld [vmem:[%s1 + $0x100] sm:$0xff]
  %v3607 = vld [vmem:[%s1 + $0x108] sm:$0xff]
  %v3608 = vld [vmem:[%s1 + $0x110] sm:$0xff]
  %v3609 = vld [vmem:[%s1 + $0x118] sm:$0xff]
  %v3610 = vld [vmem:[%s1 + $0x120] sm:$0xff]
  %v3611 = vld [vmem:[%s1 + $0x128] sm:$0xff]
  %v3612 = vld [vmem:[%s1 + $0x130] sm:$0xff]
  %v3613 = vld [vmem:[%s1 + $0x138] sm:$0xff]
  %v3614 = vld [vmem:[%s1 + $0x140] sm:$0xff]
  %v3615 = vld [vmem:[%s1 + $0x148] sm:$0xff]
  %v3616 = vld [vmem:[%s1 + $0x150] sm:$0xff]
  %v3617 = vld [vmem:[%s1 + $0x158] sm:$0xff]
  %v3618 = vld [vmem:[%s1 + $0x160] sm:$0xff]
  %v3619 = vld [vmem:[%s1 + $0x168] sm:$0xff]
  %v3620 = vld [vmem:[%s1 + $0x170] sm:$0xff]
  %v3621 = vld [vmem:[%s1 + $0x178] sm:$0xff]
  %v3622 = vld [vmem:[%s1 + $0x180] sm:$0xff]
  %v3623 = vld [vmem:[%s1 + $0x188] sm:$0xff]
  %v3624 = vld [vmem:[%s1 + $0x190] sm:$0xff]
  %v3625 = vld [vmem:[%s1 + $0x198] sm:$0xff]
  %v3626 = vld [vmem:[%s1 + $0x1a0] sm:$0xff]
  %v3627 = vld [vmem:[%s1 + $0x1a8] sm:$0xff]
  %v3628 = vld [vmem:[%s1 + $0x1b0] sm:$0xff]
  %v3629 = vld [vmem:[%s1 + $0x1b8] sm:$0xff]
  %v3630 = vld [vmem:[%s1 + $0x1c0] sm:$0xff]
  %v3631 = vld [vmem:[%s1 + $0x1c8] sm:$0xff]
  %v3632 = vld [vmem:[%s1 + $0x1d0] sm:$0xff]
  %v3633 = vld [vmem:[%s1 + $0x1d8] sm:$0xff]
  %v3634 = vld [vmem:[%s1 + $0x1e0] sm:$0xff]
  %v3635 = vld [vmem:[%s1 + $0x1e8] sm:$0xff]
  %v3636 = vld [vmem:[%s1 + $0x1f0] sm:$0xff]
  %v3637 = vld [vmem:[%s1 + $0x1f8] sm:$0xff]
  %v3638 = vld [vmem:[%s1 + $0x200] sm:$0xff]
  %v3639 = vld [vmem:[%s1 + $0x208] sm:$0xff]
  %v3640 = vld [vmem:[%s1 + $0x210] sm:$0xff]
  %v3641 = vld [vmem:[%s1 + $0x218] sm:$0xff]
  %v3642 = vld [vmem:[%s1 + $0x220] sm:$0xff]
  %v3643 = vld [vmem:[%s1 + $0x228] sm:$0xff]
  %v3644 = vld [vmem:[%s1 + $0x230] sm:$0xff]
  %v3645 = vld [vmem:[%s1 + $0x238] sm:$0xff]
  %v3646 = vld [vmem:[%s1 + $0x240] sm:$0xff]
  %v3647 = vld [vmem:[%s1 + $0x248] sm:$0xff]
  %v3648 = vld [vmem:[%s1 + $0x250] sm:$0xff]
  %v3649 = vld [vmem:[%s1 + $0x258] sm:$0xff]
  %v3650 = vld [vmem:[%s1 + $0x260] sm:$0xff]
  %v3651 = vld [vmem:[%s1 + $0x268] sm:$0xff]
  %v3652 = vld [vmem:[%s1 + $0x270] sm:$0xff]
  %v3653 = vld [vmem:[%s1 + $0x278] sm:$0xff]
  %v3654 = vld [vmem:[%s1 + $0x280] sm:$0xff]
  %v3655 = vld [vmem:[%s1 + $0x288] sm:$0xff]
  %v3656 = vld [vmem:[%s1 + $0x290] sm:$0xff]
  %v3657 = vld [vmem:[%s1 + $0x298] sm:$0xff]
  %v3658 = vld [vmem:[%s1 + $0x2a0] sm:$0xff]
  %v3659 = vld [vmem:[%s1 + $0x2a8] sm:$0xff]
  %v3660 = vld [vmem:[%s1 + $0x2b0] sm:$0xff]
  %v3661 = vld [vmem:[%s1 + $0x2b8] sm:$0xff]
  %v3662 = vld [vmem:[%s1 + $0x2c0] sm:$0xff]
  %v3663 = vld [vmem:[%s1 + $0x2c8] sm:$0xff]
  %v3664 = vld [vmem:[%s1 + $0x2d0] sm:$0xff]
  %v3665 = vld [vmem:[%s1 + $0x2d8] sm:$0xff]
  %v3666 = vld [vmem:[%s1 + $0x2e0] sm:$0xff]
  %v3667 = vld [vmem:[%s1 + $0x2e8] sm:$0xff]
  %v3668 = vld [vmem:[%s1 + $0x2f0] sm:$0xff]
  %v3669 = vld [vmem:[%s1 + $0x2f8] sm:$0xff]
  %v3670 = vld [vmem:[%s1 + $0x300] sm:$0xff]
  %v3671 = vld [vmem:[%s1 + $0x308] sm:$0xff]
  %v3672 = vld [vmem:[%s1 + $0x310] sm:$0xff]
  %v3673 = vld [vmem:[%s1 + $0x318] sm:$0xff]
  %v3674 = vld [vmem:[%s1 + $0x320] sm:$0xff]
  %v3675 = vld [vmem:[%s1 + $0x328] sm:$0xff]
  %v3676 = vld [vmem:[%s1 + $0x330] sm:$0xff]
  %v3677 = vld [vmem:[%s1 + $0x338] sm:$0xff]
  %v3678 = vld [vmem:[%s1 + $0x340] sm:$0xff]
  %v3679 = vld [vmem:[%s1 + $0x348] sm:$0xff]
  %v3680 = vld [vmem:[%s1 + $0x350] sm:$0xff]
  %v3681 = vld [vmem:[%s1 + $0x358] sm:$0xff]
  %v3682 = vld [vmem:[%s1 + $0x360] sm:$0xff]
  %v3683 = vld [vmem:[%s1 + $0x368] sm:$0xff]
  %v3684 = vld [vmem:[%s1 + $0x370] sm:$0xff]
  %v3685 = vld [vmem:[%s1 + $0x378] sm:$0xff]
  %v3686 = vld [vmem:[%s1 + $0x380] sm:$0xff]
  %v3687 = vld [vmem:[%s1 + $0x388] sm:$0xff]
  %v3688 = vld [vmem:[%s1 + $0x390] sm:$0xff]
  %v3689 = vld [vmem:[%s1 + $0x398] sm:$0xff]
  %v3690 = vld [vmem:[%s1 + $0x3a0] sm:$0xff]
  %v3691 = vld [vmem:[%s1 + $0x3a8] sm:$0xff]
  %v3692 = vld [vmem:[%s1 + $0x3b0] sm:$0xff]
  %v3693 = vld [vmem:[%s1 + $0x3b8] sm:$0xff]
  %v3694 = vld [vmem:[%s1 + $0x3c0] sm:$0xff]
  %v3695 = vld [vmem:[%s1 + $0x3c8] sm:$0xff]
  %v3696 = vld [vmem:[%s1 + $0x3d0] sm:$0xff]
  %v3697 = vld [vmem:[%s1 + $0x3d8] sm:$0xff]
  %v3698 = vld [vmem:[%s1 + $0x3e0] sm:$0xff]
  %v3699 = vld [vmem:[%s1 + $0x3e8] sm:$0xff]
  %v3700 = vld [vmem:[%s1 + $0x3f0] sm:$0xff]
  %v3701 = vld [vmem:[%s1 + $0x3f8] sm:$0xff]
  %v3702 = vld [vmem:[%s1 + $0x400] sm:$0xff]
  %v3703 = vld [vmem:[%s1 + $0x408] sm:$0xff]
  %v3704 = vld [vmem:[%s1 + $0x410] sm:$0xff]
  %v3705 = vld [vmem:[%s1 + $0x418] sm:$0xff]
  %v3706 = vld [vmem:[%s1 + $0x420] sm:$0xff]
  %v3707 = vld [vmem:[%s1 + $0x428] sm:$0xff]
  %v3708 = vld [vmem:[%s1 + $0x430] sm:$0xff]
  %v3709 = vld [vmem:[%s1 + $0x438] sm:$0xff]
  %v3710 = vld [vmem:[%s1 + $0x440] sm:$0xff]
  %v3711 = vld [vmem:[%s1 + $0x448] sm:$0xff]
  %v3712 = vld [vmem:[%s1 + $0x450] sm:$0xff]
  %v3713 = vld [vmem:[%s1 + $0x458] sm:$0xff]
  %v3714 = vld [vmem:[%s1 + $0x460] sm:$0xff]
  %v3715 = vld [vmem:[%s1 + $0x468] sm:$0xff]
  %v3716 = vld [vmem:[%s1 + $0x470] sm:$0xff]
  %v3717 = vld [vmem:[%s1 + $0x478] sm:$0xff]
  %v3718 = vld [vmem:[%s1 + $0x480] sm:$0xff]
  %v3719 = vld [vmem:[%s1 + $0x488] sm:$0xff]
  %v3720 = vld [vmem:[%s1 + $0x490] sm:$0xff]
  %v3721 = vld [vmem:[%s1 + $0x498] sm:$0xff]
  %v3722 = vld [vmem:[%s1 + $0x4a0] sm:$0xff]
  %v3723 = vld [vmem:[%s1 + $0x4a8] sm:$0xff]
  %v3724 = vld [vmem:[%s1 + $0x4b0] sm:$0xff]
  %v3725 = vld [vmem:[%s1 + $0x4b8] sm:$0xff]
  %v3726 = vld [vmem:[%s1 + $0x4c0] sm:$0xff]
  %v3727 = vld [vmem:[%s1 + $0x4c8] sm:$0xff]
  %v3728 = vld [vmem:[%s1 + $0x4d0] sm:$0xff]
  %v3729 = vld [vmem:[%s1 + $0x4d8] sm:$0xff]
  %v3730 = vld [vmem:[%s1 + $0x4e0] sm:$0xff]
  %v3731 = vld [vmem:[%s1 + $0x4e8] sm:$0xff]
  %v3732 = vld [vmem:[%s1 + $0x4f0] sm:$0xff]
  %v3733 = vld [vmem:[%s1 + $0x4f8] sm:$0xff]
  %v3734 = vld [vmem:[%s1 + $0x500] sm:$0xff]
  %v3735 = vld [vmem:[%s1 + $0x508] sm:$0xff]
  %v3736 = vld [vmem:[%s1 + $0x510] sm:$0xff]
  %v3737 = vld [vmem:[%s1 + $0x518] sm:$0xff]
  %v3738 = vld [vmem:[%s1 + $0x520] sm:$0xff]
  %v3739 = vld [vmem:[%s1 + $0x528] sm:$0xff]
  %v3740 = vld [vmem:[%s1 + $0x530] sm:$0xff]
  %v3741 = vld [vmem:[%s1 + $0x538] sm:$0xff]
  %v3742 = vld [vmem:[%s1 + $0x540] sm:$0xff]
  %v3743 = vld [vmem:[%s1 + $0x548] sm:$0xff]
  %v3744 = vld [vmem:[%s1 + $0x550] sm:$0xff]
  %v3745 = vld [vmem:[%s1 + $0x558] sm:$0xff]
  %v3746 = vld [vmem:[%s1 + $0x560] sm:$0xff]
  %v3747 = vld [vmem:[%s1 + $0x568] sm:$0xff]
  %v3748 = vld [vmem:[%s1 + $0x570] sm:$0xff]
  %v3749 = vld [vmem:[%s1 + $0x578] sm:$0xff]
  %v3750 = vld [vmem:[%s1 + $0x580] sm:$0xff]
  %v3751 = vld [vmem:[%s1 + $0x588] sm:$0xff]
  %v3752 = vld [vmem:[%s1 + $0x590] sm:$0xff]
  %v3753 = vld [vmem:[%s1 + $0x598] sm:$0xff]
  %v3754 = vld [vmem:[%s1 + $0x5a0] sm:$0xff]
  %v3755 = vld [vmem:[%s1 + $0x5a8] sm:$0xff]
  %v3756 = vld [vmem:[%s1 + $0x5b0] sm:$0xff]
  %v3757 = vld [vmem:[%s1 + $0x5b8] sm:$0xff]
  %v3758 = vld [vmem:[%s1 + $0x5c0] sm:$0xff]
  %v3759 = vld [vmem:[%s1 + $0x5c8] sm:$0xff]
  %v3760 = vld [vmem:[%s1 + $0x5d0] sm:$0xff]
  %v3761 = vld [vmem:[%s1 + $0x5d8] sm:$0xff]
  %v3762 = vld [vmem:[%s1 + $0x5e0] sm:$0xff]
  %v3763 = vld [vmem:[%s1 + $0x5e8] sm:$0xff]
  %v3764 = vld [vmem:[%s1 + $0x5f0] sm:$0xff]
  %v3765 = vld [vmem:[%s1 + $0x5f8] sm:$0xff]
  %v3766 = vld [vmem:[%s2] sm:$0x3f]
  %v3768 = vlaneseq
  %v3769 = vshrl.u32 %v3768, 7
  %v3770 = vsub.s32 0, %v3769
  %v3771 = vrot.slane %v3766, %v3770
  %v3772 = vlaneseq
  %v3773 = vshrl.u32 %v3772, 7
  %v3774 = vsub.s32 1, %v3773
  %v3775 = vrot.slane %v3766, %v3774
  %v3776 = vlaneseq
  %v3777 = vshrl.u32 %v3776, 7
  %v3778 = vsub.s32 2, %v3777
  %v3779 = vrot.slane %v3766, %v3778
  %v3780 = vlaneseq
  %v3781 = vshrl.u32 %v3780, 7
  %v3782 = vsub.s32 3, %v3781
  %v3783 = vrot.slane %v3766, %v3782
  %v3784 = vlaneseq
  %v3785 = vshrl.u32 %v3784, 7
  %v3786 = vsub.s32 4, %v3785
  %v3787 = vrot.slane %v3766, %v3786
  %v3788 = vlaneseq
  %v3789 = vshrl.u32 %v3788, 7
  %v3790 = vsub.s32 5, %v3789
  %v3791 = vrot.slane %v3766, %v3790
  %v3800 = vunpack.c.l.s4 1983009808
  %v3801 = vunpack.c.0.s8 %v3800
  %v3802 = vlaneseq
  %v3803 = vshrl.u32 %v3802, 7
  %v3804 = vsub.s32 %v3801, %v3803
  %v3805 = vrot.slane %v3568, %v3804
  %v3806 = vcombine.high %v3805, %v3805
  %3809 = vmatprep.subr.mxu0 %v3575
  %3810 = vmatpush1.msra.mxu0 %v3574
  %3811 = vmatprep.subr.mxu0 %v3581
  %3812 = vmatpush1.msra.mxu0 %v3580
  %3813 = vmatprep.subr.mxu0 %v3587
  %3814 = vmatpush1.msra.mxu0 %v3586
  %3815 = vmatprep.subr.mxu0 %v3593
  %3816 = vmatpush1.msra.mxu0 %v3592
  %3817 = vmatprep.subr.mxu0 %v3599
  %3818 = vmatpush1.msra.mxu0 %v3598
  %3819 = vmatprep.subr.mxu0 %v3605
  %3820 = vmatpush1.msra.mxu0 %v3604
  %3821 = vmatprep.subr.mxu0 %v3611
  %3822 = vmatpush1.msra.mxu0 %v3610
  %3823 = vmatprep.subr.mxu0 %v3617
  %3824 = vmatpush1.msra.mxu0 %v3616
  %3825 = vmatprep.subr.mxu0 %v3623
  %3826 = vmatpush1.msra.mxu0 %v3622
  %3827 = vmatprep.subr.mxu0 %v3629
  %3828 = vmatpush1.msra.mxu0 %v3628
  %3829 = vmatprep.subr.mxu0 %v3635
  %3830 = vmatpush1.msra.mxu0 %v3634
  %3831 = vmatprep.subr.mxu0 %v3641
  %3832 = vmatpush1.msra.mxu0 %v3640
  %3833 = vmatprep.subr.mxu0 %v3647
  %3834 = vmatpush1.msra.mxu0 %v3646
  %3835 = vmatprep.subr.mxu0 %v3653
  %3836 = vmatpush1.msra.mxu0 %v3652
  %3837 = vmatprep.subr.mxu0 %v3659
  %3838 = vmatpush1.msra.mxu0 %v3658
  %3839 = vmatprep.subr.mxu0 %v3665
  %3840 = vmatpush1.msra.mxu0 %v3664
  %3841 = vmatprep.subr.mxu0 %v3671
  %3842 = vmatpush1.msra.mxu0 %v3670
  %3843 = vmatprep.subr.mxu0 %v3677
  %3844 = vmatpush1.msra.mxu0 %v3676
  %3845 = vmatprep.subr.mxu0 %v3683
  %3846 = vmatpush1.msra.mxu0 %v3682
  %3847 = vmatprep.subr.mxu0 %v3689
  %3848 = vmatpush1.msra.mxu0 %v3688
  %3849 = vmatprep.subr.mxu0 %v3695
  %3850 = vmatpush1.msra.mxu0 %v3694
  %3851 = vmatprep.subr.mxu0 %v3701
  %3852 = vmatpush1.msra.mxu0 %v3700
  %3853 = vmatprep.subr.mxu0 %v3707
  %3854 = vmatpush1.msra.mxu0 %v3706
  %3855 = vmatprep.subr.mxu0 %v3713
  %3856 = vmatpush1.msra.mxu0 %v3712
  %3857 = vmatprep.subr.mxu0 %v3719
  %3858 = vmatpush1.msra.mxu0 %v3718
  %3859 = vmatprep.subr.mxu0 %v3725
  %3860 = vmatpush1.msra.mxu0 %v3724
  %3861 = vmatprep.subr.mxu0 %v3731
  %3862 = vmatpush1.msra.mxu0 %v3730
  %3863 = vmatprep.subr.mxu0 %v3737
  %3864 = vmatpush1.msra.mxu0 %v3736
  %3865 = vmatprep.subr.mxu0 %v3743
  %3866 = vmatpush1.msra.mxu0 %v3742
  %3867 = vmatprep.subr.mxu0 %v3749
  %3868 = vmatpush1.msra.mxu0 %v3748
  %3869 = vmatprep.subr.mxu0 %v3755
  %3870 = vmatpush1.msra.mxu0 %v3754
  %3871 = vmatprep.subr.mxu0 %v3761
  %3872 = vmatpush1.msra.mxu0 %v3760
  %3873 = vmatprep.mubr.f32.mxu0 %v3806
  %3874 = vmatmul.mubr.f32.gmra.mrb[0].mxu0 %v3805
  %v3875 = vpop.f32.mrb[0].mxu0
  %v3876 = vadd.f32 %v3771, %v3875
  %v3877 = vpop.f32.mrb[0].mxu0
  %v3878 = vadd.f32 %v3775, %v3877
  %3879 = vdwg.mxu0
  %3880 = vmatprep.subr.mxu0 %v3577
  %3881 = vmatpush1.msra.mxu0 %v3576
  %3882 = vmatprep.subr.mxu0 %v3583
  %3883 = vmatpush1.msra.mxu0 %v3582
  %3884 = vmatprep.subr.mxu0 %v3589
  %3885 = vmatpush1.msra.mxu0 %v3588
  %3886 = vmatprep.subr.mxu0 %v3595
  %3887 = vmatpush1.msra.mxu0 %v3594
  %3888 = vmatprep.subr.mxu0 %v3601
  %3889 = vmatpush1.msra.mxu0 %v3600
  %3890 = vmatprep.subr.mxu0 %v3607
  %3891 = vmatpush1.msra.mxu0 %v3606
  %3892 = vmatprep.subr.mxu0 %v3613
  %3893 = vmatpush1.msra.mxu0 %v3612
  %3894 = vmatprep.subr.mxu0 %v3619
  %3895 = vmatpush1.msra.mxu0 %v3618
  %3896 = vmatprep.subr.mxu0 %v3625
  %3897 = vmatpush1.msra.mxu0 %v3624
  %3898 = vmatprep.subr.mxu0 %v3631
  %3899 = vmatpush1.msra.mxu0 %v3630
  %3900 = vmatprep.subr.mxu0 %v3637
  %3901 = vmatpush1.msra.mxu0 %v3636
  %3902 = vmatprep.subr.mxu0 %v3643
  %3903 = vmatpush1.msra.mxu0 %v3642
  %3904 = vmatprep.subr.mxu0 %v3649
  %3905 = vmatpush1.msra.mxu0 %v3648
  %3906 = vmatprep.subr.mxu0 %v3655
  %3907 = vmatpush1.msra.mxu0 %v3654
  %3908 = vmatprep.subr.mxu0 %v3661
  %3909 = vmatpush1.msra.mxu0 %v3660
  %3910 = vmatprep.subr.mxu0 %v3667
  %3911 = vmatpush1.msra.mxu0 %v3666
  %3912 = vmatprep.subr.mxu0 %v3673
  %3913 = vmatpush1.msra.mxu0 %v3672
  %3914 = vmatprep.subr.mxu0 %v3679
  %3915 = vmatpush1.msra.mxu0 %v3678
  %3916 = vmatprep.subr.mxu0 %v3685
  %3917 = vmatpush1.msra.mxu0 %v3684
  %3918 = vmatprep.subr.mxu0 %v3691
  %3919 = vmatpush1.msra.mxu0 %v3690
  %3920 = vmatprep.subr.mxu0 %v3697
  %3921 = vmatpush1.msra.mxu0 %v3696
  %3922 = vmatprep.subr.mxu0 %v3703
  %3923 = vmatpush1.msra.mxu0 %v3702
  %3924 = vmatprep.subr.mxu0 %v3709
  %3925 = vmatpush1.msra.mxu0 %v3708
  %3926 = vmatprep.subr.mxu0 %v3715
  %3927 = vmatpush1.msra.mxu0 %v3714
  %3928 = vmatprep.subr.mxu0 %v3721
  %3929 = vmatpush1.msra.mxu0 %v3720
  %3930 = vmatprep.subr.mxu0 %v3727
  %3931 = vmatpush1.msra.mxu0 %v3726
  %3932 = vmatprep.subr.mxu0 %v3733
  %3933 = vmatpush1.msra.mxu0 %v3732
  %3934 = vmatprep.subr.mxu0 %v3739
  %3935 = vmatpush1.msra.mxu0 %v3738
  %3936 = vmatprep.subr.mxu0 %v3745
  %3937 = vmatpush1.msra.mxu0 %v3744
  %3938 = vmatprep.subr.mxu0 %v3751
  %3939 = vmatpush1.msra.mxu0 %v3750
  %3940 = vmatprep.subr.mxu0 %v3757
  %3941 = vmatpush1.msra.mxu0 %v3756
  %3942 = vmatprep.subr.mxu0 %v3763
  %3943 = vmatpush1.msra.mxu0 %v3762
  %3944 = vmatprep.mubr.f32.mxu0 %v3806
  %3945 = vmatmul.mubr.f32.gmra.mrb[0].mxu0 %v3805
  %v3946 = vpop.f32.mrb[0].mxu0
  %v3947 = vadd.f32 %v3779, %v3946
  %v3948 = vpop.f32.mrb[0].mxu0
  %v3949 = vadd.f32 %v3783, %v3948
  %3950 = vdwg.mxu0
  %3951 = vmatprep.subr.mxu0 %v3579
  %3952 = vmatpush1.msra.mxu0 %v3578
  %3953 = vmatprep.subr.mxu0 %v3585
  %3954 = vmatpush1.msra.mxu0 %v3584
  %3955 = vmatprep.subr.mxu0 %v3591
  %3956 = vmatpush1.msra.mxu0 %v3590
  %3957 = vmatprep.subr.mxu0 %v3597
  %3958 = vmatpush1.msra.mxu0 %v3596
  %3959 = vmatprep.subr.mxu0 %v3603
  %3960 = vmatpush1.msra.mxu0 %v3602
  %3961 = vmatprep.subr.mxu0 %v3609
  %3962 = vmatpush1.msra.mxu0 %v3608
  %3963 = vmatprep.subr.mxu0 %v3615
  %3964 = vmatpush1.msra.mxu0 %v3614
  %3965 = vmatprep.subr.mxu0 %v3621
  %3966 = vmatpush1.msra.mxu0 %v3620
  %3967 = vmatprep.subr.mxu0 %v3627
  %3968 = vmatpush1.msra.mxu0 %v3626
  %3969 = vmatprep.subr.mxu0 %v3633
  %3970 = vmatpush1.msra.mxu0 %v3632
  %3971 = vmatprep.subr.mxu0 %v3639
  %3972 = vmatpush1.msra.mxu0 %v3638
  %3973 = vmatprep.subr.mxu0 %v3645
  %3974 = vmatpush1.msra.mxu0 %v3644
  %3975 = vmatprep.subr.mxu0 %v3651
  %3976 = vmatpush1.msra.mxu0 %v3650
  %3977 = vmatprep.subr.mxu0 %v3657
  %3978 = vmatpush1.msra.mxu0 %v3656
  %3979 = vmatprep.subr.mxu0 %v3663
  %3980 = vmatpush1.msra.mxu0 %v3662
  %3981 = vmatprep.subr.mxu0 %v3669
  %3982 = vmatpush1.msra.mxu0 %v3668
  %3983 = vmatprep.subr.mxu0 %v3675
  %3984 = vmatpush1.msra.mxu0 %v3674
  %3985 = vmatprep.subr.mxu0 %v3681
  %3986 = vmatpush1.msra.mxu0 %v3680
  %3987 = vmatprep.subr.mxu0 %v3687
  %3988 = vmatpush1.msra.mxu0 %v3686
  %3989 = vmatprep.subr.mxu0 %v3693
  %3990 = vmatpush1.msra.mxu0 %v3692
  %3991 = vmatprep.subr.mxu0 %v3699
  %3992 = vmatpush1.msra.mxu0 %v3698
  %3993 = vmatprep.subr.mxu0 %v3705
  %3994 = vmatpush1.msra.mxu0 %v3704
  %3995 = vmatprep.subr.mxu0 %v3711
  %3996 = vmatpush1.msra.mxu0 %v3710
  %3997 = vmatprep.subr.mxu0 %v3717
  %3998 = vmatpush1.msra.mxu0 %v3716
  %3999 = vmatprep.subr.mxu0 %v3723
  %4000 = vmatpush1.msra.mxu0 %v3722
  %4001 = vmatprep.subr.mxu0 %v3729
  %4002 = vmatpush1.msra.mxu0 %v3728
  %4003 = vmatprep.subr.mxu0 %v3735
  %4004 = vmatpush1.msra.mxu0 %v3734
  %4005 = vmatprep.subr.mxu0 %v3741
  %4006 = vmatpush1.msra.mxu0 %v3740
  %4007 = vmatprep.subr.mxu0 %v3747
  %4008 = vmatpush1.msra.mxu0 %v3746
  %4009 = vmatprep.subr.mxu0 %v3753
  %4010 = vmatpush1.msra.mxu0 %v3752
  %4011 = vmatprep.subr.mxu0 %v3759
  %4012 = vmatpush1.msra.mxu0 %v3758
  %4013 = vmatprep.subr.mxu0 %v3765
  %4014 = vmatpush1.msra.mxu0 %v3764
  %4015 = vmatprep.mubr.f32.mxu0 %v3806
  %4016 = vmatmul.mubr.f32.gmra.mrb[0].mxu0 %v3805
  %v4017 = vpop.f32.mrb[0].mxu0
  %v4018 = vadd.f32 %v3787, %v4017
  %v4019 = vpop.f32.mrb[0].mxu0
  %v4020 = vadd.f32 %v3791, %v4019
  %4021 = vdwg.mxu0
  %v4024 = vcombine.low %v3876, %v3878
  %v4026 = vunpack.c.l.s4 1983009808
  %v4027 = vunpack.c.0.s8 %v4026
  %v4028 = vlaneseq
  %v4029 = vshrl.u32 %v4028, 7
  %v4030 = vsub.s32 %v4027, %v4029
  %v4031 = vrot.slane %v4024, %v4030
  %v4033 = vadd.f32 %v3572, %v4031
  %v4034 = vxor.u32 %v4033, 2147483648
  %v4035 = vmul.f32 %v4034, 1.442695
  %v4036 = vpow.pop %v4035
  %v4037 = vadd.f32 %v4036, 1.0
  %v4038 = vrcp.pop %v4037
  %v4039 = vmul.f32 1.0, %v4038
  %v4041 = vrot.slane %v3572, 4
  %v4045 = vcombine.low %v3947, %v3949
  %v4047 = vunpack.c.l.s4 1983009808
  %v4048 = vunpack.c.0.s8 %v4047
  %v4049 = vlaneseq
  %v4050 = vshrl.u32 %v4049, 7
  %v4051 = vsub.s32 %v4048, %v4050
  %v4052 = vrot.slane %v4045, %v4051
  %v4054 = vadd.f32 %v4041, %v4052
  %v4055 = vxor.u32 %v4054, 2147483648
  %v4056 = vmul.f32 %v4055, 1.442695
  %v4057 = vpow.pop %v4056
  %v4058 = vadd.f32 %v4057, 1.0
  %v4059 = vrcp.pop %v4058
  %v4060 = vmul.f32 1.0, %v4059
  %v4063 = vcombine.low %v4018, %v4020
  %v4065 = vunpack.c.l.s4 1983009808
  %v4066 = vunpack.c.0.s8 %v4065
  %v4067 = vlaneseq
  %v4068 = vshrl.u32 %v4067, 7
  %v4069 = vsub.s32 %v4066, %v4068
  %v4070 = vrot.slane %v4063, %v4069
  %v4072 = vmul.f32 %v4039, %v4070
  %v4073 = vadd.f32 %v3573, %v4072
  %v4074 = vtanh.pop %v4073
  %v4075 = vsub.f32 1.0, %v4060
  %v4076 = vmul.f32 %v4075, %v4074
  %v4077 = vmul.f32 %v4060, %v3568
  %v4078 = vadd.f32 %v4076, %v4077
  %s4079 = scalar_lea.vmem %s3, 28
  %4080 = vst [vmem:[%s4079] sm:$0xf] %v4078
  // Predicated region
  $region14: #{bigru_encoder_2.1} parent=0 // pred_check
    _
  $region15: #{bigru_encoder_2.1} parent=0 // pred_check_branch
    %4082 = sbr.rel (0) target = $region17
  $region16: #{bigru_encoder_2.1} parent=0 // pred_region
    _
  $region17: #{bigru_encoder_2.1} parent=0 // pred_fallthru
    _
  // Predicated region
  $region18: #{bigru_encoder_2.1} parent=0 // pred_check
    _
  $region19: #{bigru_encoder_2.1} parent=0 // pred_check_branch
    %4084 = sbr.rel (0) target = $region21
  $region20: #{bigru_encoder_2.1} parent=0 // pred_region
    _
  $region21: #{bigru_encoder_2.1} parent=0 // pred_fallthru
    _

</llo_original>
